<compile_context>
chip_gen: v5e
topology: v5e:2x2
jax: 0.10.0
libtpu: 0.0.40
codegen_flags: <defaults>
</compile_context>

<pallas_src>
import math

import jax
import jax.numpy as jnp
from jax.experimental import pallas as pl
from jax.experimental.pallas import tpu as pltpu

# ---- small synthetic RoBERTa config (roberta-base has H=768, 12 layers).
# Kept small but lane-dense: every matmul / output last dim is a multiple of 128.
H = 128         # hidden size
NH = 2          # attention heads
HD = H // NH    # head dim (64, matches roberta-base head dim)
FF = 4 * H      # intermediate (FFN) size = 512
NL = 2          # transformer layers
VOCAB = 50
PAD_IDX = 1
EPS = 1e-5
NEG = -10000.0


def _layernorm(x, gamma, beta):
    mu = jnp.mean(x, axis=-1, keepdims=True)
    var = jnp.mean((x - mu) ** 2, axis=-1, keepdims=True)
    return (x - mu) * jax.lax.rsqrt(var + EPS) * gamma + beta


# ------------------------- fused encoder kernel -------------------------
# grid = (B, NL): batch tiles are "parallel" (megacore), layers "arbitrary".
# The output block (one batch element, (S, H)) is VMEM-resident across the
# layer axis and doubles as the activation accumulator.

def _encoder_kernel(emb_ref, bias_ref, eg_ref, eb_ref,
                    wqkv_ref, bqkv_ref, wo_ref, bo_ref,
                    ln1g_ref, ln1b_ref, w1_ref, b1_ref,
                    w2_ref, b2_ref, ln2g_ref, ln2b_ref,
                    o_ref):
    layer = pl.program_id(1)
    S = bias_ref.shape[1]

    # Layer 0: fused embedding LayerNorm initializes the resident activations.
    @pl.when(layer == 0)
    def _():
        o_ref[...] = _layernorm(emb_ref[...], eg_ref[...], eb_ref[...])

    x = o_ref[...]                                    # (S, H) f32, VMEM-resident
    xb = x.astype(jnp.bfloat16)

    # Fused QKV projection: one (S, H) @ (H, 3H) bf16 matmul, f32 accumulate.
    # (1/sqrt(HD) is already folded into the Q columns of wqkv.)
    qkv = jnp.dot(xb, wqkv_ref[...],
                  preferred_element_type=jnp.float32) + bqkv_ref[...]

    # Additive attention bias, broadcast once (hoisted out of the head loop).
    bias_b = jnp.broadcast_to(bias_ref[...], (S, S))

    attn = jnp.zeros((S, H), jnp.float32)
    for hh in range(NH):                              # static loop over heads
        qh = qkv[:, hh * HD:(hh + 1) * HD].astype(jnp.bfloat16)
        kh = qkv[:, H + hh * HD:H + (hh + 1) * HD].astype(jnp.bfloat16)
        vh = qkv[:, 2 * H + hh * HD:2 * H + (hh + 1) * HD].astype(jnp.bfloat16)

        # scores = q @ k^T  (transposed-RHS dot_general, MXU)
        s = jax.lax.dot_general(qh, kh, (((1,), (1,)), ((), ())),
                                preferred_element_type=jnp.float32) + bias_b
        m = jnp.max(s, axis=-1, keepdims=True)
        p = jnp.exp(s - m)
        inv_l = pl.reciprocal(jnp.sum(p, axis=-1, keepdims=True), approx=True)

        ctx = jax.lax.dot_general(p.astype(jnp.bfloat16), vh,
                                  (((1,), (0,)), ((), ())),
                                  preferred_element_type=jnp.float32) * inv_l

        # Per-head output-projection accumulation (no lane-axis concat).
        attn = attn + jnp.dot(ctx.astype(jnp.bfloat16),
                              wo_ref[hh * HD:(hh + 1) * HD, :],
                              preferred_element_type=jnp.float32)
    attn = attn + bo_ref[...]

    x1 = _layernorm(x + attn, ln1g_ref[...], ln1b_ref[...])

    hid = jnp.dot(x1.astype(jnp.bfloat16), w1_ref[...],
                  preferred_element_type=jnp.float32) + b1_ref[...]
    # TODO(synk): roberta-base uses exact erf-GELU; tanh-approx GELU used here.
    hid = jax.nn.gelu(hid, approximate=True)
    ffn = jnp.dot(hid.astype(jnp.bfloat16), w2_ref[...],
                  preferred_element_type=jnp.float32) + b2_ref[...]

    # Stays resident in VMEM across layers; written to HBM once at grid end.
    o_ref[...] = _layernorm(x1 + ffn, ln2g_ref[...], ln2b_ref[...])


# ------------------------- wrapper -------------------------

def fused_encoder(emb, bias, emb_g, emb_b, L):
    B, S, _ = emb.shape

    def per_batch(shape):          # (B, ...) -> one batch element per block
        return pl.BlockSpec((None,) + tuple(shape[1:]), lambda b, l: (b, 0, 0))

    def const2(shape):             # small 2-D params, resident
        return pl.BlockSpec(tuple(shape), lambda b, l: (0, 0))

    def per_layer(shape):          # (NL, ...) -> streamed per layer step
        return pl.BlockSpec((None,) + tuple(shape[1:]), lambda b, l: (l, 0, 0))

    in_specs = [
        per_batch((B, S, H)),                               # embeddings
        per_batch((B, 1, S)),                               # additive attn bias
        const2((1, H)), const2((1, H)),                     # emb LN gamma/beta
        per_layer((NL, H, 3 * H)), per_layer((NL, 1, 3 * H)),   # wqkv, bqkv
        per_layer((NL, H, H)), per_layer((NL, 1, H)),            # wo, bo
        per_layer((NL, 1, H)), per_layer((NL, 1, H)),            # ln1 g, b
        per_layer((NL, H, FF)), per_layer((NL, 1, FF)),          # w1, b1
        per_layer((NL, FF, H)), per_layer((NL, 1, H)),           # w2, b2
        per_layer((NL, 1, H)), per_layer((NL, 1, H)),            # ln2 g, b
    ]
    return pl.pallas_call(
        _encoder_kernel,
        out_shape=jax.ShapeDtypeStruct((B, S, H), jnp.float32),
        grid_spec=pltpu.PrefetchScalarGridSpec(
            num_scalar_prefetch=0,
            grid=(B, NL),
            in_specs=in_specs,
            out_specs=pl.BlockSpec((None, S, H), lambda b, l: (b, 0, 0))),
        compiler_params=pltpu.CompilerParams(
            dimension_semantics=("parallel", "arbitrary"),
            vmem_limit_bytes=32 * 1024 * 1024),
    )(emb, bias, emb_g, emb_b,
      L["wqkv"], L["bqkv"], L["wo"], L["bo"], L["ln1_g"], L["ln1_b"],
      L["w1"], L["b1"], L["w2"], L["b2"], L["ln2_g"], L["ln2_b"])


# ------------------------- parameters -------------------------

def init_params(key, max_seq):
    def nrm(k, shape, scale=0.02):
        return (scale * jax.random.normal(k, shape)).astype(jnp.float32)

    keys = jax.random.split(key, 3 + NL * 6)
    max_pos = max_seq + PAD_IDX + 2
    params = {
        "word_emb": nrm(keys[0], (VOCAB, H)),
        "pos_emb": nrm(keys[1], (max_pos, H)),
        "type_emb": nrm(keys[2], (1, H)),
        "emb_ln_g": jnp.ones((1, H), jnp.float32),
        "emb_ln_b": jnp.zeros((1, H), jnp.float32),
    }
    acc = {name: [] for name in
           ["wqkv", "bqkv", "wo", "bo", "ln1_g", "ln1_b",
            "w1", "b1", "w2", "b2", "ln2_g", "ln2_b"]}
    ki = 3
    attn_scale = 1.0 / math.sqrt(HD)
    for _ in range(NL):
        # Fold 1/sqrt(HD) into the Q projection (weights and bias) statically.
        wq = nrm(keys[ki + 0], (H, H)) * attn_scale
        wk = nrm(keys[ki + 1], (H, H))
        wv = nrm(keys[ki + 2], (H, H))
        bq = jnp.zeros((1, H), jnp.float32) * attn_scale
        bkv = jnp.zeros((1, 2 * H), jnp.float32)
        acc["wqkv"].append(jnp.concatenate([wq, wk, wv], 1).astype(jnp.bfloat16))
        acc["bqkv"].append(jnp.concatenate([bq, bkv], 1))
        acc["wo"].append(nrm(keys[ki + 3], (H, H)).astype(jnp.bfloat16))
        acc["bo"].append(jnp.zeros((1, H), jnp.float32))
        acc["ln1_g"].append(jnp.ones((1, H), jnp.float32))
        acc["ln1_b"].append(jnp.zeros((1, H), jnp.float32))
        acc["w1"].append(nrm(keys[ki + 4], (H, FF)).astype(jnp.bfloat16))
        acc["b1"].append(jnp.zeros((1, FF), jnp.float32))
        acc["w2"].append(nrm(keys[ki + 5], (FF, H)).astype(jnp.bfloat16))
        acc["b2"].append(jnp.zeros((1, H), jnp.float32))
        acc["ln2_g"].append(jnp.ones((1, H), jnp.float32))
        acc["ln2_b"].append(jnp.zeros((1, H), jnp.float32))
        ki += 6
    params["layers"] = {k: jnp.stack(v) for k, v in acc.items()}   # [NL, ...]
    return params


# ------------------------- ROBERTAEncoder.forward -------------------------

def roberta_encoder_forward(params, x1, x2, mask1=None, mask2=None):
    """Mirrors ROBERTAEncoder.forward: cat ids/masks along seq, run model,
    return (sequence_output, mask1, mask2)."""
    x = jnp.concatenate([x1, x2], axis=1)                       # (B, S) ids
    if mask1 is not None and mask2 is not None:
        mask = jnp.concatenate([mask1, mask2], axis=1)          # (B, S)
    else:
        mask = None

    B, S = x.shape
    attn_mask = jnp.ones((B, S), jnp.float32) if mask is None else mask.astype(jnp.float32)

    # RoBERTa position ids: cumsum over non-pad tokens, offset by padding_idx.
    not_pad = (x != PAD_IDX).astype(jnp.int32)
    pos_ids = jnp.cumsum(not_pad, axis=1) * not_pad + PAD_IDX   # (B, S)

    # Embedding table lookups (glue); LayerNorm is fused into the Pallas kernel.
    emb = (jnp.take(params["word_emb"], x, axis=0)
           + jnp.take(params["pos_emb"], pos_ids, axis=0)
           + params["type_emb"][0][None, None, :])              # (B, S, H)
    emb = emb.astype(jnp.float32)

    # Additive attention bias (HF extended mask), precomputed once.
    bias = ((1.0 - attn_mask) * NEG).reshape(B, 1, S).astype(jnp.float32)

    out = fused_encoder(emb, bias,
                        params["emb_ln_g"], params["emb_ln_b"],
                        params["layers"])                       # (B, S, H)
    return out, mask1, mask2


# ------------------------- main -------------------------

if __name__ == "__main__":
    B, S1, S2 = 2, 64, 64
    key = jax.random.PRNGKey(0)
    k_ids1, k_ids2, k_par = jax.random.split(key, 3)

    x1 = jax.random.randint(k_ids1, (B, S1), 2, VOCAB, dtype=jnp.int32)
    x2 = jax.random.randint(k_ids2, (B, S2), 2, VOCAB, dtype=jnp.int32)
    mask1 = jnp.ones((B, S1), jnp.float32)
    mask2 = jnp.ones((B, S2), jnp.float32)

    params = init_params(k_par, max_seq=S1 + S2)

    out, m1, m2 = roberta_encoder_forward(params, x1, x2, mask1, mask2)
    out = jax.block_until_ready(out)

    assert out.shape == (B, S1 + S2, H)
    assert bool(jnp.all(jnp.isfinite(out)))
    print("KERNEL_OK")
</pallas_src>

<mosaic_0001>
module attributes {stable_mosaic.version = 11 : i64} {
  func.func @_encoder_kernel(%arg0: i32, %arg1: i32, %arg2: memref<1x128x128xf32, #tpu.memory_space<vmem>>, %arg3: memref<1x1x128xf32, #tpu.memory_space<vmem>>, %arg4: memref<1x128xf32, #tpu.memory_space<vmem>>, %arg5: memref<1x128xf32, #tpu.memory_space<vmem>>, %arg6: memref<1x128x384xbf16, #tpu.memory_space<vmem>>, %arg7: memref<1x1x384xf32, #tpu.memory_space<vmem>>, %arg8: memref<1x128x128xbf16, #tpu.memory_space<vmem>>, %arg9: memref<1x1x128xf32, #tpu.memory_space<vmem>>, %arg10: memref<1x1x128xf32, #tpu.memory_space<vmem>>, %arg11: memref<1x1x128xf32, #tpu.memory_space<vmem>>, %arg12: memref<1x128x512xbf16, #tpu.memory_space<vmem>>, %arg13: memref<1x1x512xf32, #tpu.memory_space<vmem>>, %arg14: memref<1x512x128xbf16, #tpu.memory_space<vmem>>, %arg15: memref<1x1x128xf32, #tpu.memory_space<vmem>>, %arg16: memref<1x1x128xf32, #tpu.memory_space<vmem>>, %arg17: memref<1x1x128xf32, #tpu.memory_space<vmem>>, %arg18: memref<1x128x128xf32, #tpu.memory_space<vmem>>) attributes {dimension_semantics = [#tpu.dimension_semantics<parallel>, #tpu.dimension_semantics<arbitrary>], iteration_bounds = array<i64: 2, 2>, scalar_prefetch = 0 : i64, scratch_operands = 0 : i64, tpu.core_type = #tpu.core_type<tc>, window_params = [{transform_indices = @transform_0, window_bounds = array<i64: 1, 128, 128>}, {transform_indices = @transform_1, window_bounds = array<i64: 1, 1, 128>}, {pipeline_mode = #tpu.pipeline_mode<synchronous>, transform_indices = @transform_2, window_bounds = array<i64: 1, 128>}, {pipeline_mode = #tpu.pipeline_mode<synchronous>, transform_indices = @transform_3, window_bounds = array<i64: 1, 128>}, {transform_indices = @transform_4, window_bounds = array<i64: 1, 128, 384>}, {transform_indices = @transform_5, window_bounds = array<i64: 1, 1, 384>}, {transform_indices = @transform_6, window_bounds = array<i64: 1, 128, 128>}, {transform_indices = @transform_7, window_bounds = array<i64: 1, 1, 128>}, {transform_indices = @transform_8, window_bounds = array<i64: 1, 1, 128>}, {transform_indices = @transform_9, window_bounds = array<i64: 1, 1, 128>}, {transform_indices = @transform_10, window_bounds = array<i64: 1, 128, 512>}, {transform_indices = @transform_11, window_bounds = array<i64: 1, 1, 512>}, {transform_indices = @transform_12, window_bounds = array<i64: 1, 512, 128>}, {transform_indices = @transform_13, window_bounds = array<i64: 1, 1, 128>}, {transform_indices = @transform_14, window_bounds = array<i64: 1, 1, 128>}, {transform_indices = @transform_15, window_bounds = array<i64: 1, 1, 128>}, {transform_indices = @transform_16, window_bounds = array<i64: 1, 128, 128>}]} {
    %c0_i32 = arith.constant 0 : i32
    %0 = arith.cmpi eq, %arg1, %c0_i32 : i32
    %1 = arith.extui %0 : i1 to i32
    %c0_i32_0 = arith.constant 0 : i32
    %2 = arith.cmpi ne, %1, %c0_i32_0 : i32
    scf.if %2 {
      %c0_74 = arith.constant 0 : index
      %c0_75 = arith.constant 0 : index
      %c0_76 = arith.constant 0 : index
      %158 = vector.load %arg2[%c0_74, %c0_75, %c0_76] : memref<1x128x128xf32, #tpu.memory_space<vmem>>, vector<1x128x128xf32>
      %159 = vector.shape_cast %158 : vector<1x128x128xf32> to vector<128x128xf32>
      %c0_77 = arith.constant 0 : index
      %c0_78 = arith.constant 0 : index
      %160 = vector.load %arg4[%c0_77, %c0_78] : memref<1x128xf32, #tpu.memory_space<vmem>>, vector<1x128xf32>
      %c0_79 = arith.constant 0 : index
      %c0_80 = arith.constant 0 : index
      %161 = vector.load %arg5[%c0_79, %c0_80] : memref<1x128xf32, #tpu.memory_space<vmem>>, vector<1x128xf32>
      %cst_81 = arith.constant dense<0.000000e+00> : vector<128xf32>
      %162 = vector.multi_reduction <add>, %159, %cst_81 [1] : vector<128x128xf32> to vector<128xf32>
      %163 = vector.shape_cast %162 : vector<128xf32> to vector<128x1xf32>
      %cst_82 = arith.constant 1.280000e+02 : f32
      %164 = vector.broadcast %cst_82 : f32 to vector<128x1xf32>
      %165 = arith.divf %163, %164 : vector<128x1xf32>
      %166 = vector.broadcast %165 : vector<128x1xf32> to vector<128x128xf32>
      %167 = arith.subf %159, %166 : vector<128x128xf32>
      %168 = arith.mulf %167, %167 : vector<128x128xf32>
      %cst_83 = arith.constant dense<0.000000e+00> : vector<128xf32>
      %169 = vector.multi_reduction <add>, %168, %cst_83 [1] : vector<128x128xf32> to vector<128xf32>
      %170 = vector.shape_cast %169 : vector<128xf32> to vector<128x1xf32>
      %cst_84 = arith.constant 1.280000e+02 : f32
      %171 = vector.broadcast %cst_84 : f32 to vector<128x1xf32>
      %172 = arith.divf %170, %171 : vector<128x1xf32>
      %173 = vector.broadcast %165 : vector<128x1xf32> to vector<128x128xf32>
      %174 = arith.subf %159, %173 : vector<128x128xf32>
      %cst_85 = arith.constant 9.99999974E-6 : f32
      %175 = vector.broadcast %cst_85 : f32 to vector<128x1xf32>
      %176 = arith.addf %172, %175 : vector<128x1xf32>
      %177 = math.rsqrt %176 : vector<128x1xf32>
      %178 = vector.broadcast %177 : vector<128x1xf32> to vector<128x128xf32>
      %179 = arith.mulf %174, %178 : vector<128x128xf32>
      %180 = vector.broadcast %160 : vector<1x128xf32> to vector<128x128xf32>
      %181 = arith.mulf %179, %180 : vector<128x128xf32>
      %182 = vector.broadcast %161 : vector<1x128xf32> to vector<128x128xf32>
      %183 = arith.addf %181, %182 : vector<128x128xf32>
      %c0_86 = arith.constant 0 : index
      %c0_87 = arith.constant 0 : index
      %c0_88 = arith.constant 0 : index
      %184 = vector.load %arg18[%c0_86, %c0_87, %c0_88] : memref<1x128x128xf32, #tpu.memory_space<vmem>>, vector<1x128x128xf32>
      %185 = vector.shape_cast %184 : vector<1x128x128xf32> to vector<128x128xf32>
      %186 = vector.shape_cast %183 : vector<128x128xf32> to vector<1x128x128xf32>
      tpu.vector_store %arg18[%c0_86, %c0_87, %c0_88], %186 {strides = array<i32>} : memref<1x128x128xf32, #tpu.memory_space<vmem>>, vector<1x128x128xf32>,
    } else {
    }
    %c0 = arith.constant 0 : index
    %c0_1 = arith.constant 0 : index
    %c0_2 = arith.constant 0 : index
    %3 = vector.load %arg18[%c0, %c0_1, %c0_2] : memref<1x128x128xf32, #tpu.memory_space<vmem>>, vector<1x128x128xf32>
    %4 = vector.shape_cast %3 : vector<1x128x128xf32> to vector<128x128xf32>
    %5 = arith.truncf %4 : vector<128x128xf32> to vector<128x128xbf16>
    %c0_3 = arith.constant 0 : index
    %c0_4 = arith.constant 0 : index
    %c0_5 = arith.constant 0 : index
    %6 = vector.load %arg6[%c0_3, %c0_4, %c0_5] : memref<1x128x384xbf16, #tpu.memory_space<vmem>>, vector<1x128x384xbf16>
    %7 = vector.shape_cast %6 : vector<1x128x384xbf16> to vector<128x384xbf16>
    %cst = arith.constant dense<0.000000e+00> : vector<128x384xf32>
    %8 = tpu.matmul %5, %7, %cst {dimension_numbers = #tpu.dot_dimension_numbers<[1], [0], [0], [1], [0, 0, 1, 1], [], []>} : vector<128x128xbf16>, vector<128x384xbf16>, vector<128x384xf32> -> vector<128x384xf32>
    %c0_6 = arith.constant 0 : index
    %c0_7 = arith.constant 0 : index
    %c0_8 = arith.constant 0 : index
    %9 = vector.load %arg7[%c0_6, %c0_7, %c0_8] : memref<1x1x384xf32, #tpu.memory_space<vmem>>, vector<1x1x384xf32>
    %10 = vector.shape_cast %9 : vector<1x1x384xf32> to vector<1x384xf32>
    %11 = vector.broadcast %10 : vector<1x384xf32> to vector<128x384xf32>
    %12 = arith.addf %8, %11 : vector<128x384xf32>
    %c0_9 = arith.constant 0 : index
    %c0_10 = arith.constant 0 : index
    %c0_11 = arith.constant 0 : index
    %13 = vector.load %arg3[%c0_9, %c0_10, %c0_11] : memref<1x1x128xf32, #tpu.memory_space<vmem>>, vector<1x1x128xf32>
    %14 = vector.shape_cast %13 : vector<1x1x128xf32> to vector<1x128xf32>
    %15 = vector.shape_cast %14 : vector<1x128xf32> to vector<1x128xf32>
    %16 = vector.broadcast %15 : vector<1x128xf32> to vector<128x128xf32>
    %cst_12 = arith.constant 0.000000e+00 : f32
    %17 = vector.broadcast %cst_12 : f32 to vector<128x128xf32>
    %18 = vector.extract_strided_slice %12 {offsets = [0, 0], sizes = [128, 64], strides = [1, 1]} : vector<128x384xf32> to vector<128x64xf32>
    %19 = arith.truncf %18 : vector<128x64xf32> to vector<128x64xbf16>
    %20 = vector.extract_strided_slice %12 {offsets = [0, 128], sizes = [128, 64], strides = [1, 1]} : vector<128x384xf32> to vector<128x64xf32>
    %21 = arith.truncf %20 : vector<128x64xf32> to vector<128x64xbf16>
    %22 = vector.extract_strided_slice %12 {offsets = [0, 256], sizes = [128, 64], strides = [1, 1]} : vector<128x384xf32> to vector<128x64xf32>
    %23 = arith.truncf %22 : vector<128x64xf32> to vector<128x64xbf16>
    %cst_13 = arith.constant dense<0.000000e+00> : vector<128x128xf32>
    %24 = tpu.matmul %19, %21, %cst_13 {dimension_numbers = #tpu.dot_dimension_numbers<[1], [1], [0], [0], [0, 0, 1, 0], [], []>} : vector<128x64xbf16>, vector<128x64xbf16>, vector<128x128xf32> -> vector<128x128xf32>
    %25 = arith.addf %24, %16 : vector<128x128xf32>
    %cst_14 = arith.constant dense<0xFF800000> : vector<128xf32>
    %26 = vector.multi_reduction <maximumf>, %25, %cst_14 [1] : vector<128x128xf32> to vector<128xf32>
    %27 = vector.shape_cast %26 : vector<128xf32> to vector<128x1xf32>
    %28 = vector.broadcast %27 : vector<128x1xf32> to vector<128x128xf32>
    %29 = arith.subf %25, %28 : vector<128x128xf32>
    %30 = math.exp %29 : vector<128x128xf32>
    %cst_15 = arith.constant dense<0.000000e+00> : vector<128xf32>
    %31 = vector.multi_reduction <add>, %30, %cst_15 [1] : vector<128x128xf32> to vector<128xf32>
    %32 = vector.shape_cast %31 : vector<128xf32> to vector<128x1xf32>
    %33 = tpu.reciprocal %32 {approx = true} : vector<128x1xf32> -> vector<128x1xf32>
    %34 = arith.truncf %30 : vector<128x128xf32> to vector<128x128xbf16>
    %cst_16 = arith.constant dense<0.000000e+00> : vector<128x64xf32>
    %35 = tpu.matmul %34, %23, %cst_16 {dimension_numbers = #tpu.dot_dimension_numbers<[1], [0], [0], [1], [0, 0, 1, 1], [], []>} : vector<128x128xbf16>, vector<128x64xbf16>, vector<128x64xf32> -> vector<128x64xf32>
    %36 = vector.broadcast %33 : vector<128x1xf32> to vector<128x64xf32>
    %37 = arith.mulf %35, %36 : vector<128x64xf32>
    %38 = arith.truncf %37 : vector<128x64xf32> to vector<128x64xbf16>
    %c0_17 = arith.constant 0 : index
    %c0_18 = arith.constant 0 : index
    %c0_19 = arith.constant 0 : index
    %39 = vector.load %arg8[%c0_17, %c0_18, %c0_19] : memref<1x128x128xbf16, #tpu.memory_space<vmem>>, vector<1x64x128xbf16>
    %40 = vector.shape_cast %39 : vector<1x64x128xbf16> to vector<64x128xbf16>
    %cst_20 = arith.constant dense<0.000000e+00> : vector<128x128xf32>
    %41 = tpu.matmul %38, %40, %cst_20 {dimension_numbers = #tpu.dot_dimension_numbers<[1], [0], [0], [1], [0, 0, 1, 1], [], []>} : vector<128x64xbf16>, vector<64x128xbf16>, vector<128x128xf32> -> vector<128x128xf32>
    %42 = arith.addf %17, %41 : vector<128x128xf32>
    %43 = vector.extract_strided_slice %12 {offsets = [0, 64], sizes = [128, 64], strides = [1, 1]} : vector<128x384xf32> to vector<128x64xf32>
    %44 = arith.truncf %43 : vector<128x64xf32> to vector<128x64xbf16>
    %45 = vector.extract_strided_slice %12 {offsets = [0, 192], sizes = [128, 64], strides = [1, 1]} : vector<128x384xf32> to vector<128x64xf32>
    %46 = arith.truncf %45 : vector<128x64xf32> to vector<128x64xbf16>
    %47 = vector.extract_strided_slice %12 {offsets = [0, 320], sizes = [128, 64], strides = [1, 1]} : vector<128x384xf32> to vector<128x64xf32>
    %48 = arith.truncf %47 : vector<128x64xf32> to vector<128x64xbf16>
    %cst_21 = arith.constant dense<0.000000e+00> : vector<128x128xf32>
    %49 = tpu.matmul %44, %46, %cst_21 {dimension_numbers = #tpu.dot_dimension_numbers<[1], [1], [0], [0], [0, 0, 1, 0], [], []>} : vector<128x64xbf16>, vector<128x64xbf16>, vector<128x128xf32> -> vector<128x128xf32>
    %50 = arith.addf %49, %16 : vector<128x128xf32>
    %cst_22 = arith.constant dense<0xFF800000> : vector<128xf32>
    %51 = vector.multi_reduction <maximumf>, %50, %cst_22 [1] : vector<128x128xf32> to vector<128xf32>
    %52 = vector.shape_cast %51 : vector<128xf32> to vector<128x1xf32>
    %53 = vector.broadcast %52 : vector<128x1xf32> to vector<128x128xf32>
    %54 = arith.subf %50, %53 : vector<128x128xf32>
    %55 = math.exp %54 : vector<128x128xf32>
    %cst_23 = arith.constant dense<0.000000e+00> : vector<128xf32>
    %56 = vector.multi_reduction <add>, %55, %cst_23 [1] : vector<128x128xf32> to vector<128xf32>
    %57 = vector.shape_cast %56 : vector<128xf32> to vector<128x1xf32>
    %58 = tpu.reciprocal %57 {approx = true} : vector<128x1xf32> -> vector<128x1xf32>
    %59 = arith.truncf %55 : vector<128x128xf32> to vector<128x128xbf16>
    %cst_24 = arith.constant dense<0.000000e+00> : vector<128x64xf32>
    %60 = tpu.matmul %59, %48, %cst_24 {dimension_numbers = #tpu.dot_dimension_numbers<[1], [0], [0], [1], [0, 0, 1, 1], [], []>} : vector<128x128xbf16>, vector<128x64xbf16>, vector<128x64xf32> -> vector<128x64xf32>
    %61 = vector.broadcast %58 : vector<128x1xf32> to vector<128x64xf32>
    %62 = arith.mulf %60, %61 : vector<128x64xf32>
    %63 = arith.truncf %62 : vector<128x64xf32> to vector<128x64xbf16>
    %c0_25 = arith.constant 0 : index
    %c64 = arith.constant 64 : index
    %c0_26 = arith.constant 0 : index
    %64 = vector.load %arg8[%c0_25, %c64, %c0_26] : memref<1x128x128xbf16, #tpu.memory_space<vmem>>, vector<1x64x128xbf16>
    %65 = vector.shape_cast %64 : vector<1x64x128xbf16> to vector<64x128xbf16>
    %cst_27 = arith.constant dense<0.000000e+00> : vector<128x128xf32>
    %66 = tpu.matmul %63, %65, %cst_27 {dimension_numbers = #tpu.dot_dimension_numbers<[1], [0], [0], [1], [0, 0, 1, 1], [], []>} : vector<128x64xbf16>, vector<64x128xbf16>, vector<128x128xf32> -> vector<128x128xf32>
    %67 = arith.addf %42, %66 : vector<128x128xf32>
    %c0_28 = arith.constant 0 : index
    %c0_29 = arith.constant 0 : index
    %c0_30 = arith.constant 0 : index
    %68 = vector.load %arg9[%c0_28, %c0_29, %c0_30] : memref<1x1x128xf32, #tpu.memory_space<vmem>>, vector<1x1x128xf32>
    %69 = vector.shape_cast %68 : vector<1x1x128xf32> to vector<1x128xf32>
    %70 = vector.broadcast %69 : vector<1x128xf32> to vector<128x128xf32>
    %71 = arith.addf %67, %70 : vector<128x128xf32>
    %72 = arith.addf %4, %71 : vector<128x128xf32>
    %c0_31 = arith.constant 0 : index
    %c0_32 = arith.constant 0 : index
    %c0_33 = arith.constant 0 : index
    %73 = vector.load %arg10[%c0_31, %c0_32, %c0_33] : memref<1x1x128xf32, #tpu.memory_space<vmem>>, vector<1x1x128xf32>
    %74 = vector.shape_cast %73 : vector<1x1x128xf32> to vector<1x128xf32>
    %c0_34 = arith.constant 0 : index
    %c0_35 = arith.constant 0 : index
    %c0_36 = arith.constant 0 : index
    %75 = vector.load %arg11[%c0_34, %c0_35, %c0_36] : memref<1x1x128xf32, #tpu.memory_space<vmem>>, vector<1x1x128xf32>
    %76 = vector.shape_cast %75 : vector<1x1x128xf32> to vector<1x128xf32>
    %cst_37 = arith.constant dense<0.000000e+00> : vector<128xf32>
    %77 = vector.multi_reduction <add>, %72, %cst_37 [1] : vector<128x128xf32> to vector<128xf32>
    %78 = vector.shape_cast %77 : vector<128xf32> to vector<128x1xf32>
    %cst_38 = arith.constant 1.280000e+02 : f32
    %79 = vector.broadcast %cst_38 : f32 to vector<128x1xf32>
    %80 = arith.divf %78, %79 : vector<128x1xf32>
    %81 = vector.broadcast %80 : vector<128x1xf32> to vector<128x128xf32>
    %82 = arith.subf %72, %81 : vector<128x128xf32>
    %83 = arith.mulf %82, %82 : vector<128x128xf32>
    %cst_39 = arith.constant dense<0.000000e+00> : vector<128xf32>
    %84 = vector.multi_reduction <add>, %83, %cst_39 [1] : vector<128x128xf32> to vector<128xf32>
    %85 = vector.shape_cast %84 : vector<128xf32> to vector<128x1xf32>
    %cst_40 = arith.constant 1.280000e+02 : f32
    %86 = vector.broadcast %cst_40 : f32 to vector<128x1xf32>
    %87 = arith.divf %85, %86 : vector<128x1xf32>
    %88 = vector.broadcast %80 : vector<128x1xf32> to vector<128x128xf32>
    %89 = arith.subf %72, %88 : vector<128x128xf32>
    %cst_41 = arith.constant 9.99999974E-6 : f32
    %90 = vector.broadcast %cst_41 : f32 to vector<128x1xf32>
    %91 = arith.addf %87, %90 : vector<128x1xf32>
    %92 = math.rsqrt %91 : vector<128x1xf32>
    %93 = vector.broadcast %92 : vector<128x1xf32> to vector<128x128xf32>
    %94 = arith.mulf %89, %93 : vector<128x128xf32>
    %95 = vector.broadcast %74 : vector<1x128xf32> to vector<128x128xf32>
    %96 = arith.mulf %94, %95 : vector<128x128xf32>
    %97 = vector.broadcast %76 : vector<1x128xf32> to vector<128x128xf32>
    %98 = arith.addf %96, %97 : vector<128x128xf32>
    %99 = arith.truncf %98 : vector<128x128xf32> to vector<128x128xbf16>
    %c0_42 = arith.constant 0 : index
    %c0_43 = arith.constant 0 : index
    %c0_44 = arith.constant 0 : index
    %100 = vector.load %arg12[%c0_42, %c0_43, %c0_44] : memref<1x128x512xbf16, #tpu.memory_space<vmem>>, vector<1x128x512xbf16>
    %101 = vector.shape_cast %100 : vector<1x128x512xbf16> to vector<128x512xbf16>
    %cst_45 = arith.constant dense<0.000000e+00> : vector<128x512xf32>
    %102 = tpu.matmul %99, %101, %cst_45 {dimension_numbers = #tpu.dot_dimension_numbers<[1], [0], [0], [1], [0, 0, 1, 1], [], []>} : vector<128x128xbf16>, vector<128x512xbf16>, vector<128x512xf32> -> vector<128x512xf32>
    %c0_46 = arith.constant 0 : index
    %c0_47 = arith.constant 0 : index
    %c0_48 = arith.constant 0 : index
    %103 = vector.load %arg13[%c0_46, %c0_47, %c0_48] : memref<1x1x512xf32, #tpu.memory_space<vmem>>, vector<1x1x512xf32>
    %104 = vector.shape_cast %103 : vector<1x1x512xf32> to vector<1x512xf32>
    %105 = vector.broadcast %104 : vector<1x512xf32> to vector<128x512xf32>
    %106 = arith.addf %102, %105 : vector<128x512xf32>
    %107 = arith.mulf %106, %106 : vector<128x512xf32>
    %108 = arith.mulf %106, %107 : vector<128x512xf32>
    %cst_49 = arith.constant 4.471500e-02 : f32
    %109 = vector.broadcast %cst_49 : f32 to vector<128x512xf32>
    %110 = arith.mulf %109, %108 : vector<128x512xf32>
    %111 = arith.addf %106, %110 : vector<128x512xf32>
    %cst_50 = arith.constant 0.797884583 : f32
    %112 = vector.broadcast %cst_50 : f32 to vector<128x512xf32>
    %113 = arith.mulf %112, %111 : vector<128x512xf32>
    %114 = math.tanh %113 : vector<128x512xf32>
    %cst_51 = arith.constant 1.000000e+00 : f32
    %115 = vector.broadcast %cst_51 : f32 to vector<128x512xf32>
    %116 = arith.addf %115, %114 : vector<128x512xf32>
    %cst_52 = arith.constant 5.000000e-01 : f32
    %117 = vector.broadcast %cst_52 : f32 to vector<128x512xf32>
    %118 = arith.mulf %117, %116 : vector<128x512xf32>
    %119 = arith.mulf %106, %118 : vector<128x512xf32>
    %120 = arith.truncf %119 : vector<128x512xf32> to vector<128x512xbf16>
    %c0_53 = arith.constant 0 : index
    %c0_54 = arith.constant 0 : index
    %c0_55 = arith.constant 0 : index
    %121 = vector.load %arg14[%c0_53, %c0_54, %c0_55] : memref<1x512x128xbf16, #tpu.memory_space<vmem>>, vector<1x512x128xbf16>
    %122 = vector.shape_cast %121 : vector<1x512x128xbf16> to vector<512x128xbf16>
    %cst_56 = arith.constant dense<0.000000e+00> : vector<128x128xf32>
    %123 = tpu.matmul %120, %122, %cst_56 {dimension_numbers = #tpu.dot_dimension_numbers<[1], [0], [0], [1], [0, 0, 1, 1], [], []>} : vector<128x512xbf16>, vector<512x128xbf16>, vector<128x128xf32> -> vector<128x128xf32>
    %c0_57 = arith.constant 0 : index
    %c0_58 = arith.constant 0 : index
    %c0_59 = arith.constant 0 : index
    %124 = vector.load %arg15[%c0_57, %c0_58, %c0_59] : memref<1x1x128xf32, #tpu.memory_space<vmem>>, vector<1x1x128xf32>
    %125 = vector.shape_cast %124 : vector<1x1x128xf32> to vector<1x128xf32>
    %126 = vector.broadcast %125 : vector<1x128xf32> to vector<128x128xf32>
    %127 = arith.addf %123, %126 : vector<128x128xf32>
    %128 = arith.addf %98, %127 : vector<128x128xf32>
    %c0_60 = arith.constant 0 : index
    %c0_61 = arith.constant 0 : index
    %c0_62 = arith.constant 0 : index
    %129 = vector.load %arg16[%c0_60, %c0_61, %c0_62] : memref<1x1x128xf32, #tpu.memory_space<vmem>>, vector<1x1x128xf32>
    %130 = vector.shape_cast %129 : vector<1x1x128xf32> to vector<1x128xf32>
    %c0_63 = arith.constant 0 : index
    %c0_64 = arith.constant 0 : index
    %c0_65 = arith.constant 0 : index
    %131 = vector.load %arg17[%c0_63, %c0_64, %c0_65] : memref<1x1x128xf32, #tpu.memory_space<vmem>>, vector<1x1x128xf32>
    %132 = vector.shape_cast %131 : vector<1x1x128xf32> to vector<1x128xf32>
    %cst_66 = arith.constant dense<0.000000e+00> : vector<128xf32>
    %133 = vector.multi_reduction <add>, %128, %cst_66 [1] : vector<128x128xf32> to vector<128xf32>
    %134 = vector.shape_cast %133 : vector<128xf32> to vector<128x1xf32>
    %cst_67 = arith.constant 1.280000e+02 : f32
    %135 = vector.broadcast %cst_67 : f32 to vector<128x1xf32>
    %136 = arith.divf %134, %135 : vector<128x1xf32>
    %137 = vector.broadcast %136 : vector<128x1xf32> to vector<128x128xf32>
    %138 = arith.subf %128, %137 : vector<128x128xf32>
    %139 = arith.mulf %138, %138 : vector<128x128xf32>
    %cst_68 = arith.constant dense<0.000000e+00> : vector<128xf32>
    %140 = vector.multi_reduction <add>, %139, %cst_68 [1] : vector<128x128xf32> to vector<128xf32>
    %141 = vector.shape_cast %140 : vector<128xf32> to vector<128x1xf32>
    %cst_69 = arith.constant 1.280000e+02 : f32
    %142 = vector.broadcast %cst_69 : f32 to vector<128x1xf32>
    %143 = arith.divf %141, %142 : vector<128x1xf32>
    %144 = vector.broadcast %136 : vector<128x1xf32> to vector<128x128xf32>
    %145 = arith.subf %128, %144 : vector<128x128xf32>
    %cst_70 = arith.constant 9.99999974E-6 : f32
    %146 = vector.broadcast %cst_70 : f32 to vector<128x1xf32>
    %147 = arith.addf %143, %146 : vector<128x1xf32>
    %148 = math.rsqrt %147 : vector<128x1xf32>
    %149 = vector.broadcast %148 : vector<128x1xf32> to vector<128x128xf32>
    %150 = arith.mulf %145, %149 : vector<128x128xf32>
    %151 = vector.broadcast %130 : vector<1x128xf32> to vector<128x128xf32>
    %152 = arith.mulf %150, %151 : vector<128x128xf32>
    %153 = vector.broadcast %132 : vector<1x128xf32> to vector<128x128xf32>
    %154 = arith.addf %152, %153 : vector<128x128xf32>
    %c0_71 = arith.constant 0 : index
    %c0_72 = arith.constant 0 : index
    %c0_73 = arith.constant 0 : index
    %155 = vector.load %arg18[%c0_71, %c0_72, %c0_73] : memref<1x128x128xf32, #tpu.memory_space<vmem>>, vector<1x128x128xf32>
    %156 = vector.shape_cast %155 : vector<1x128x128xf32> to vector<128x128xf32>
    %157 = vector.shape_cast %154 : vector<128x128xf32> to vector<1x128x128xf32>
    tpu.vector_store %arg18[%c0_71, %c0_72, %c0_73], %157 {strides = array<i32>} : memref<1x128x128xf32, #tpu.memory_space<vmem>>, vector<1x128x128xf32>,
    return
  }
  func.func @transform_0(%arg0: i32, %arg1: i32) -> (i32, i32, i32) {
    %c0_i32 = arith.constant 0 : i32
    %c0_i32_0 = arith.constant 0 : i32
    %c0_i32_1 = arith.constant 0 : i32
    return %arg0, %c0_i32, %c0_i32_0 : i32, i32, i32
  }
  func.func @transform_1(%arg0: i32, %arg1: i32) -> (i32, i32, i32) {
    %c0_i32 = arith.constant 0 : i32
    %c0_i32_0 = arith.constant 0 : i32
    %c0_i32_1 = arith.constant 0 : i32
    return %arg0, %c0_i32, %c0_i32_0 : i32, i32, i32
  }
  func.func @transform_2(%arg0: i32, %arg1: i32) -> (i32, i32) {
    %c0_i32 = arith.constant 0 : i32
    %c0_i32_0 = arith.constant 0 : i32
    %c0_i32_1 = arith.constant 0 : i32
    return %c0_i32, %c0_i32_0 : i32, i32
  }
  func.func @transform_3(%arg0: i32, %arg1: i32) -> (i32, i32) {
    %c0_i32 = arith.constant 0 : i32
    %c0_i32_0 = arith.constant 0 : i32
    %c0_i32_1 = arith.constant 0 : i32
    return %c0_i32, %c0_i32_0 : i32, i32
  }
  func.func @transform_4(%arg0: i32, %arg1: i32) -> (i32, i32, i32) {
    %c0_i32 = arith.constant 0 : i32
    %c0_i32_0 = arith.constant 0 : i32
    %c0_i32_1 = arith.constant 0 : i32
    return %arg1, %c0_i32, %c0_i32_0 : i32, i32, i32
  }
  func.func @transform_5(%arg0: i32, %arg1: i32) -> (i32, i32, i32) {
    %c0_i32 = arith.constant 0 : i32
    %c0_i32_0 = arith.constant 0 : i32
    %c0_i32_1 = arith.constant 0 : i32
    return %arg1, %c0_i32, %c0_i32_0 : i32, i32, i32
  }
  func.func @transform_6(%arg0: i32, %arg1: i32) -> (i32, i32, i32) {
    %c0_i32 = arith.constant 0 : i32
    %c0_i32_0 = arith.constant 0 : i32
    %c0_i32_1 = arith.constant 0 : i32
    return %arg1, %c0_i32, %c0_i32_0 : i32, i32, i32
  }
  func.func @transform_7(%arg0: i32, %arg1: i32) -> (i32, i32, i32) {
    %c0_i32 = arith.constant 0 : i32
    %c0_i32_0 = arith.constant 0 : i32
    %c0_i32_1 = arith.constant 0 : i32
    return %arg1, %c0_i32, %c0_i32_0 : i32, i32, i32
  }
  func.func @transform_8(%arg0: i32, %arg1: i32) -> (i32, i32, i32) {
    %c0_i32 = arith.constant 0 : i32
    %c0_i32_0 = arith.constant 0 : i32
    %c0_i32_1 = arith.constant 0 : i32
    return %arg1, %c0_i32, %c0_i32_0 : i32, i32, i32
  }
  func.func @transform_9(%arg0: i32, %arg1: i32) -> (i32, i32, i32) {
    %c0_i32 = arith.constant 0 : i32
    %c0_i32_0 = arith.constant 0 : i32
    %c0_i32_1 = arith.constant 0 : i32
    return %arg1, %c0_i32, %c0_i32_0 : i32, i32, i32
  }
  func.func @transform_10(%arg0: i32, %arg1: i32) -> (i32, i32, i32) {
    %c0_i32 = arith.constant 0 : i32
    %c0_i32_0 = arith.constant 0 : i32
    %c0_i32_1 = arith.constant 0 : i32
    return %arg1, %c0_i32, %c0_i32_0 : i32, i32, i32
  }
  func.func @transform_11(%arg0: i32, %arg1: i32) -> (i32, i32, i32) {
    %c0_i32 = arith.constant 0 : i32
    %c0_i32_0 = arith.constant 0 : i32
    %c0_i32_1 = arith.constant 0 : i32
    return %arg1, %c0_i32, %c0_i32_0 : i32, i32, i32
  }
  func.func @transform_12(%arg0: i32, %arg1: i32) -> (i32, i32, i32) {
    %c0_i32 = arith.constant 0 : i32
    %c0_i32_0 = arith.constant 0 : i32
    %c0_i32_1 = arith.constant 0 : i32
    return %arg1, %c0_i32, %c0_i32_0 : i32, i32, i32
  }
  func.func @transform_13(%arg0: i32, %arg1: i32) -> (i32, i32, i32) {
    %c0_i32 = arith.constant 0 : i32
    %c0_i32_0 = arith.constant 0 : i32
    %c0_i32_1 = arith.constant 0 : i32
    return %arg1, %c0_i32, %c0_i32_0 : i32, i32, i32
  }
  func.func @transform_14(%arg0: i32, %arg1: i32) -> (i32, i32, i32) {
    %c0_i32 = arith.constant 0 : i32
    %c0_i32_0 = arith.constant 0 : i32
    %c0_i32_1 = arith.constant 0 : i32
    return %arg1, %c0_i32, %c0_i32_0 : i32, i32, i32
  }
  func.func @transform_15(%arg0: i32, %arg1: i32) -> (i32, i32, i32) {
    %c0_i32 = arith.constant 0 : i32
    %c0_i32_0 = arith.constant 0 : i32
    %c0_i32_1 = arith.constant 0 : i32
    return %arg1, %c0_i32, %c0_i32_0 : i32, i32, i32
  }
  func.func @transform_16(%arg0: i32, %arg1: i32) -> (i32, i32, i32) {
    %c0_i32 = arith.constant 0 : i32
    %c0_i32_0 = arith.constant 0 : i32
    %c0_i32_1 = arith.constant 0 : i32
    return %arg0, %c0_i32, %c0_i32_0 : i32, i32, i32
  }
}

</mosaic_0001>

<llo_original>
// kernel: tpu_custom_call.1
$region0: #{tpu_custom_call.1}
  #allocation0 [shape = 'u32[]', space=smem, size = 0x4, offset = 0x4, fixed_abs, tag = 'smem constant byte address 0x4 - core index']
  #allocation1 [shape = 'u32[72,128]{1,0:T(1,128)}', space=vmem, size = 0x9000, scoped, tag = 'internal scratch']
  %s0 = inlined_call_operand.hbm [shape: f32[2,128,128], index: 0, kind: input, shape index: {}]
  %s1 = inlined_call_operand.hbm [shape: f32[2,1,128], index: 1, kind: input, shape index: {}]
  %s2 = inlined_call_operand.hbm [shape: f32[1,128], index: 2, kind: input, shape index: {}]
  %s3 = inlined_call_operand.hbm [shape: f32[1,128], index: 3, kind: input, shape index: {}]
  %s4 = inlined_call_operand.hbm [shape: bf16[2,128,384], index: 4, kind: input, shape index: {}]
  %s5 = inlined_call_operand.hbm [shape: f32[2,1,384], index: 5, kind: input, shape index: {}]
  %s6 = inlined_call_operand.hbm [shape: bf16[2,128,128], index: 6, kind: input, shape index: {}]
  %s7 = inlined_call_operand.vmem [shape: f32[2,1,128], index: 7, kind: input, shape index: {}]
  %s8 = inlined_call_operand.hbm [shape: f32[2,1,128], index: 8, kind: input, shape index: {}]
  %s9 = inlined_call_operand.hbm [shape: f32[2,1,128], index: 9, kind: input, shape index: {}]
  %s10 = inlined_call_operand.hbm [shape: bf16[2,128,512], index: 10, kind: input, shape index: {}]
  %s11 = inlined_call_operand.vmem [shape: f32[2,1,512], index: 11, kind: input, shape index: {}]
  %s12 = inlined_call_operand.hbm [shape: bf16[2,512,128], index: 12, kind: input, shape index: {}]
  %s13 = inlined_call_operand.vmem [shape: f32[2,1,128], index: 13, kind: input, shape index: {}]
  %s14 = inlined_call_operand.hbm [shape: f32[2,1,128], index: 14, kind: input, shape index: {}]
  %s15 = inlined_call_operand.vmem [shape: f32[2,1,128], index: 15, kind: input, shape index: {}]
  %s16 = inlined_call_operand.hbm [shape: f32[2,128,128], index: 16, kind: output, shape index: {}]
  %s17 = sld [smem:[#allocation0]]
  $region149: #{tpu_custom_call.1} parent=0
    _
  %s19 = ssub.s32 1, %s17
  %s20 = scalar_select 0, %s19, %s17
  $region1: #{tpu_custom_call.1} parent=0
    #allocation2 [shape = 'u8[131072]{0}', space=vmem, size = 0x20000, scoped, tag = 'input window, operand 0']
    #allocation3 [shape = 's32[2]{0}', space=sflag, size = 0x8, scoped, tag = 'scoped memory for tpu_custom_call.1']
    #allocation4 [shape = 's32[2]{0}', space=sflag, size = 0x8, scoped, tag = 'scoped memory for tpu_custom_call.1']
    #allocation5 [shape = 'u8[1024]{0}', space=vmem, size = 0x400, scoped, tag = 'input window, operand 1']
    #allocation6 [shape = 's32[2]{0}', space=sflag, size = 0x8, scoped, tag = 'scoped memory for tpu_custom_call.1']
    #allocation7 [shape = 'u8[512]{0}', space=vmem, size = 0x400, scoped, tag = 'input window, operand 2, single buffered']
    #allocation8 [shape = 'u8[512]{0}', space=vmem, size = 0x400, scoped, tag = 'input window, operand 3, single buffered']
    #allocation9 [shape = 's32[1]{0}', space=sflag, size = 0x4, scoped, tag = 'scoped memory for tpu_custom_call.1']
    #allocation10 [shape = 'u8[196608]{0}', space=vmem, size = 0x30000, scoped, tag = 'input window, operand 4']
    #allocation11 [shape = 'u8[3072]{0}', space=vmem, size = 0xc00, scoped, tag = 'input window, operand 5']
    #allocation12 [shape = 'u8[65536]{0}', space=vmem, size = 0x10000, scoped, tag = 'input window, operand 6']
    #allocation13 [shape = 'u8[1024]{0}', space=vmem, size = 0x400, scoped, tag = 'input window, operand 8']
    #allocation14 [shape = 'u8[1024]{0}', space=vmem, size = 0x400, scoped, tag = 'input window, operand 9']
    #allocation15 [shape = 'u8[262144]{0}', space=vmem, size = 0x40000, scoped, tag = 'input window, operand 10']
    #allocation16 [shape = 'u8[262144]{0}', space=vmem, size = 0x40000, scoped, tag = 'input window, operand 12']
    #allocation17 [shape = 'u8[1024]{0}', space=vmem, size = 0x400, scoped, tag = 'input window, operand 14']
    #allocation18 [shape = 'u8[131072]{0}', space=vmem, size = 0x20000, scoped, tag = 'output window, operand 0']
    %21 = vsyncpa [#allocation3], 0
    %s22 = scalar_lea.sflag [#allocation3], 1
    %23 = vsyncpa %s22, 0
    %24 = vsyncpa [#allocation6], 0
    %s25 = scalar_lea.sflag [#allocation6], 1
    %26 = vsyncpa %s25, 0
    %27 = vsyncpa [#allocation9], 0
    %28 = vsyncpa [#allocation4], 0
    %s29 = scalar_lea.sflag [#allocation4], 1
    %30 = vsyncpa %s29, 0
    loop: start=0, step=1, limit=6
    $region2: #{tpu_custom_call.1} parent=1 // loop_pre_header
      _
    $region3: #{tpu_custom_call.1} parent=1 // loop_header
      %s32 = sphi 0, %s36
      %p33 = scmp.ge.s32.totalorder %s32, 6
      %s39 = sphi 0, %s51
      %s40 = sphi 0, %s47
      %s41 = sphi 0, %s39
      %s42 = sphi 0, %s40
      %s43 = sphi 0, %s41
      %s44 = sphi 0, %s42
      %s54 = sphi 0, %s56
      %s57 = sphi 0, %s54
      %s58 = sphi 0, %s57
      %s74 = sphi 0, %s58
      %s80 = sphi 0, %s82
      %s83 = sphi 0, %s80
      %s84 = sphi 0, %s83
      %s100 = sphi 0, %s84
      %s104 = sphi 0, %s104
      %s106 = sphi 0, %s104
      %s107 = sphi 0, %s106
      %s121 = sphi 0, %s107
      %s125 = sphi 0, %s125
      %s127 = sphi 0, %s125
      %s128 = sphi 0, %s127
      %s142 = sphi 0, %s128
      %s148 = sphi 0, %s150
      %s151 = sphi 0, %s148
      %s152 = sphi 0, %s151
      %s168 = sphi 0, %s152
      %s174 = sphi 0, %s176
      %s177 = sphi 0, %s174
      %s178 = sphi 0, %s177
      %s194 = sphi 0, %s178
      %s200 = sphi 0, %s202
      %s203 = sphi 0, %s200
      %s204 = sphi 0, %s203
      %s220 = sphi 0, %s204
      %s226 = sphi 0, %s228
      %s229 = sphi 0, %s226
      %s230 = sphi 0, %s229
      %s246 = sphi 0, %s230
      %s252 = sphi 0, %s254
      %s255 = sphi 0, %s252
      %s256 = sphi 0, %s255
      %s272 = sphi 0, %s256
      %s278 = sphi 0, %s280
      %s281 = sphi 0, %s278
      %s282 = sphi 0, %s281
      %s298 = sphi 0, %s282
      %s304 = sphi 0, %s306
      %s307 = sphi 0, %s304
      %s308 = sphi 0, %s307
      %s324 = sphi 0, %s308
      %s330 = sphi 0, %s332
      %s333 = sphi 0, %s330
      %s334 = sphi 0, %s333
      %s350 = sphi 0, %s334
      %s356 = sphi 0, %s358
      %s359 = sphi 0, %s356
      %s360 = sphi 0, %s359
      %s376 = sphi 0, %s360
      %s382 = sphi 0, %s384
      %s385 = sphi 0, %s382
      %s386 = sphi 0, %s385
      %s402 = sphi 0, %s386
      %s408 = sphi 0, %s410
      %s411 = sphi 0, %s408
      %s412 = sphi 0, %s411
      %s428 = sphi 0, %s412
      %s434 = sphi 0, %s436
      %s437 = sphi 0, %s434
      %s438 = sphi 0, %s437
      %s454 = sphi 0, %s438
      %s460 = sphi 0, %s462
      %s463 = sphi 0, %s460
      %s464 = sphi 0, %s463
      %s480 = sphi 0, %s464
    $region4: #{tpu_custom_call.1} parent=1 // loop_header_branch
      %35 = sbr.rel (%p33) target = $region8
    $region5: #{tpu_custom_call.1} parent=1 // loop_body
      %s37 = ssub.s32 %s32, 1
      %s38 = ssub.s32 %s32, 2
      %s45 = sadd.s32 1, %s40
      %p46 = scmp.ge.s32.totalorder %s45, 2
      %s47 = scalar_select %p46, 0, %s45
      %s48 = sadd.s32 1, %s39
      %s49 = scalar_select %p46, %s48, %s39
      %p50 = scmp.ge.s32.totalorder %s49, 2
      %s51 = scalar_select %p50, 0, %s49
      %s52 = ssub.s32 %s39, %s51
      %p53 = scmp.eq.s32.totalorder %s52, 0
      %s55 = sadd.s32 %s54, 1
      %s56 = scalar_select %p53, %s54, %s55
      %p59 = pneg %p53
      %p60 = scmp.eq.s32.totalorder %s32, 3
      %p61 = por %p59, %p60
      %p62 = scmp.ne.s32.totalorder %s54, %s57
      %p63 = scmp.eq.s32.totalorder %s32, 0
      %p64 = por %p62, %p63
      %p65 = scmp.ne.s32.totalorder %s54, %s57
      %p66 = scmp.eq.s32.totalorder %s37, 3
      %p67 = por %p65, %p66
      %p68 = scmp.ne.s32.totalorder %s57, %s58
      %p69 = scmp.eq.s32.totalorder %s37, 0
      %p70 = por %p68, %p69
      %p71 = scmp.ne.s32.totalorder %s57, %s58
      %p72 = scmp.eq.s32.totalorder %s38, 3
      %p73 = por %p71, %p72
      %p75 = scmp.ne.s32.totalorder %s58, %s74
      %p76 = scmp.eq.s32.totalorder %s38, 0
      %p77 = por %p75, %p76
      %s78 = ssub.s32 %s39, %s51
      %p79 = scmp.eq.s32.totalorder %s78, 0
      %s81 = sadd.s32 %s80, 1
      %s82 = scalar_select %p79, %s80, %s81
      %p85 = pneg %p79
      %p86 = scmp.eq.s32.totalorder %s32, 3
      %p87 = por %p85, %p86
      %p88 = scmp.ne.s32.totalorder %s80, %s83
      %p89 = scmp.eq.s32.totalorder %s32, 0
      %p90 = por %p88, %p89
      %p91 = scmp.ne.s32.totalorder %s80, %s83
      %p92 = scmp.eq.s32.totalorder %s37, 3
      %p93 = por %p91, %p92
      %p94 = scmp.ne.s32.totalorder %s83, %s84
      %p95 = scmp.eq.s32.totalorder %s37, 0
      %p96 = por %p94, %p95
      %p97 = scmp.ne.s32.totalorder %s83, %s84
      %p98 = scmp.eq.s32.totalorder %s38, 3
      %p99 = por %p97, %p98
      %p101 = scmp.ne.s32.totalorder %s84, %s100
      %p102 = scmp.eq.s32.totalorder %s38, 0
      %p103 = por %p101, %p102
      %s105 = sadd.s32 %s104, 1
      %p108 = scmp.eq.s32.totalorder %s32, 3
      %p109 = scmp.ne.s32.totalorder %s104, %s106
      %p110 = scmp.eq.s32.totalorder %s32, 0
      %p111 = por %p109, %p110
      %p112 = scmp.ne.s32.totalorder %s104, %s106
      %p113 = scmp.eq.s32.totalorder %s37, 3
      %p114 = por %p112, %p113
      %p115 = scmp.ne.s32.totalorder %s106, %s107
      %p116 = scmp.eq.s32.totalorder %s37, 0
      %p117 = por %p115, %p116
      %p118 = scmp.ne.s32.totalorder %s106, %s107
      %p119 = scmp.eq.s32.totalorder %s38, 3
      %p120 = por %p118, %p119
      %p122 = scmp.ne.s32.totalorder %s107, %s121
      %p123 = scmp.eq.s32.totalorder %s38, 0
      %p124 = por %p122, %p123
      %s126 = sadd.s32 %s125, 1
      %p129 = scmp.eq.s32.totalorder %s32, 3
      %p130 = scmp.ne.s32.totalorder %s125, %s127
      %p131 = scmp.eq.s32.totalorder %s32, 0
      %p132 = por %p130, %p131
      %p133 = scmp.ne.s32.totalorder %s125, %s127
      %p134 = scmp.eq.s32.totalorder %s37, 3
      %p135 = por %p133, %p134
      %p136 = scmp.ne.s32.totalorder %s127, %s128
      %p137 = scmp.eq.s32.totalorder %s37, 0
      %p138 = por %p136, %p137
      %p139 = scmp.ne.s32.totalorder %s127, %s128
      %p140 = scmp.eq.s32.totalorder %s38, 3
      %p141 = por %p139, %p140
      %p143 = scmp.ne.s32.totalorder %s128, %s142
      %p144 = scmp.eq.s32.totalorder %s38, 0
      %p145 = por %p143, %p144
      %s146 = ssub.s32 %s40, %s47
      %p147 = scmp.eq.s32.totalorder %s146, 0
      %s149 = sadd.s32 %s148, 1
      %s150 = scalar_select %p147, %s148, %s149
      %p153 = pneg %p147
      %p154 = scmp.eq.s32.totalorder %s32, 3
      %p155 = por %p153, %p154
      %p156 = scmp.ne.s32.totalorder %s148, %s151
      %p157 = scmp.eq.s32.totalorder %s32, 0
      %p158 = por %p156, %p157
      %p159 = scmp.ne.s32.totalorder %s148, %s151
      %p160 = scmp.eq.s32.totalorder %s37, 3
      %p161 = por %p159, %p160
      %p162 = scmp.ne.s32.totalorder %s151, %s152
      %p163 = scmp.eq.s32.totalorder %s37, 0
      %p164 = por %p162, %p163
      %p165 = scmp.ne.s32.totalorder %s151, %s152
      %p166 = scmp.eq.s32.totalorder %s38, 3
      %p167 = por %p165, %p166
      %p169 = scmp.ne.s32.totalorder %s152, %s168
      %p170 = scmp.eq.s32.totalorder %s38, 0
      %p171 = por %p169, %p170
      %s172 = ssub.s32 %s40, %s47
      %p173 = scmp.eq.s32.totalorder %s172, 0
      %s175 = sadd.s32 %s174, 1
      %s176 = scalar_select %p173, %s174, %s175
      %p179 = pneg %p173
      %p180 = scmp.eq.s32.totalorder %s32, 3
      %p181 = por %p179, %p180
      %p182 = scmp.ne.s32.totalorder %s174, %s177
      %p183 = scmp.eq.s32.totalorder %s32, 0
      %p184 = por %p182, %p183
      %p185 = scmp.ne.s32.totalorder %s174, %s177
      %p186 = scmp.eq.s32.totalorder %s37, 3
      %p187 = por %p185, %p186
      %p188 = scmp.ne.s32.totalorder %s177, %s178
      %p189 = scmp.eq.s32.totalorder %s37, 0
      %p190 = por %p188, %p189
      %p191 = scmp.ne.s32.totalorder %s177, %s178
      %p192 = scmp.eq.s32.totalorder %s38, 3
      %p193 = por %p191, %p192
      %p195 = scmp.ne.s32.totalorder %s178, %s194
      %p196 = scmp.eq.s32.totalorder %s38, 0
      %p197 = por %p195, %p196
      %s198 = ssub.s32 %s40, %s47
      %p199 = scmp.eq.s32.totalorder %s198, 0
      %s201 = sadd.s32 %s200, 1
      %s202 = scalar_select %p199, %s200, %s201
      %p205 = pneg %p199
      %p206 = scmp.eq.s32.totalorder %s32, 3
      %p207 = por %p205, %p206
      %p208 = scmp.ne.s32.totalorder %s200, %s203
      %p209 = scmp.eq.s32.totalorder %s32, 0
      %p210 = por %p208, %p209
      %p211 = scmp.ne.s32.totalorder %s200, %s203
      %p212 = scmp.eq.s32.totalorder %s37, 3
      %p213 = por %p211, %p212
      %p214 = scmp.ne.s32.totalorder %s203, %s204
      %p215 = scmp.eq.s32.totalorder %s37, 0
      %p216 = por %p214, %p215
      %p217 = scmp.ne.s32.totalorder %s203, %s204
      %p218 = scmp.eq.s32.totalorder %s38, 3
      %p219 = por %p217, %p218
      %p221 = scmp.ne.s32.totalorder %s204, %s220
      %p222 = scmp.eq.s32.totalorder %s38, 0
      %p223 = por %p221, %p222
      %s224 = ssub.s32 %s40, %s47
      %p225 = scmp.eq.s32.totalorder %s224, 0
      %s227 = sadd.s32 %s226, 1
      %s228 = scalar_select %p225, %s226, %s227
      %p231 = pneg %p225
      %p232 = scmp.eq.s32.totalorder %s32, 3
      %p233 = por %p231, %p232
      %p234 = scmp.ne.s32.totalorder %s226, %s229
      %p235 = scmp.eq.s32.totalorder %s32, 0
      %p236 = por %p234, %p235
      %p237 = scmp.ne.s32.totalorder %s226, %s229
      %p238 = scmp.eq.s32.totalorder %s37, 3
      %p239 = por %p237, %p238
      %p240 = scmp.ne.s32.totalorder %s229, %s230
      %p241 = scmp.eq.s32.totalorder %s37, 0
      %p242 = por %p240, %p241
      %p243 = scmp.ne.s32.totalorder %s229, %s230
      %p244 = scmp.eq.s32.totalorder %s38, 3
      %p245 = por %p243, %p244
      %p247 = scmp.ne.s32.totalorder %s230, %s246
      %p248 = scmp.eq.s32.totalorder %s38, 0
      %p249 = por %p247, %p248
      %s250 = ssub.s32 %s40, %s47
      %p251 = scmp.eq.s32.totalorder %s250, 0
      %s253 = sadd.s32 %s252, 1
      %s254 = scalar_select %p251, %s252, %s253
      %p257 = pneg %p251
      %p258 = scmp.eq.s32.totalorder %s32, 3
      %p259 = por %p257, %p258
      %p260 = scmp.ne.s32.totalorder %s252, %s255
      %p261 = scmp.eq.s32.totalorder %s32, 0
      %p262 = por %p260, %p261
      %p263 = scmp.ne.s32.totalorder %s252, %s255
      %p264 = scmp.eq.s32.totalorder %s37, 3
      %p265 = por %p263, %p264
      %p266 = scmp.ne.s32.totalorder %s255, %s256
      %p267 = scmp.eq.s32.totalorder %s37, 0
      %p268 = por %p266, %p267
      %p269 = scmp.ne.s32.totalorder %s255, %s256
      %p270 = scmp.eq.s32.totalorder %s38, 3
      %p271 = por %p269, %p270
      %p273 = scmp.ne.s32.totalorder %s256, %s272
      %p274 = scmp.eq.s32.totalorder %s38, 0
      %p275 = por %p273, %p274
      %s276 = ssub.s32 %s40, %s47
      %p277 = scmp.eq.s32.totalorder %s276, 0
      %s279 = sadd.s32 %s278, 1
      %s280 = scalar_select %p277, %s278, %s279
      %p283 = pneg %p277
      %p284 = scmp.eq.s32.totalorder %s32, 3
      %p285 = por %p283, %p284
      %p286 = scmp.ne.s32.totalorder %s278, %s281
      %p287 = scmp.eq.s32.totalorder %s32, 0
      %p288 = por %p286, %p287
      %p289 = scmp.ne.s32.totalorder %s278, %s281
      %p290 = scmp.eq.s32.totalorder %s37, 3
      %p291 = por %p289, %p290
      %p292 = scmp.ne.s32.totalorder %s281, %s282
      %p293 = scmp.eq.s32.totalorder %s37, 0
      %p294 = por %p292, %p293
      %p295 = scmp.ne.s32.totalorder %s281, %s282
      %p296 = scmp.eq.s32.totalorder %s38, 3
      %p297 = por %p295, %p296
      %p299 = scmp.ne.s32.totalorder %s282, %s298
      %p300 = scmp.eq.s32.totalorder %s38, 0
      %p301 = por %p299, %p300
      %s302 = ssub.s32 %s40, %s47
      %p303 = scmp.eq.s32.totalorder %s302, 0
      %s305 = sadd.s32 %s304, 1
      %s306 = scalar_select %p303, %s304, %s305
      %p309 = pneg %p303
      %p310 = scmp.eq.s32.totalorder %s32, 3
      %p311 = por %p309, %p310
      %p312 = scmp.ne.s32.totalorder %s304, %s307
      %p313 = scmp.eq.s32.totalorder %s32, 0
      %p314 = por %p312, %p313
      %p315 = scmp.ne.s32.totalorder %s304, %s307
      %p316 = scmp.eq.s32.totalorder %s37, 3
      %p317 = por %p315, %p316
      %p318 = scmp.ne.s32.totalorder %s307, %s308
      %p319 = scmp.eq.s32.totalorder %s37, 0
      %p320 = por %p318, %p319
      %p321 = scmp.ne.s32.totalorder %s307, %s308
      %p322 = scmp.eq.s32.totalorder %s38, 3
      %p323 = por %p321, %p322
      %p325 = scmp.ne.s32.totalorder %s308, %s324
      %p326 = scmp.eq.s32.totalorder %s38, 0
      %p327 = por %p325, %p326
      %s328 = ssub.s32 %s40, %s47
      %p329 = scmp.eq.s32.totalorder %s328, 0
      %s331 = sadd.s32 %s330, 1
      %s332 = scalar_select %p329, %s330, %s331
      %p335 = pneg %p329
      %p336 = scmp.eq.s32.totalorder %s32, 3
      %p337 = por %p335, %p336
      %p338 = scmp.ne.s32.totalorder %s330, %s333
      %p339 = scmp.eq.s32.totalorder %s32, 0
      %p340 = por %p338, %p339
      %p341 = scmp.ne.s32.totalorder %s330, %s333
      %p342 = scmp.eq.s32.totalorder %s37, 3
      %p343 = por %p341, %p342
      %p344 = scmp.ne.s32.totalorder %s333, %s334
      %p345 = scmp.eq.s32.totalorder %s37, 0
      %p346 = por %p344, %p345
      %p347 = scmp.ne.s32.totalorder %s333, %s334
      %p348 = scmp.eq.s32.totalorder %s38, 3
      %p349 = por %p347, %p348
      %p351 = scmp.ne.s32.totalorder %s334, %s350
      %p352 = scmp.eq.s32.totalorder %s38, 0
      %p353 = por %p351, %p352
      %s354 = ssub.s32 %s40, %s47
      %p355 = scmp.eq.s32.totalorder %s354, 0
      %s357 = sadd.s32 %s356, 1
      %s358 = scalar_select %p355, %s356, %s357
      %p361 = pneg %p355
      %p362 = scmp.eq.s32.totalorder %s32, 3
      %p363 = por %p361, %p362
      %p364 = scmp.ne.s32.totalorder %s356, %s359
      %p365 = scmp.eq.s32.totalorder %s32, 0
      %p366 = por %p364, %p365
      %p367 = scmp.ne.s32.totalorder %s356, %s359
      %p368 = scmp.eq.s32.totalorder %s37, 3
      %p369 = por %p367, %p368
      %p370 = scmp.ne.s32.totalorder %s359, %s360
      %p371 = scmp.eq.s32.totalorder %s37, 0
      %p372 = por %p370, %p371
      %p373 = scmp.ne.s32.totalorder %s359, %s360
      %p374 = scmp.eq.s32.totalorder %s38, 3
      %p375 = por %p373, %p374
      %p377 = scmp.ne.s32.totalorder %s360, %s376
      %p378 = scmp.eq.s32.totalorder %s38, 0
      %p379 = por %p377, %p378
      %s380 = ssub.s32 %s40, %s47
      %p381 = scmp.eq.s32.totalorder %s380, 0
      %s383 = sadd.s32 %s382, 1
      %s384 = scalar_select %p381, %s382, %s383
      %p387 = pneg %p381
      %p388 = scmp.eq.s32.totalorder %s32, 3
      %p389 = por %p387, %p388
      %p390 = scmp.ne.s32.totalorder %s382, %s385
      %p391 = scmp.eq.s32.totalorder %s32, 0
      %p392 = por %p390, %p391
      %p393 = scmp.ne.s32.totalorder %s382, %s385
      %p394 = scmp.eq.s32.totalorder %s37, 3
      %p395 = por %p393, %p394
      %p396 = scmp.ne.s32.totalorder %s385, %s386
      %p397 = scmp.eq.s32.totalorder %s37, 0
      %p398 = por %p396, %p397
      %p399 = scmp.ne.s32.totalorder %s385, %s386
      %p400 = scmp.eq.s32.totalorder %s38, 3
      %p401 = por %p399, %p400
      %p403 = scmp.ne.s32.totalorder %s386, %s402
      %p404 = scmp.eq.s32.totalorder %s38, 0
      %p405 = por %p403, %p404
      %s406 = ssub.s32 %s40, %s47
      %p407 = scmp.eq.s32.totalorder %s406, 0
      %s409 = sadd.s32 %s408, 1
      %s410 = scalar_select %p407, %s408, %s409
      %p413 = pneg %p407
      %p414 = scmp.eq.s32.totalorder %s32, 3
      %p415 = por %p413, %p414
      %p416 = scmp.ne.s32.totalorder %s408, %s411
      %p417 = scmp.eq.s32.totalorder %s32, 0
      %p418 = por %p416, %p417
      %p419 = scmp.ne.s32.totalorder %s408, %s411
      %p420 = scmp.eq.s32.totalorder %s37, 3
      %p421 = por %p419, %p420
      %p422 = scmp.ne.s32.totalorder %s411, %s412
      %p423 = scmp.eq.s32.totalorder %s37, 0
      %p424 = por %p422, %p423
      %p425 = scmp.ne.s32.totalorder %s411, %s412
      %p426 = scmp.eq.s32.totalorder %s38, 3
      %p427 = por %p425, %p426
      %p429 = scmp.ne.s32.totalorder %s412, %s428
      %p430 = scmp.eq.s32.totalorder %s38, 0
      %p431 = por %p429, %p430
      %s432 = ssub.s32 %s40, %s47
      %p433 = scmp.eq.s32.totalorder %s432, 0
      %s435 = sadd.s32 %s434, 1
      %s436 = scalar_select %p433, %s434, %s435
      %p439 = pneg %p433
      %p440 = scmp.eq.s32.totalorder %s32, 3
      %p441 = por %p439, %p440
      %p442 = scmp.ne.s32.totalorder %s434, %s437
      %p443 = scmp.eq.s32.totalorder %s32, 0
      %p444 = por %p442, %p443
      %p445 = scmp.ne.s32.totalorder %s434, %s437
      %p446 = scmp.eq.s32.totalorder %s37, 3
      %p447 = por %p445, %p446
      %p448 = scmp.ne.s32.totalorder %s437, %s438
      %p449 = scmp.eq.s32.totalorder %s37, 0
      %p450 = por %p448, %p449
      %p451 = scmp.ne.s32.totalorder %s437, %s438
      %p452 = scmp.eq.s32.totalorder %s38, 3
      %p453 = por %p451, %p452
      %p455 = scmp.ne.s32.totalorder %s438, %s454
      %p456 = scmp.eq.s32.totalorder %s38, 0
      %p457 = por %p455, %p456
      %s458 = ssub.s32 %s39, %s51
      %p459 = scmp.eq.s32.totalorder %s458, 0
      %s461 = sadd.s32 %s460, 1
      %s462 = scalar_select %p459, %s460, %s461
      %p465 = pneg %p459
      %p466 = scmp.eq.s32.totalorder %s32, 3
      %p467 = por %p465, %p466
      %p468 = scmp.ne.s32.totalorder %s460, %s463
      %p469 = scmp.eq.s32.totalorder %s32, 0
      %p470 = por %p468, %p469
      %p471 = scmp.ne.s32.totalorder %s460, %s463
      %p472 = scmp.eq.s32.totalorder %s37, 3
      %p473 = por %p471, %p472
      %p474 = scmp.ne.s32.totalorder %s463, %s464
      %p475 = scmp.eq.s32.totalorder %s37, 0
      %p476 = por %p474, %p475
      %p477 = scmp.ne.s32.totalorder %s463, %s464
      %p478 = scmp.eq.s32.totalorder %s38, 3
      %p479 = por %p477, %p478
      %p481 = scmp.ne.s32.totalorder %s464, %s480
      %p482 = scmp.eq.s32.totalorder %s38, 0
      %p483 = por %p481, %p482
      %p484 = scmp.le.s32.totalorder 1, %s32
      %p485 = scmp.lt.s32.totalorder %s32, 5
      %p486 = pnand %p484, %p485
      %p487 = pneg %p486
      // Predicated region
      $region9: #{tpu_custom_call.1} parent=5 // pred_check
        _
      $region10: #{tpu_custom_call.1} parent=5 // pred_check_branch
        %489 = sbr.rel (%p486) target = $region12
      $region11: #{tpu_custom_call.1} parent=5 // pred_region
        %s490 = ssub.s32 %s32, 1
        // Predicated region
        $region13: #{tpu_custom_call.1} parent=11 // pred_check
          %p491 = pneg %p117
        $region14: #{tpu_custom_call.1} parent=11 // pred_check_branch
          %493 = sbr.rel (%p491) target = $region16
        $region15: #{tpu_custom_call.1} parent=11 // pred_region
          %495 = vsyncadd [#allocation6], 0
          %s497 = sshll.u32 %s2, 4
          %s498 = int_to_ptr.hbm [resolvable:$true] %s497
          %s499 = sshll.u32 [#allocation7], 4
          %s500 = int_to_ptr.vmem [resolvable:$true] %s499
          %502 = dma.hbm_to_vmem [thread:$0]  %s498, 16, %s500, [#allocation6]
        $region16: #{tpu_custom_call.1} parent=11 // pred_fallthru
          _
        // Predicated region
        $region17: #{tpu_custom_call.1} parent=11 // pred_check
          %p503 = pneg %p138
        $region18: #{tpu_custom_call.1} parent=11 // pred_check_branch
          %505 = sbr.rel (%p503) target = $region20
        $region19: #{tpu_custom_call.1} parent=11 // pred_region
          %507 = vsyncadd [#allocation9], 0
          %s509 = sshll.u32 %s3, 4
          %s510 = int_to_ptr.hbm [resolvable:$true] %s509
          %s511 = sshll.u32 [#allocation8], 4
          %s512 = int_to_ptr.vmem [resolvable:$true] %s511
          %514 = dma.hbm_to_vmem [thread:$0]  %s510, 16, %s512, [#allocation9]
        $region20: #{tpu_custom_call.1} parent=11 // pred_fallthru
          _
      $region12: #{tpu_custom_call.1} parent=5 // pred_fallthru
        _
      %p515 = scmp.lt.s32.totalorder %s32, 4
      // Predicated region
      $region21: #{tpu_custom_call.1} parent=5 // pred_check
        %p516 = pneg %p515
      $region22: #{tpu_custom_call.1} parent=5 // pred_check_branch
        %518 = sbr.rel (%p516) target = $region24
      $region23: #{tpu_custom_call.1} parent=5 // pred_region
        // Predicated region
        $region25: #{tpu_custom_call.1} parent=23 // pred_check
          %p519 = pneg %p64
        $region26: #{tpu_custom_call.1} parent=23 // pred_check_branch
          %521 = sbr.rel (%p519) target = $region28
        $region27: #{tpu_custom_call.1} parent=23 // pred_region
          %s522 = sand.u32 %s32, 1
          %s523 = scalar_lea.sflag [#allocation3], %s522
          %s524 = sand.u32 %s54, 1
          %s525 = smul.addr %s524, 128
          %s526 = scalar_lea.vmem [#allocation2], %s525
          %528 = vsyncadd %s523, 0
          %s529 = smul.addr %s39, 16
          %s530 = smul.addr %s529, 8
          %s531 = scalar_lea.hbm %s0, %s530
          %s532 = sshll.u32 %s531, 4
          %s533 = int_to_ptr.hbm [resolvable:$true] %s532
          %s534 = sshll.u32 %s526, 4
          %s535 = int_to_ptr.vmem [resolvable:$true] %s534
          %540 = dma.hbm_to_vmem [thread:$0]  %s533, 2048, %s535, %s523, 128, 128, 8
        $region28: #{tpu_custom_call.1} parent=23 // pred_fallthru
          _
        // Predicated region
        $region29: #{tpu_custom_call.1} parent=23 // pred_check
          %p541 = pneg %p90
        $region30: #{tpu_custom_call.1} parent=23 // pred_check_branch
          %543 = sbr.rel (%p541) target = $region32
        $region31: #{tpu_custom_call.1} parent=23 // pred_region
          %s544 = sand.u32 %s32, 1
          %s545 = scalar_lea.sflag [#allocation6], %s544
          %s546 = sand.u32 %s80, 1
          %s547 = scalar_lea.vmem [#allocation5], %s546
          %549 = vsyncadd %s545, 0
          %s550 = scalar_lea.hbm %s1, %s39
          %s552 = sshll.u32 %s550, 4
          %s553 = int_to_ptr.hbm [resolvable:$true] %s552
          %s554 = sshll.u32 %s547, 4
          %s555 = int_to_ptr.vmem [resolvable:$true] %s554
          %557 = dma.hbm_to_vmem [thread:$0]  %s553, 16, %s555, %s545
        $region32: #{tpu_custom_call.1} parent=23 // pred_fallthru
          _
        // Predicated region
        $region33: #{tpu_custom_call.1} parent=23 // pred_check
          %p558 = pneg %p158
        $region34: #{tpu_custom_call.1} parent=23 // pred_check_branch
          %560 = sbr.rel (%p558) target = $region36
        $region35: #{tpu_custom_call.1} parent=23 // pred_region
          %s561 = sand.u32 %s32, 1
          %s562 = scalar_lea.sflag [#allocation3], %s561
          %s563 = sand.u32 %s148, 1
          %s564 = smul.addr %s563, 192
          %s565 = scalar_lea.vmem [#allocation10], %s564
          %567 = vsyncadd %s562, 0
          %s568 = smul.addr %s40, 48
          %s569 = smul.addr %s568, 4
          %s570 = scalar_lea.hbm %s4, %s569
          %s571 = sshll.u32 %s570, 4
          %s572 = int_to_ptr.hbm [resolvable:$true] %s571
          %s573 = sshll.u32 %s565, 4
          %s574 = int_to_ptr.vmem [resolvable:$true] %s573
          %579 = dma.hbm_to_vmem [thread:$0]  %s572, 3072, %s574, %s562, 192, 192, 12
        $region36: #{tpu_custom_call.1} parent=23 // pred_fallthru
          _
        // Predicated region
        $region37: #{tpu_custom_call.1} parent=23 // pred_check
          %p580 = pneg %p184
        $region38: #{tpu_custom_call.1} parent=23 // pred_check_branch
          %582 = sbr.rel (%p580) target = $region40
        $region39: #{tpu_custom_call.1} parent=23 // pred_region
          %s583 = sand.u32 %s32, 1
          %s584 = scalar_lea.sflag [#allocation6], %s583
          %s585 = sand.u32 %s174, 1
          %s586 = smul.addr %s585, 3
          %s587 = scalar_lea.vmem [#allocation11], %s586
          %589 = vsyncadd %s584, 0
          %s590 = smul.addr %s40, 3
          %s591 = scalar_lea.hbm %s5, %s590
          %s593 = sshll.u32 %s591, 4
          %s594 = int_to_ptr.hbm [resolvable:$true] %s593
          %s595 = sshll.u32 %s587, 4
          %s596 = int_to_ptr.vmem [resolvable:$true] %s595
          %598 = dma.hbm_to_vmem [thread:$0]  %s594, 48, %s596, %s584
        $region40: #{tpu_custom_call.1} parent=23 // pred_fallthru
          _
        // Predicated region
        $region41: #{tpu_custom_call.1} parent=23 // pred_check
          %p599 = pneg %p210
        $region42: #{tpu_custom_call.1} parent=23 // pred_check_branch
          %601 = sbr.rel (%p599) target = $region44
        $region43: #{tpu_custom_call.1} parent=23 // pred_region
          %s602 = sand.u32 %s32, 1
          %s603 = scalar_lea.sflag [#allocation3], %s602
          %s604 = sand.u32 %s200, 1
          %s605 = smul.addr %s604, 64
          %s606 = scalar_lea.vmem [#allocation12], %s605
          %608 = vsyncadd %s603, 0
          %s609 = smul.addr %s40, 16
          %s610 = smul.addr %s609, 4
          %s611 = scalar_lea.hbm %s6, %s610
          %s612 = sshll.u32 %s611, 4
          %s613 = int_to_ptr.hbm [resolvable:$true] %s612
          %s614 = sshll.u32 %s606, 4
          %s615 = int_to_ptr.vmem [resolvable:$true] %s614
          %620 = dma.hbm_to_vmem [thread:$0]  %s613, 1024, %s615, %s603, 64, 64, 4
        $region44: #{tpu_custom_call.1} parent=23 // pred_fallthru
          _
        // Predicated region
        $region45: #{tpu_custom_call.1} parent=23 // pred_check
          %p621 = pneg %p236
        $region46: #{tpu_custom_call.1} parent=23 // pred_check_branch
          %623 = sbr.rel (%p621) target = $region48
        $region47: #{tpu_custom_call.1} parent=23 // pred_region
          %p624 = scmp.lt.s32.totalorder %s40, 1
          %s625 = scalar_select %p624, %s40, 1
          %s626 = scalar_lea.vmem %s7, %s625
        $region48: #{tpu_custom_call.1} parent=23 // pred_fallthru
          _
        // Predicated region
        $region49: #{tpu_custom_call.1} parent=23 // pred_check
          %p627 = pneg %p262
        $region50: #{tpu_custom_call.1} parent=23 // pred_check_branch
          %629 = sbr.rel (%p627) target = $region52
        $region51: #{tpu_custom_call.1} parent=23 // pred_region
          %s630 = sand.u32 %s32, 1
          %s631 = scalar_lea.sflag [#allocation6], %s630
          %s632 = sand.u32 %s252, 1
          %s633 = scalar_lea.vmem [#allocation13], %s632
          %635 = vsyncadd %s631, 0
          %s636 = scalar_lea.hbm %s8, %s40
          %s638 = sshll.u32 %s636, 4
          %s639 = int_to_ptr.hbm [resolvable:$true] %s638
          %s640 = sshll.u32 %s633, 4
          %s641 = int_to_ptr.vmem [resolvable:$true] %s640
          %643 = dma.hbm_to_vmem [thread:$0]  %s639, 16, %s641, %s631
        $region52: #{tpu_custom_call.1} parent=23 // pred_fallthru
          _
        // Predicated region
        $region53: #{tpu_custom_call.1} parent=23 // pred_check
          %p644 = pneg %p288
        $region54: #{tpu_custom_call.1} parent=23 // pred_check_branch
          %646 = sbr.rel (%p644) target = $region56
        $region55: #{tpu_custom_call.1} parent=23 // pred_region
          %s647 = sand.u32 %s32, 1
          %s648 = scalar_lea.sflag [#allocation3], %s647
          %s649 = sand.u32 %s278, 1
          %s650 = scalar_lea.vmem [#allocation14], %s649
          %652 = vsyncadd %s648, 0
          %s653 = scalar_lea.hbm %s9, %s40
          %s655 = sshll.u32 %s653, 4
          %s656 = int_to_ptr.hbm [resolvable:$true] %s655
          %s657 = sshll.u32 %s650, 4
          %s658 = int_to_ptr.vmem [resolvable:$true] %s657
          %660 = dma.hbm_to_vmem [thread:$0]  %s656, 16, %s658, %s648
        $region56: #{tpu_custom_call.1} parent=23 // pred_fallthru
          _
        // Predicated region
        $region57: #{tpu_custom_call.1} parent=23 // pred_check
          %p661 = pneg %p314
        $region58: #{tpu_custom_call.1} parent=23 // pred_check_branch
          %663 = sbr.rel (%p661) target = $region60
        $region59: #{tpu_custom_call.1} parent=23 // pred_region
          %s664 = sand.u32 %s32, 1
          %s665 = scalar_lea.sflag [#allocation6], %s664
          %s666 = sand.u32 %s304, 1
          %s667 = smul.addr %s666, 256
          %s668 = scalar_lea.vmem [#allocation15], %s667
          %670 = vsyncadd %s665, 0
          %s671 = smul.addr %s40, 64
          %s672 = smul.addr %s671, 4
          %s673 = scalar_lea.hbm %s10, %s672
          %s674 = sshll.u32 %s673, 4
          %s675 = int_to_ptr.hbm [resolvable:$true] %s674
          %s676 = sshll.u32 %s668, 4
          %s677 = int_to_ptr.vmem [resolvable:$true] %s676
          %682 = dma.hbm_to_vmem [thread:$0]  %s675, 4096, %s677, %s665, 256, 256, 16
        $region60: #{tpu_custom_call.1} parent=23 // pred_fallthru
          _
        // Predicated region
        $region61: #{tpu_custom_call.1} parent=23 // pred_check
          %p683 = pneg %p340
        $region62: #{tpu_custom_call.1} parent=23 // pred_check_branch
          %685 = sbr.rel (%p683) target = $region64
        $region63: #{tpu_custom_call.1} parent=23 // pred_region
          %p686 = scmp.lt.s32.totalorder %s40, 1
          %s687 = scalar_select %p686, %s40, 1
          %s688 = smul.addr %s687, 4
          %s689 = scalar_lea.vmem %s11, %s688
        $region64: #{tpu_custom_call.1} parent=23 // pred_fallthru
          _
        // Predicated region
        $region65: #{tpu_custom_call.1} parent=23 // pred_check
          %p690 = pneg %p366
        $region66: #{tpu_custom_call.1} parent=23 // pred_check_branch
          %692 = sbr.rel (%p690) target = $region68
        $region67: #{tpu_custom_call.1} parent=23 // pred_region
          %s693 = sand.u32 %s32, 1
          %s694 = scalar_lea.sflag [#allocation3], %s693
          %s695 = sand.u32 %s356, 1
          %s696 = smul.addr %s695, 256
          %s697 = scalar_lea.vmem [#allocation16], %s696
          %699 = vsyncadd %s694, 0
          %s700 = smul.addr %s40, 64
          %s701 = smul.addr %s700, 4
          %s702 = scalar_lea.hbm %s12, %s701
          %s703 = sshll.u32 %s702, 4
          %s704 = int_to_ptr.hbm [resolvable:$true] %s703
          %s705 = sshll.u32 %s697, 4
          %s706 = int_to_ptr.vmem [resolvable:$true] %s705
          %711 = dma.hbm_to_vmem [thread:$0]  %s704, 4096, %s706, %s694, 64, 64, 4
        $region68: #{tpu_custom_call.1} parent=23 // pred_fallthru
          _
        // Predicated region
        $region69: #{tpu_custom_call.1} parent=23 // pred_check
          %p712 = pneg %p392
        $region70: #{tpu_custom_call.1} parent=23 // pred_check_branch
          %714 = sbr.rel (%p712) target = $region72
        $region71: #{tpu_custom_call.1} parent=23 // pred_region
          %p715 = scmp.lt.s32.totalorder %s40, 1
          %s716 = scalar_select %p715, %s40, 1
          %s717 = scalar_lea.vmem %s13, %s716
        $region72: #{tpu_custom_call.1} parent=23 // pred_fallthru
          _
        // Predicated region
        $region73: #{tpu_custom_call.1} parent=23 // pred_check
          %p718 = pneg %p418
        $region74: #{tpu_custom_call.1} parent=23 // pred_check_branch
          %720 = sbr.rel (%p718) target = $region76
        $region75: #{tpu_custom_call.1} parent=23 // pred_region
          %s721 = sand.u32 %s32, 1
          %s722 = scalar_lea.sflag [#allocation6], %s721
          %s723 = sand.u32 %s408, 1
          %s724 = scalar_lea.vmem [#allocation17], %s723
          %726 = vsyncadd %s722, 0
          %s727 = scalar_lea.hbm %s14, %s40
          %s729 = sshll.u32 %s727, 4
          %s730 = int_to_ptr.hbm [resolvable:$true] %s729
          %s731 = sshll.u32 %s724, 4
          %s732 = int_to_ptr.vmem [resolvable:$true] %s731
          %734 = dma.hbm_to_vmem [thread:$0]  %s730, 16, %s732, %s722
        $region76: #{tpu_custom_call.1} parent=23 // pred_fallthru
          _
        // Predicated region
        $region77: #{tpu_custom_call.1} parent=23 // pred_check
          %p735 = pneg %p444
        $region78: #{tpu_custom_call.1} parent=23 // pred_check_branch
          %737 = sbr.rel (%p735) target = $region80
        $region79: #{tpu_custom_call.1} parent=23 // pred_region
          %p738 = scmp.lt.s32.totalorder %s40, 1
          %s739 = scalar_select %p738, %s40, 1
          %s740 = scalar_lea.vmem %s15, %s739
        $region80: #{tpu_custom_call.1} parent=23 // pred_fallthru
          _
      $region24: #{tpu_custom_call.1} parent=5 // pred_fallthru
        _
      %p741 = scmp.le.s32.totalorder 1, %s32
      %p742 = scmp.lt.s32.totalorder %s32, 5
      %p743 = pnand %p741, %p742
      %p744 = pneg %p743
      // Predicated region
      $region81: #{tpu_custom_call.1} parent=5 // pred_check
        _
      $region82: #{tpu_custom_call.1} parent=5 // pred_check_branch
        %746 = sbr.rel (%p743) target = $region84
      $region83: #{tpu_custom_call.1} parent=5 // pred_region
        %s747 = ssub.s32 %s32, 1
        %s748 = sand.u32 %s37, 1
        %s749 = scalar_lea.sflag [#allocation3], %s748
        %s750 = sand.u32 %s57, 1
        %s751 = smul.addr %s750, 128
        %s752 = scalar_lea.vmem [#allocation2], %s751
        // Predicated region
        $region85: #{tpu_custom_call.1} parent=83 // pred_check
          %p753 = pneg %p70
        $region86: #{tpu_custom_call.1} parent=83 // pred_check_branch
          %755 = sbr.rel (%p753) target = $region88
        $region87: #{tpu_custom_call.1} parent=83 // pred_region
          %757 = dma.done %s749, 2048
        $region88: #{tpu_custom_call.1} parent=83 // pred_fallthru
          _
        %s758 = sand.u32 %s37, 1
        %s759 = scalar_lea.sflag [#allocation6], %s758
        %s760 = sand.u32 %s83, 1
        %s761 = scalar_lea.vmem [#allocation5], %s760
        // Predicated region
        $region89: #{tpu_custom_call.1} parent=83 // pred_check
          %p762 = pneg %p96
        $region90: #{tpu_custom_call.1} parent=83 // pred_check_branch
          %764 = sbr.rel (%p762) target = $region92
        $region91: #{tpu_custom_call.1} parent=83 // pred_region
          %766 = dma.done %s759, 16
        $region92: #{tpu_custom_call.1} parent=83 // pred_fallthru
          _
        // Predicated region
        $region93: #{tpu_custom_call.1} parent=83 // pred_check
          %p767 = pneg %p117
        $region94: #{tpu_custom_call.1} parent=83 // pred_check_branch
          %769 = sbr.rel (%p767) target = $region96
        $region95: #{tpu_custom_call.1} parent=83 // pred_region
          %771 = dma.done [#allocation6], 16
        $region96: #{tpu_custom_call.1} parent=83 // pred_fallthru
          _
        // Predicated region
        $region97: #{tpu_custom_call.1} parent=83 // pred_check
          %p772 = pneg %p138
        $region98: #{tpu_custom_call.1} parent=83 // pred_check_branch
          %774 = sbr.rel (%p772) target = $region100
        $region99: #{tpu_custom_call.1} parent=83 // pred_region
          %776 = dma.done [#allocation9], 16
        $region100: #{tpu_custom_call.1} parent=83 // pred_fallthru
          _
        %s777 = sand.u32 %s37, 1
        %s778 = scalar_lea.sflag [#allocation3], %s777
        %s779 = sand.u32 %s151, 1
        %s780 = smul.addr %s779, 192
        %s781 = scalar_lea.vmem [#allocation10], %s780
        // Predicated region
        $region101: #{tpu_custom_call.1} parent=83 // pred_check
          %p782 = pneg %p164
        $region102: #{tpu_custom_call.1} parent=83 // pred_check_branch
          %784 = sbr.rel (%p782) target = $region104
        $region103: #{tpu_custom_call.1} parent=83 // pred_region
          %786 = dma.done %s778, 3072
        $region104: #{tpu_custom_call.1} parent=83 // pred_fallthru
          _
        %s787 = sand.u32 %s37, 1
        %s788 = scalar_lea.sflag [#allocation6], %s787
        %s789 = sand.u32 %s177, 1
        %s790 = smul.addr %s789, 3
        %s791 = scalar_lea.vmem [#allocation11], %s790
        // Predicated region
        $region105: #{tpu_custom_call.1} parent=83 // pred_check
          %p792 = pneg %p190
        $region106: #{tpu_custom_call.1} parent=83 // pred_check_branch
          %794 = sbr.rel (%p792) target = $region108
        $region107: #{tpu_custom_call.1} parent=83 // pred_region
          %796 = dma.done %s788, 48
        $region108: #{tpu_custom_call.1} parent=83 // pred_fallthru
          _
        %s797 = sand.u32 %s37, 1
        %s798 = scalar_lea.sflag [#allocation3], %s797
        %s799 = sand.u32 %s203, 1
        %s800 = smul.addr %s799, 64
        %s801 = scalar_lea.vmem [#allocation12], %s800
        // Predicated region
        $region109: #{tpu_custom_call.1} parent=83 // pred_check
          %p802 = pneg %p216
        $region110: #{tpu_custom_call.1} parent=83 // pred_check_branch
          %804 = sbr.rel (%p802) target = $region112
        $region111: #{tpu_custom_call.1} parent=83 // pred_region
          %806 = dma.done %s798, 1024
        $region112: #{tpu_custom_call.1} parent=83 // pred_fallthru
          _
        %s807 = sand.u32 %s37, 1
        %s808 = scalar_lea.sflag [#allocation6], %s807
        %s809 = sand.u32 %s255, 1
        %s810 = scalar_lea.vmem [#allocation13], %s809
        // Predicated region
        $region113: #{tpu_custom_call.1} parent=83 // pred_check
          %p811 = pneg %p268
        $region114: #{tpu_custom_call.1} parent=83 // pred_check_branch
          %813 = sbr.rel (%p811) target = $region116
        $region115: #{tpu_custom_call.1} parent=83 // pred_region
          %815 = dma.done %s808, 16
        $region116: #{tpu_custom_call.1} parent=83 // pred_fallthru
          _
        %s816 = sand.u32 %s37, 1
        %s817 = scalar_lea.sflag [#allocation3], %s816
        %s818 = sand.u32 %s281, 1
        %s819 = scalar_lea.vmem [#allocation14], %s818
        // Predicated region
        $region117: #{tpu_custom_call.1} parent=83 // pred_check
          %p820 = pneg %p294
        $region118: #{tpu_custom_call.1} parent=83 // pred_check_branch
          %822 = sbr.rel (%p820) target = $region120
        $region119: #{tpu_custom_call.1} parent=83 // pred_region
          %824 = dma.done %s817, 16
        $region120: #{tpu_custom_call.1} parent=83 // pred_fallthru
          _
        %s825 = sand.u32 %s37, 1
        %s826 = scalar_lea.sflag [#allocation6], %s825
        %s827 = sand.u32 %s307, 1
        %s828 = smul.addr %s827, 256
        %s829 = scalar_lea.vmem [#allocation15], %s828
        // Predicated region
        $region121: #{tpu_custom_call.1} parent=83 // pred_check
          %p830 = pneg %p320
        $region122: #{tpu_custom_call.1} parent=83 // pred_check_branch
          %832 = sbr.rel (%p830) target = $region124
        $region123: #{tpu_custom_call.1} parent=83 // pred_region
          %834 = dma.done %s826, 4096
        $region124: #{tpu_custom_call.1} parent=83 // pred_fallthru
          _
        %s835 = sand.u32 %s37, 1
        %s836 = scalar_lea.sflag [#allocation3], %s835
        %s837 = sand.u32 %s359, 1
        %s838 = smul.addr %s837, 256
        %s839 = scalar_lea.vmem [#allocation16], %s838
        // Predicated region
        $region125: #{tpu_custom_call.1} parent=83 // pred_check
          %p840 = pneg %p372
        $region126: #{tpu_custom_call.1} parent=83 // pred_check_branch
          %842 = sbr.rel (%p840) target = $region128
        $region127: #{tpu_custom_call.1} parent=83 // pred_region
          %844 = dma.done %s836, 4096
        $region128: #{tpu_custom_call.1} parent=83 // pred_fallthru
          _
        %s845 = sand.u32 %s37, 1
        %s846 = scalar_lea.sflag [#allocation6], %s845
        %s847 = sand.u32 %s411, 1
        %s848 = scalar_lea.vmem [#allocation17], %s847
        // Predicated region
        $region129: #{tpu_custom_call.1} parent=83 // pred_check
          %p849 = pneg %p424
        $region130: #{tpu_custom_call.1} parent=83 // pred_check_branch
          %851 = sbr.rel (%p849) target = $region132
        $region131: #{tpu_custom_call.1} parent=83 // pred_region
          %853 = dma.done %s846, 16
        $region132: #{tpu_custom_call.1} parent=83 // pred_fallthru
          _
        %s854 = sand.u32 %s37, 1
        %s855 = scalar_lea.sflag [#allocation3], %s854
        %s856 = sand.u32 %s57, 1
        %s857 = smul.addr %s856, 128
        %s858 = scalar_lea.vmem [#allocation2], %s857
        %p859 = pneg %p70
        %p860 = pneg %p67
        %s861 = sand.u32 %s37, 1
        %s862 = scalar_lea.sflag [#allocation6], %s861
        %s863 = sand.u32 %s83, 1
        %s864 = scalar_lea.vmem [#allocation5], %s863
        %p865 = pneg %p96
        %p866 = pneg %p93
        %p867 = pneg %p117
        %p868 = pneg %p114
        %p869 = pneg %p138
        %p870 = pneg %p135
        %s871 = sand.u32 %s37, 1
        %s872 = scalar_lea.sflag [#allocation3], %s871
        %s873 = sand.u32 %s151, 1
        %s874 = smul.addr %s873, 192
        %s875 = scalar_lea.vmem [#allocation10], %s874
        %p876 = pneg %p164
        %p877 = pneg %p161
        %s878 = sand.u32 %s37, 1
        %s879 = scalar_lea.sflag [#allocation6], %s878
        %s880 = sand.u32 %s177, 1
        %s881 = smul.addr %s880, 3
        %s882 = scalar_lea.vmem [#allocation11], %s881
        %p883 = pneg %p190
        %p884 = pneg %p187
        %s885 = sand.u32 %s37, 1
        %s886 = scalar_lea.sflag [#allocation3], %s885
        %s887 = sand.u32 %s203, 1
        %s888 = smul.addr %s887, 64
        %s889 = scalar_lea.vmem [#allocation12], %s888
        %p890 = pneg %p216
        %p891 = pneg %p213
        %p892 = scmp.lt.s32.totalorder %s42, 1
        %s893 = scalar_select %p892, %s42, 1
        %s894 = scalar_lea.vmem %s7, %s893
        %p895 = pneg %p242
        %p896 = pneg %p239
        %s897 = sand.u32 %s37, 1
        %s898 = scalar_lea.sflag [#allocation6], %s897
        %s899 = sand.u32 %s255, 1
        %s900 = scalar_lea.vmem [#allocation13], %s899
        %p901 = pneg %p268
        %p902 = pneg %p265
        %s903 = sand.u32 %s37, 1
        %s904 = scalar_lea.sflag [#allocation3], %s903
        %s905 = sand.u32 %s281, 1
        %s906 = scalar_lea.vmem [#allocation14], %s905
        %p907 = pneg %p294
        %p908 = pneg %p291
        %s909 = sand.u32 %s37, 1
        %s910 = scalar_lea.sflag [#allocation6], %s909
        %s911 = sand.u32 %s307, 1
        %s912 = smul.addr %s911, 256
        %s913 = scalar_lea.vmem [#allocation15], %s912
        %p914 = pneg %p320
        %p915 = pneg %p317
        %p916 = scmp.lt.s32.totalorder %s42, 1
        %s917 = scalar_select %p916, %s42, 1
        %s918 = smul.addr %s917, 4
        %s919 = scalar_lea.vmem %s11, %s918
        %p920 = pneg %p346
        %p921 = pneg %p343
        %s922 = sand.u32 %s37, 1
        %s923 = scalar_lea.sflag [#allocation3], %s922
        %s924 = sand.u32 %s359, 1
        %s925 = smul.addr %s924, 256
        %s926 = scalar_lea.vmem [#allocation16], %s925
        %p927 = pneg %p372
        %p928 = pneg %p369
        %p929 = scmp.lt.s32.totalorder %s42, 1
        %s930 = scalar_select %p929, %s42, 1
        %s931 = scalar_lea.vmem %s13, %s930
        %p932 = pneg %p398
        %p933 = pneg %p395
        %s934 = sand.u32 %s37, 1
        %s935 = scalar_lea.sflag [#allocation6], %s934
        %s936 = sand.u32 %s411, 1
        %s937 = scalar_lea.vmem [#allocation17], %s936
        %p938 = pneg %p424
        %p939 = pneg %p421
        %p940 = scmp.lt.s32.totalorder %s42, 1
        %s941 = scalar_select %p940, %s42, 1
        %s942 = scalar_lea.vmem %s15, %s941
        %p943 = pneg %p450
        %p944 = pneg %p447
        %p945 = pneg %p476
        %p946 = pneg %p473
        %s947 = sand.u32 %s463, 1
        %s948 = scalar_lea.sflag [#allocation4], %s947
        %s949 = sand.u32 %s463, 1
        %s950 = smul.addr %s949, 128
        %s951 = scalar_lea.vmem [#allocation18], %s950
        %p952 = scmp.lt.s32.totalorder %s42, 1
        %s953 = scalar_select %p952, %s42, 1
        %s954 = scalar_lea.vmem %s7, %s953
        %p955 = scmp.lt.s32.totalorder %s42, 1
        %s956 = scalar_select %p955, %s42, 1
        %s957 = smul.addr %s956, 4
        %s958 = scalar_lea.vmem %s11, %s957
        %p959 = scmp.lt.s32.totalorder %s42, 1
        %s960 = scalar_select %p959, %s42, 1
        %s961 = scalar_lea.vmem %s13, %s960
        %p962 = scmp.lt.s32.totalorder %s42, 1
        %s963 = scalar_select %p962, %s42, 1
        %s964 = scalar_lea.vmem %s15, %s963
        %p966 = scmp.eq.s32.totalorder %s42, 0
        // Predicated region
        $region133: #{tpu_custom_call.1} parent=83 // pred_check
          %p967 = pneg %p966
        $region134: #{tpu_custom_call.1} parent=83 // pred_check_branch
          %969 = sbr.rel (%p967) target = $region136
        $region135: #{tpu_custom_call.1} parent=83 // pred_region
          %v970 = vld [vmem:[%s752] sm:$0xff]
          %v971 = vld [vmem:[%s752 + $0x8] sm:$0xff]
          %v972 = vld [vmem:[%s752 + $0x10] sm:$0xff]
          %v973 = vld [vmem:[%s752 + $0x18] sm:$0xff]
          %v974 = vld [vmem:[%s752 + $0x20] sm:$0xff]
          %v975 = vld [vmem:[%s752 + $0x28] sm:$0xff]
          %v976 = vld [vmem:[%s752 + $0x30] sm:$0xff]
          %v977 = vld [vmem:[%s752 + $0x38] sm:$0xff]
          %v978 = vld [vmem:[%s752 + $0x40] sm:$0xff]
          %v979 = vld [vmem:[%s752 + $0x48] sm:$0xff]
          %v980 = vld [vmem:[%s752 + $0x50] sm:$0xff]
          %v981 = vld [vmem:[%s752 + $0x58] sm:$0xff]
          %v982 = vld [vmem:[%s752 + $0x60] sm:$0xff]
          %v983 = vld [vmem:[%s752 + $0x68] sm:$0xff]
          %v984 = vld [vmem:[%s752 + $0x70] sm:$0xff]
          %v985 = vld [vmem:[%s752 + $0x78] sm:$0xff]
          %v986 = vld [vmem:[#allocation7] sm:$0x1]
          %v987 = vld [vmem:[#allocation8] sm:$0x1]
          %988 = vadd.xlane.f32.xlu0 %v970
          %v989 = vpop.xlane.xlu0 %988
          %990 = vadd.xlane.f32.xlu0 %v971
          %v991 = vpop.xlane.xlu0 %990
          %992 = vadd.xlane.f32.xlu0 %v972
          %v993 = vpop.xlane.xlu0 %992
          %994 = vadd.xlane.f32.xlu0 %v973
          %v995 = vpop.xlane.xlu0 %994
          %996 = vadd.xlane.f32.xlu0 %v974
          %v997 = vpop.xlane.xlu0 %996
          %998 = vadd.xlane.f32.xlu0 %v975
          %v999 = vpop.xlane.xlu0 %998
          %1000 = vadd.xlane.f32.xlu0 %v976
          %v1001 = vpop.xlane.xlu0 %1000
          %1002 = vadd.xlane.f32.xlu0 %v977
          %v1003 = vpop.xlane.xlu0 %1002
          %1004 = vadd.xlane.f32.xlu0 %v978
          %v1005 = vpop.xlane.xlu0 %1004
          %1006 = vadd.xlane.f32.xlu0 %v979
          %v1007 = vpop.xlane.xlu0 %1006
          %1008 = vadd.xlane.f32.xlu0 %v980
          %v1009 = vpop.xlane.xlu0 %1008
          %1010 = vadd.xlane.f32.xlu0 %v981
          %v1011 = vpop.xlane.xlu0 %1010
          %1012 = vadd.xlane.f32.xlu0 %v982
          %v1013 = vpop.xlane.xlu0 %1012
          %1014 = vadd.xlane.f32.xlu0 %v983
          %v1015 = vpop.xlane.xlu0 %1014
          %1016 = vadd.xlane.f32.xlu0 %v984
          %v1017 = vpop.xlane.xlu0 %1016
          %1018 = vadd.xlane.f32.xlu0 %v985
          %v1019 = vpop.xlane.xlu0 %1018
          %v1020 = vrcp.pop 128.0
          %v1021 = vmul.f32 128.0, %v1020
          %v1022 = vsub.f32 1.0, %v1021
          %v1023 = vmul.f32 %v1020, %v1022
          %v1024 = vadd.f32 %v1020, %v1023
          %vm1025 = vweird.f32 %v1020
          %v1026 = vsel %vm1025, %v1020, %v1024
          %v1027 = vmul.f32 %v989, %v1026
          %v1028 = vmul.f32 %v991, %v1026
          %v1029 = vmul.f32 %v993, %v1026
          %v1030 = vmul.f32 %v995, %v1026
          %v1031 = vmul.f32 %v997, %v1026
          %v1032 = vmul.f32 %v999, %v1026
          %v1033 = vmul.f32 %v1001, %v1026
          %v1034 = vmul.f32 %v1003, %v1026
          %v1035 = vmul.f32 %v1005, %v1026
          %v1036 = vmul.f32 %v1007, %v1026
          %v1037 = vmul.f32 %v1009, %v1026
          %v1038 = vmul.f32 %v1011, %v1026
          %v1039 = vmul.f32 %v1013, %v1026
          %v1040 = vmul.f32 %v1015, %v1026
          %v1041 = vmul.f32 %v1017, %v1026
          %v1042 = vmul.f32 %v1019, %v1026
          %v1043 = vsub.f32 %v970, %v1027
          %v1044 = vsub.f32 %v971, %v1028
          %v1045 = vsub.f32 %v972, %v1029
          %v1046 = vsub.f32 %v973, %v1030
          %v1047 = vsub.f32 %v974, %v1031
          %v1048 = vsub.f32 %v975, %v1032
          %v1049 = vsub.f32 %v976, %v1033
          %v1050 = vsub.f32 %v977, %v1034
          %v1051 = vsub.f32 %v978, %v1035
          %v1052 = vsub.f32 %v979, %v1036
          %v1053 = vsub.f32 %v980, %v1037
          %v1054 = vsub.f32 %v981, %v1038
          %v1055 = vsub.f32 %v982, %v1039
          %v1056 = vsub.f32 %v983, %v1040
          %v1057 = vsub.f32 %v984, %v1041
          %v1058 = vsub.f32 %v985, %v1042
          %v1059 = vmul.f32 %v1043, %v1043
          %v1060 = vmul.f32 %v1044, %v1044
          %v1061 = vmul.f32 %v1045, %v1045
          %v1062 = vmul.f32 %v1046, %v1046
          %v1063 = vmul.f32 %v1047, %v1047
          %v1064 = vmul.f32 %v1048, %v1048
          %v1065 = vmul.f32 %v1049, %v1049
          %v1066 = vmul.f32 %v1050, %v1050
          %v1067 = vmul.f32 %v1051, %v1051
          %v1068 = vmul.f32 %v1052, %v1052
          %v1069 = vmul.f32 %v1053, %v1053
          %v1070 = vmul.f32 %v1054, %v1054
          %v1071 = vmul.f32 %v1055, %v1055
          %v1072 = vmul.f32 %v1056, %v1056
          %v1073 = vmul.f32 %v1057, %v1057
          %v1074 = vmul.f32 %v1058, %v1058
          %1075 = vadd.xlane.f32.xlu0 %v1059
          %v1076 = vpop.xlane.xlu0 %1075
          %1077 = vadd.xlane.f32.xlu0 %v1060
          %v1078 = vpop.xlane.xlu0 %1077
          %1079 = vadd.xlane.f32.xlu0 %v1061
          %v1080 = vpop.xlane.xlu0 %1079
          %1081 = vadd.xlane.f32.xlu0 %v1062
          %v1082 = vpop.xlane.xlu0 %1081
          %1083 = vadd.xlane.f32.xlu0 %v1063
          %v1084 = vpop.xlane.xlu0 %1083
          %1085 = vadd.xlane.f32.xlu0 %v1064
          %v1086 = vpop.xlane.xlu0 %1085
          %1087 = vadd.xlane.f32.xlu0 %v1065
          %v1088 = vpop.xlane.xlu0 %1087
          %1089 = vadd.xlane.f32.xlu0 %v1066
          %v1090 = vpop.xlane.xlu0 %1089
          %1091 = vadd.xlane.f32.xlu0 %v1067
          %v1092 = vpop.xlane.xlu0 %1091
          %1093 = vadd.xlane.f32.xlu0 %v1068
          %v1094 = vpop.xlane.xlu0 %1093
          %1095 = vadd.xlane.f32.xlu0 %v1069
          %v1096 = vpop.xlane.xlu0 %1095
          %1097 = vadd.xlane.f32.xlu0 %v1070
          %v1098 = vpop.xlane.xlu0 %1097
          %1099 = vadd.xlane.f32.xlu0 %v1071
          %v1100 = vpop.xlane.xlu0 %1099
          %1101 = vadd.xlane.f32.xlu0 %v1072
          %v1102 = vpop.xlane.xlu0 %1101
          %1103 = vadd.xlane.f32.xlu0 %v1073
          %v1104 = vpop.xlane.xlu0 %1103
          %1105 = vadd.xlane.f32.xlu0 %v1074
          %v1106 = vpop.xlane.xlu0 %1105
          %v1107 = vmul.f32 %v1076, %v1026
          %v1108 = vmul.f32 %v1078, %v1026
          %v1109 = vmul.f32 %v1080, %v1026
          %v1110 = vmul.f32 %v1082, %v1026
          %v1111 = vmul.f32 %v1084, %v1026
          %v1112 = vmul.f32 %v1086, %v1026
          %v1113 = vmul.f32 %v1088, %v1026
          %v1114 = vmul.f32 %v1090, %v1026
          %v1115 = vmul.f32 %v1092, %v1026
          %v1116 = vmul.f32 %v1094, %v1026
          %v1117 = vmul.f32 %v1096, %v1026
          %v1118 = vmul.f32 %v1098, %v1026
          %v1119 = vmul.f32 %v1100, %v1026
          %v1120 = vmul.f32 %v1102, %v1026
          %v1121 = vmul.f32 %v1104, %v1026
          %v1122 = vmul.f32 %v1106, %v1026
          %v1123 = vadd.f32 %v1107, 1e-05
          %v1124 = vadd.f32 %v1108, 1e-05
          %v1125 = vadd.f32 %v1109, 1e-05
          %v1126 = vadd.f32 %v1110, 1e-05
          %v1127 = vadd.f32 %v1111, 1e-05
          %v1128 = vadd.f32 %v1112, 1e-05
          %v1129 = vadd.f32 %v1113, 1e-05
          %v1130 = vadd.f32 %v1114, 1e-05
          %v1131 = vadd.f32 %v1115, 1e-05
          %v1132 = vadd.f32 %v1116, 1e-05
          %v1133 = vadd.f32 %v1117, 1e-05
          %v1134 = vadd.f32 %v1118, 1e-05
          %v1135 = vadd.f32 %v1119, 1e-05
          %v1136 = vadd.f32 %v1120, 1e-05
          %v1137 = vadd.f32 %v1121, 1e-05
          %v1138 = vadd.f32 %v1122, 1e-05
          %v1139 = vrsqrt.pop %v1123
          %v1140 = vmul.f32 %v1139, %v1123
          %v1141 = vmul.f32 %v1140, %v1139
          %v1142 = vmul.f32 0.5, %v1141
          %v1143 = vsub.f32 1.5, %v1142
          %v1144 = vmul.f32 %v1139, %v1143
          %vm1145 = vweird.f32 %v1123
          %vm1146 = vweird.f32 %v1139
          %vm1147 = vmor %vm1145, %vm1146
          %v1148 = vsel %vm1147, %v1139, %v1144
          %v1149 = vrsqrt.pop %v1124
          %v1150 = vmul.f32 %v1149, %v1124
          %v1151 = vmul.f32 %v1150, %v1149
          %v1152 = vmul.f32 0.5, %v1151
          %v1153 = vsub.f32 1.5, %v1152
          %v1154 = vmul.f32 %v1149, %v1153
          %vm1155 = vweird.f32 %v1124
          %vm1156 = vweird.f32 %v1149
          %vm1157 = vmor %vm1155, %vm1156
          %v1158 = vsel %vm1157, %v1149, %v1154
          %v1159 = vrsqrt.pop %v1125
          %v1160 = vmul.f32 %v1159, %v1125
          %v1161 = vmul.f32 %v1160, %v1159
          %v1162 = vmul.f32 0.5, %v1161
          %v1163 = vsub.f32 1.5, %v1162
          %v1164 = vmul.f32 %v1159, %v1163
          %vm1165 = vweird.f32 %v1125
          %vm1166 = vweird.f32 %v1159
          %vm1167 = vmor %vm1165, %vm1166
          %v1168 = vsel %vm1167, %v1159, %v1164
          %v1169 = vrsqrt.pop %v1126
          %v1170 = vmul.f32 %v1169, %v1126
          %v1171 = vmul.f32 %v1170, %v1169
          %v1172 = vmul.f32 0.5, %v1171
          %v1173 = vsub.f32 1.5, %v1172
          %v1174 = vmul.f32 %v1169, %v1173
          %vm1175 = vweird.f32 %v1126
          %vm1176 = vweird.f32 %v1169
          %vm1177 = vmor %vm1175, %vm1176
          %v1178 = vsel %vm1177, %v1169, %v1174
          %v1179 = vrsqrt.pop %v1127
          %v1180 = vmul.f32 %v1179, %v1127
          %v1181 = vmul.f32 %v1180, %v1179
          %v1182 = vmul.f32 0.5, %v1181
          %v1183 = vsub.f32 1.5, %v1182
          %v1184 = vmul.f32 %v1179, %v1183
          %vm1185 = vweird.f32 %v1127
          %vm1186 = vweird.f32 %v1179
          %vm1187 = vmor %vm1185, %vm1186
          %v1188 = vsel %vm1187, %v1179, %v1184
          %v1189 = vrsqrt.pop %v1128
          %v1190 = vmul.f32 %v1189, %v1128
          %v1191 = vmul.f32 %v1190, %v1189
          %v1192 = vmul.f32 0.5, %v1191
          %v1193 = vsub.f32 1.5, %v1192
          %v1194 = vmul.f32 %v1189, %v1193
          %vm1195 = vweird.f32 %v1128
          %vm1196 = vweird.f32 %v1189
          %vm1197 = vmor %vm1195, %vm1196
          %v1198 = vsel %vm1197, %v1189, %v1194
          %v1199 = vrsqrt.pop %v1129
          %v1200 = vmul.f32 %v1199, %v1129
          %v1201 = vmul.f32 %v1200, %v1199
          %v1202 = vmul.f32 0.5, %v1201
          %v1203 = vsub.f32 1.5, %v1202
          %v1204 = vmul.f32 %v1199, %v1203
          %vm1205 = vweird.f32 %v1129
          %vm1206 = vweird.f32 %v1199
          %vm1207 = vmor %vm1205, %vm1206
          %v1208 = vsel %vm1207, %v1199, %v1204
          %v1209 = vrsqrt.pop %v1130
          %v1210 = vmul.f32 %v1209, %v1130
          %v1211 = vmul.f32 %v1210, %v1209
          %v1212 = vmul.f32 0.5, %v1211
          %v1213 = vsub.f32 1.5, %v1212
          %v1214 = vmul.f32 %v1209, %v1213
          %vm1215 = vweird.f32 %v1130
          %vm1216 = vweird.f32 %v1209
          %vm1217 = vmor %vm1215, %vm1216
          %v1218 = vsel %vm1217, %v1209, %v1214
          %v1219 = vrsqrt.pop %v1131
          %v1220 = vmul.f32 %v1219, %v1131
          %v1221 = vmul.f32 %v1220, %v1219
          %v1222 = vmul.f32 0.5, %v1221
          %v1223 = vsub.f32 1.5, %v1222
          %v1224 = vmul.f32 %v1219, %v1223
          %vm1225 = vweird.f32 %v1131
          %vm1226 = vweird.f32 %v1219
          %vm1227 = vmor %vm1225, %vm1226
          %v1228 = vsel %vm1227, %v1219, %v1224
          %v1229 = vrsqrt.pop %v1132
          %v1230 = vmul.f32 %v1229, %v1132
          %v1231 = vmul.f32 %v1230, %v1229
          %v1232 = vmul.f32 0.5, %v1231
          %v1233 = vsub.f32 1.5, %v1232
          %v1234 = vmul.f32 %v1229, %v1233
          %vm1235 = vweird.f32 %v1132
          %vm1236 = vweird.f32 %v1229
          %vm1237 = vmor %vm1235, %vm1236
          %v1238 = vsel %vm1237, %v1229, %v1234
          %v1239 = vrsqrt.pop %v1133
          %v1240 = vmul.f32 %v1239, %v1133
          %v1241 = vmul.f32 %v1240, %v1239
          %v1242 = vmul.f32 0.5, %v1241
          %v1243 = vsub.f32 1.5, %v1242
          %v1244 = vmul.f32 %v1239, %v1243
          %vm1245 = vweird.f32 %v1133
          %vm1246 = vweird.f32 %v1239
          %vm1247 = vmor %vm1245, %vm1246
          %v1248 = vsel %vm1247, %v1239, %v1244
          %v1249 = vrsqrt.pop %v1134
          %v1250 = vmul.f32 %v1249, %v1134
          %v1251 = vmul.f32 %v1250, %v1249
          %v1252 = vmul.f32 0.5, %v1251
          %v1253 = vsub.f32 1.5, %v1252
          %v1254 = vmul.f32 %v1249, %v1253
          %vm1255 = vweird.f32 %v1134
          %vm1256 = vweird.f32 %v1249
          %vm1257 = vmor %vm1255, %vm1256
          %v1258 = vsel %vm1257, %v1249, %v1254
          %v1259 = vrsqrt.pop %v1135
          %v1260 = vmul.f32 %v1259, %v1135
          %v1261 = vmul.f32 %v1260, %v1259
          %v1262 = vmul.f32 0.5, %v1261
          %v1263 = vsub.f32 1.5, %v1262
          %v1264 = vmul.f32 %v1259, %v1263
          %vm1265 = vweird.f32 %v1135
          %vm1266 = vweird.f32 %v1259
          %vm1267 = vmor %vm1265, %vm1266
          %v1268 = vsel %vm1267, %v1259, %v1264
          %v1269 = vrsqrt.pop %v1136
          %v1270 = vmul.f32 %v1269, %v1136
          %v1271 = vmul.f32 %v1270, %v1269
          %v1272 = vmul.f32 0.5, %v1271
          %v1273 = vsub.f32 1.5, %v1272
          %v1274 = vmul.f32 %v1269, %v1273
          %vm1275 = vweird.f32 %v1136
          %vm1276 = vweird.f32 %v1269
          %vm1277 = vmor %vm1275, %vm1276
          %v1278 = vsel %vm1277, %v1269, %v1274
          %v1279 = vrsqrt.pop %v1137
          %v1280 = vmul.f32 %v1279, %v1137
          %v1281 = vmul.f32 %v1280, %v1279
          %v1282 = vmul.f32 0.5, %v1281
          %v1283 = vsub.f32 1.5, %v1282
          %v1284 = vmul.f32 %v1279, %v1283
          %vm1285 = vweird.f32 %v1137
          %vm1286 = vweird.f32 %v1279
          %vm1287 = vmor %vm1285, %vm1286
          %v1288 = vsel %vm1287, %v1279, %v1284
          %v1289 = vrsqrt.pop %v1138
          %v1290 = vmul.f32 %v1289, %v1138
          %v1291 = vmul.f32 %v1290, %v1289
          %v1292 = vmul.f32 0.5, %v1291
          %v1293 = vsub.f32 1.5, %v1292
          %v1294 = vmul.f32 %v1289, %v1293
          %vm1295 = vweird.f32 %v1138
          %vm1296 = vweird.f32 %v1289
          %vm1297 = vmor %vm1295, %vm1296
          %v1298 = vsel %vm1297, %v1289, %v1294
          %v1299 = vmul.f32 %v1043, %v1148
          %v1300 = vmul.f32 %v1044, %v1158
          %v1301 = vmul.f32 %v1045, %v1168
          %v1302 = vmul.f32 %v1046, %v1178
          %v1303 = vmul.f32 %v1047, %v1188
          %v1304 = vmul.f32 %v1048, %v1198
          %v1305 = vmul.f32 %v1049, %v1208
          %v1306 = vmul.f32 %v1050, %v1218
          %v1307 = vmul.f32 %v1051, %v1228
          %v1308 = vmul.f32 %v1052, %v1238
          %v1309 = vmul.f32 %v1053, %v1248
          %v1310 = vmul.f32 %v1054, %v1258
          %v1311 = vmul.f32 %v1055, %v1268
          %v1312 = vmul.f32 %v1056, %v1278
          %v1313 = vmul.f32 %v1057, %v1288
          %v1314 = vmul.f32 %v1058, %v1298
          %v1316 = vperm.slane %v986, 0
          %v1318 = vmul.f32 %v1299, %v1316
          %v1319 = vmul.f32 %v1300, %v1316
          %v1320 = vmul.f32 %v1301, %v1316
          %v1321 = vmul.f32 %v1302, %v1316
          %v1322 = vmul.f32 %v1303, %v1316
          %v1323 = vmul.f32 %v1304, %v1316
          %v1324 = vmul.f32 %v1305, %v1316
          %v1325 = vmul.f32 %v1306, %v1316
          %v1326 = vmul.f32 %v1307, %v1316
          %v1327 = vmul.f32 %v1308, %v1316
          %v1328 = vmul.f32 %v1309, %v1316
          %v1329 = vmul.f32 %v1310, %v1316
          %v1330 = vmul.f32 %v1311, %v1316
          %v1331 = vmul.f32 %v1312, %v1316
          %v1332 = vmul.f32 %v1313, %v1316
          %v1333 = vmul.f32 %v1314, %v1316
          %v1335 = vperm.slane %v987, 0
          %v1337 = vadd.f32 %v1318, %v1335
          %v1338 = vadd.f32 %v1319, %v1335
          %v1339 = vadd.f32 %v1320, %v1335
          %v1340 = vadd.f32 %v1321, %v1335
          %v1341 = vadd.f32 %v1322, %v1335
          %v1342 = vadd.f32 %v1323, %v1335
          %v1343 = vadd.f32 %v1324, %v1335
          %v1344 = vadd.f32 %v1325, %v1335
          %v1345 = vadd.f32 %v1326, %v1335
          %v1346 = vadd.f32 %v1327, %v1335
          %v1347 = vadd.f32 %v1328, %v1335
          %v1348 = vadd.f32 %v1329, %v1335
          %v1349 = vadd.f32 %v1330, %v1335
          %v1350 = vadd.f32 %v1331, %v1335
          %v1351 = vadd.f32 %v1332, %v1335
          %v1352 = vadd.f32 %v1333, %v1335
          %1353 = vst [vmem:[%s951] sm:$0xff] %v1337
          %1354 = vst [vmem:[%s951 + $0x8] sm:$0xff] %v1338
          %1355 = vst [vmem:[%s951 + $0x10] sm:$0xff] %v1339
          %1356 = vst [vmem:[%s951 + $0x18] sm:$0xff] %v1340
          %1357 = vst [vmem:[%s951 + $0x20] sm:$0xff] %v1341
          %1358 = vst [vmem:[%s951 + $0x28] sm:$0xff] %v1342
          %1359 = vst [vmem:[%s951 + $0x30] sm:$0xff] %v1343
          %1360 = vst [vmem:[%s951 + $0x38] sm:$0xff] %v1344
          %1361 = vst [vmem:[%s951 + $0x40] sm:$0xff] %v1345
          %1362 = vst [vmem:[%s951 + $0x48] sm:$0xff] %v1346
          %1363 = vst [vmem:[%s951 + $0x50] sm:$0xff] %v1347
          %1364 = vst [vmem:[%s951 + $0x58] sm:$0xff] %v1348
          %1365 = vst [vmem:[%s951 + $0x60] sm:$0xff] %v1349
          %1366 = vst [vmem:[%s951 + $0x68] sm:$0xff] %v1350
          %1367 = vst [vmem:[%s951 + $0x70] sm:$0xff] %v1351
          %1368 = vst [vmem:[%s951 + $0x78] sm:$0xff] %v1352
        $region136: #{tpu_custom_call.1} parent=83 // pred_fallthru
          _
        %v1369 = vld [vmem:[%s951] sm:$0xff]
        %v1370 = vld [vmem:[%s951 + $0x8] sm:$0xff]
        %v1371 = vld [vmem:[%s951 + $0x10] sm:$0xff]
        %v1372 = vld [vmem:[%s951 + $0x18] sm:$0xff]
        %v1373 = vld [vmem:[%s951 + $0x20] sm:$0xff]
        %v1374 = vld [vmem:[%s951 + $0x28] sm:$0xff]
        %v1375 = vld [vmem:[%s951 + $0x30] sm:$0xff]
        %v1376 = vld [vmem:[%s951 + $0x38] sm:$0xff]
        %v1377 = vld [vmem:[%s951 + $0x40] sm:$0xff]
        %v1378 = vld [vmem:[%s951 + $0x48] sm:$0xff]
        %v1379 = vld [vmem:[%s951 + $0x50] sm:$0xff]
        %v1380 = vld [vmem:[%s951 + $0x58] sm:$0xff]
        %v1381 = vld [vmem:[%s951 + $0x60] sm:$0xff]
        %v1382 = vld [vmem:[%s951 + $0x68] sm:$0xff]
        %v1383 = vld [vmem:[%s951 + $0x70] sm:$0xff]
        %v1384 = vld [vmem:[%s951 + $0x78] sm:$0xff]
        %v1385 = vpack.c.bf16 %v1370, %v1369
        %v1386 = vpack.c.bf16 %v1372, %v1371
        %v1387 = vpack.c.bf16 %v1374, %v1373
        %v1388 = vpack.c.bf16 %v1376, %v1375
        %v1389 = vpack.c.bf16 %v1378, %v1377
        %v1390 = vpack.c.bf16 %v1380, %v1379
        %v1391 = vpack.c.bf16 %v1382, %v1381
        %v1392 = vpack.c.bf16 %v1384, %v1383
        %v1393 = vld [vmem:[%s781] sm:$0xff]
        %v1394 = vld [vmem:[%s781 + $0x8] sm:$0xf]
        %v1395 = vld [vmem:[%s781 + $0xc] sm:$0xff]
        %v1396 = vld [vmem:[%s781 + $0x14] sm:$0xf]
        %v1397 = vld [vmem:[%s781 + $0x18] sm:$0xff]
        %v1398 = vld [vmem:[%s781 + $0x20] sm:$0xf]
        %v1399 = vld [vmem:[%s781 + $0x24] sm:$0xff]
        %v1400 = vld [vmem:[%s781 + $0x2c] sm:$0xf]
        %v1401 = vld [vmem:[%s781 + $0x30] sm:$0xff]
        %v1402 = vld [vmem:[%s781 + $0x38] sm:$0xf]
        %v1403 = vld [vmem:[%s781 + $0x3c] sm:$0xff]
        %v1404 = vld [vmem:[%s781 + $0x44] sm:$0xf]
        %v1405 = vld [vmem:[%s781 + $0x48] sm:$0xff]
        %v1406 = vld [vmem:[%s781 + $0x50] sm:$0xf]
        %v1407 = vld [vmem:[%s781 + $0x54] sm:$0xff]
        %v1408 = vld [vmem:[%s781 + $0x5c] sm:$0xf]
        %v1409 = vld [vmem:[%s781 + $0x60] sm:$0xff]
        %v1410 = vld [vmem:[%s781 + $0x68] sm:$0xf]
        %v1411 = vld [vmem:[%s781 + $0x6c] sm:$0xff]
        %v1412 = vld [vmem:[%s781 + $0x74] sm:$0xf]
        %v1413 = vld [vmem:[%s781 + $0x78] sm:$0xff]
        %v1414 = vld [vmem:[%s781 + $0x80] sm:$0xf]
        %v1415 = vld [vmem:[%s781 + $0x84] sm:$0xff]
        %v1416 = vld [vmem:[%s781 + $0x8c] sm:$0xf]
        %v1417 = vld [vmem:[%s781 + $0x90] sm:$0xff]
        %v1418 = vld [vmem:[%s781 + $0x98] sm:$0xf]
        %v1419 = vld [vmem:[%s781 + $0x9c] sm:$0xff]
        %v1420 = vld [vmem:[%s781 + $0xa4] sm:$0xf]
        %v1421 = vld [vmem:[%s781 + $0xa8] sm:$0xff]
        %v1422 = vld [vmem:[%s781 + $0xb0] sm:$0xf]
        %v1423 = vld [vmem:[%s781 + $0xb4] sm:$0xff]
        %v1424 = vld [vmem:[%s781 + $0xbc] sm:$0xf]
        %v1425 = vld [vmem:[%s791] sm:$0x7]
        %v1427 = vperm.slane %v1425, 0
        %v1428 = vperm.slane %v1425, 1
        %v1429 = vperm.slane %v1425, 2
        %v1465 = vunpack.c.l.b16 %v1393
        %v1466 = vunpack.c.h.b16 %v1393
        %v1467 = vunpack.c.l.b16 %v1394
        %v1468 = vunpack.c.l.b16 %v1395
        %v1469 = vunpack.c.h.b16 %v1395
        %v1470 = vunpack.c.l.b16 %v1396
        %v1471 = vunpack.c.l.b16 %v1397
        %v1472 = vunpack.c.h.b16 %v1397
        %v1473 = vunpack.c.l.b16 %v1398
        %v1474 = vunpack.c.l.b16 %v1399
        %v1475 = vunpack.c.h.b16 %v1399
        %v1476 = vunpack.c.l.b16 %v1400
        %v1477 = vunpack.c.l.b16 %v1401
        %v1478 = vunpack.c.h.b16 %v1401
        %v1479 = vunpack.c.l.b16 %v1402
        %v1480 = vunpack.c.l.b16 %v1403
        %v1481 = vunpack.c.h.b16 %v1403
        %v1482 = vunpack.c.l.b16 %v1404
        %v1483 = vunpack.c.l.b16 %v1405
        %v1484 = vunpack.c.h.b16 %v1405
        %v1485 = vunpack.c.l.b16 %v1406
        %v1486 = vunpack.c.l.b16 %v1407
        %v1487 = vunpack.c.h.b16 %v1407
        %v1488 = vunpack.c.l.b16 %v1408
        %v1489 = vunpack.c.l.b16 %v1409
        %v1490 = vunpack.c.h.b16 %v1409
        %v1491 = vunpack.c.l.b16 %v1410
        %v1492 = vunpack.c.l.b16 %v1411
        %v1493 = vunpack.c.h.b16 %v1411
        %v1494 = vunpack.c.l.b16 %v1412
        %v1495 = vunpack.c.l.b16 %v1413
        %v1496 = vunpack.c.h.b16 %v1413
        %v1497 = vunpack.c.l.b16 %v1414
        %v1498 = vunpack.c.l.b16 %v1415
        %v1499 = vunpack.c.h.b16 %v1415
        %v1500 = vunpack.c.l.b16 %v1416
        %v1501 = vunpack.c.l.b16 %v1417
        %v1502 = vunpack.c.h.b16 %v1417
        %v1503 = vunpack.c.l.b16 %v1418
        %v1504 = vunpack.c.l.b16 %v1419
        %v1505 = vunpack.c.h.b16 %v1419
        %v1506 = vunpack.c.l.b16 %v1420
        %v1507 = vunpack.c.l.b16 %v1421
        %v1508 = vunpack.c.h.b16 %v1421
        %v1509 = vunpack.c.l.b16 %v1422
        %v1510 = vunpack.c.l.b16 %v1423
        %v1511 = vunpack.c.h.b16 %v1423
        %v1512 = vunpack.c.l.b16 %v1424
        %v1513 = vpack.c.b16 %v1468, %v1465
        %v1514 = vpack.c.b16 %v1469, %v1466
        %v1515 = vpack.c.b16 %v1470, %v1467
        %v1516 = vpack.c.b16 %v1474, %v1471
        %v1517 = vpack.c.b16 %v1475, %v1472
        %v1518 = vpack.c.b16 %v1476, %v1473
        %v1519 = vpack.c.b16 %v1480, %v1477
        %v1520 = vpack.c.b16 %v1481, %v1478
        %v1521 = vpack.c.b16 %v1482, %v1479
        %v1522 = vpack.c.b16 %v1486, %v1483
        %v1523 = vpack.c.b16 %v1487, %v1484
        %v1524 = vpack.c.b16 %v1488, %v1485
        %v1525 = vpack.c.b16 %v1492, %v1489
        %v1526 = vpack.c.b16 %v1493, %v1490
        %v1527 = vpack.c.b16 %v1494, %v1491
        %v1528 = vpack.c.b16 %v1498, %v1495
        %v1529 = vpack.c.b16 %v1499, %v1496
        %v1530 = vpack.c.b16 %v1500, %v1497
        %v1531 = vpack.c.b16 %v1504, %v1501
        %v1532 = vpack.c.b16 %v1505, %v1502
        %v1533 = vpack.c.b16 %v1506, %v1503
        %v1534 = vpack.c.b16 %v1510, %v1507
        %v1535 = vpack.c.b16 %v1511, %v1508
        %v1536 = vpack.c.b16 %v1512, %v1509
        %1561 = vmatpush.bf16.msra.mxu0 %v1534
        %1562 = vmatpush.bf16.msra.mxu0 %v1531
        %1563 = vmatpush.bf16.msra.mxu0 %v1528
        %1564 = vmatpush.bf16.msra.mxu0 %v1525
        %1565 = vmatpush.bf16.msra.mxu0 %v1522
        %1566 = vmatpush.bf16.msra.mxu0 %v1519
        %1567 = vmatpush.bf16.msra.mxu0 %v1516
        %1568 = vmatpush.bf16.msra.mxu0 %v1513
        %1569 = vmatmul.bf16.gmra.mxu0 %v1385
        %v1570 = vpop.f32.mrf.mxu0
        %v1571 = vadd.f32 %v1427, %v1570
        %v1572 = vpop.f32.mrf.mxu0
        %v1573 = vadd.f32 %v1427, %v1572
        %1574 = vmatmul.bf16.gmra.mxu0 %v1386
        %v1575 = vpop.f32.mrf.mxu0
        %v1576 = vadd.f32 %v1427, %v1575
        %v1577 = vpop.f32.mrf.mxu0
        %v1578 = vadd.f32 %v1427, %v1577
        %1579 = vmatmul.bf16.gmra.mxu0 %v1387
        %v1580 = vpop.f32.mrf.mxu0
        %v1581 = vadd.f32 %v1427, %v1580
        %v1582 = vpop.f32.mrf.mxu0
        %v1583 = vadd.f32 %v1427, %v1582
        %1584 = vmatmul.bf16.gmra.mxu0 %v1388
        %v1585 = vpop.f32.mrf.mxu0
        %v1586 = vadd.f32 %v1427, %v1585
        %v1587 = vpop.f32.mrf.mxu0
        %v1588 = vadd.f32 %v1427, %v1587
        %1589 = vmatmul.bf16.gmra.mxu0 %v1389
        %v1590 = vpop.f32.mrf.mxu0
        %v1591 = vadd.f32 %v1427, %v1590
        %v1592 = vpop.f32.mrf.mxu0
        %v1593 = vadd.f32 %v1427, %v1592
        %1594 = vmatmul.bf16.gmra.mxu0 %v1390
        %v1595 = vpop.f32.mrf.mxu0
        %v1596 = vadd.f32 %v1427, %v1595
        %v1597 = vpop.f32.mrf.mxu0
        %v1598 = vadd.f32 %v1427, %v1597
        %1599 = vmatmul.bf16.gmra.mxu0 %v1391
        %v1600 = vpop.f32.mrf.mxu0
        %v1601 = vadd.f32 %v1427, %v1600
        %v1602 = vpop.f32.mrf.mxu0
        %v1603 = vadd.f32 %v1427, %v1602
        %1604 = vmatmul.bf16.gmra.mxu0 %v1392
        %v1605 = vpop.f32.mrf.mxu0
        %v1606 = vadd.f32 %v1427, %v1605
        %v1607 = vpop.f32.mrf.mxu0
        %v1608 = vadd.f32 %v1427, %v1607
        %1609 = vdwg.mxu0
        %1610 = vmatpush.bf16.msra.mxu0 %v1535
        %1611 = vmatpush.bf16.msra.mxu0 %v1532
        %1612 = vmatpush.bf16.msra.mxu0 %v1529
        %1613 = vmatpush.bf16.msra.mxu0 %v1526
        %1614 = vmatpush.bf16.msra.mxu0 %v1523
        %1615 = vmatpush.bf16.msra.mxu0 %v1520
        %1616 = vmatpush.bf16.msra.mxu0 %v1517
        %1617 = vmatpush.bf16.msra.mxu0 %v1514
        %1618 = vmatmul.bf16.gmra.mxu0 %v1385
        %v1619 = vpop.f32.mrf.mxu0
        %v1620 = vadd.f32 %v1428, %v1619
        %v1621 = vpop.f32.mrf.mxu0
        %v1622 = vadd.f32 %v1428, %v1621
        %1623 = vmatmul.bf16.gmra.mxu0 %v1386
        %v1624 = vpop.f32.mrf.mxu0
        %v1625 = vadd.f32 %v1428, %v1624
        %v1626 = vpop.f32.mrf.mxu0
        %v1627 = vadd.f32 %v1428, %v1626
        %1628 = vmatmul.bf16.gmra.mxu0 %v1387
        %v1629 = vpop.f32.mrf.mxu0
        %v1630 = vadd.f32 %v1428, %v1629
        %v1631 = vpop.f32.mrf.mxu0
        %v1632 = vadd.f32 %v1428, %v1631
        %1633 = vmatmul.bf16.gmra.mxu0 %v1388
        %v1634 = vpop.f32.mrf.mxu0
        %v1635 = vadd.f32 %v1428, %v1634
        %v1636 = vpop.f32.mrf.mxu0
        %v1637 = vadd.f32 %v1428, %v1636
        %1638 = vmatmul.bf16.gmra.mxu0 %v1389
        %v1639 = vpop.f32.mrf.mxu0
        %v1640 = vadd.f32 %v1428, %v1639
        %v1641 = vpop.f32.mrf.mxu0
        %v1642 = vadd.f32 %v1428, %v1641
        %1643 = vmatmul.bf16.gmra.mxu0 %v1390
        %v1644 = vpop.f32.mrf.mxu0
        %v1645 = vadd.f32 %v1428, %v1644
        %v1646 = vpop.f32.mrf.mxu0
        %v1647 = vadd.f32 %v1428, %v1646
        %1648 = vmatmul.bf16.gmra.mxu0 %v1391
        %v1649 = vpop.f32.mrf.mxu0
        %v1650 = vadd.f32 %v1428, %v1649
        %v1651 = vpop.f32.mrf.mxu0
        %v1652 = vadd.f32 %v1428, %v1651
        %1653 = vmatmul.bf16.gmra.mxu0 %v1392
        %v1654 = vpop.f32.mrf.mxu0
        %v1655 = vadd.f32 %v1428, %v1654
        %v1656 = vpop.f32.mrf.mxu0
        %v1657 = vadd.f32 %v1428, %v1656
        %1658 = vdwg.mxu0
        %1659 = vmatpush.bf16.msra.mxu0 %v1536
        %1660 = vmatpush.bf16.msra.mxu0 %v1533
        %1661 = vmatpush.bf16.msra.mxu0 %v1530
        %1662 = vmatpush.bf16.msra.mxu0 %v1527
        %1663 = vmatpush.bf16.msra.mxu0 %v1524
        %1664 = vmatpush.bf16.msra.mxu0 %v1521
        %1665 = vmatpush.bf16.msra.mxu0 %v1518
        %1666 = vmatpush.bf16.msra.mxu0 %v1515
        %1667 = vmatmul.bf16.gmra.mxu0 %v1385
        %v1668 = vpop.f32.mrf.mxu0
        %v1669 = vadd.f32 %v1429, %v1668
        %v1670 = vpop.f32.mrf.mxu0
        %v1671 = vadd.f32 %v1429, %v1670
        %1672 = vmatmul.bf16.gmra.mxu0 %v1386
        %v1673 = vpop.f32.mrf.mxu0
        %v1674 = vadd.f32 %v1429, %v1673
        %v1675 = vpop.f32.mrf.mxu0
        %v1676 = vadd.f32 %v1429, %v1675
        %1677 = vmatmul.bf16.gmra.mxu0 %v1387
        %v1678 = vpop.f32.mrf.mxu0
        %v1679 = vadd.f32 %v1429, %v1678
        %v1680 = vpop.f32.mrf.mxu0
        %v1681 = vadd.f32 %v1429, %v1680
        %1682 = vmatmul.bf16.gmra.mxu0 %v1388
        %v1683 = vpop.f32.mrf.mxu0
        %v1684 = vadd.f32 %v1429, %v1683
        %v1685 = vpop.f32.mrf.mxu0
        %v1686 = vadd.f32 %v1429, %v1685
        %1687 = vmatmul.bf16.gmra.mxu0 %v1389
        %v1688 = vpop.f32.mrf.mxu0
        %v1689 = vadd.f32 %v1429, %v1688
        %v1690 = vpop.f32.mrf.mxu0
        %v1691 = vadd.f32 %v1429, %v1690
        %1692 = vmatmul.bf16.gmra.mxu0 %v1390
        %v1693 = vpop.f32.mrf.mxu0
        %v1694 = vadd.f32 %v1429, %v1693
        %v1695 = vpop.f32.mrf.mxu0
        %v1696 = vadd.f32 %v1429, %v1695
        %1697 = vmatmul.bf16.gmra.mxu0 %v1391
        %v1698 = vpop.f32.mrf.mxu0
        %v1699 = vadd.f32 %v1429, %v1698
        %v1700 = vpop.f32.mrf.mxu0
        %v1701 = vadd.f32 %v1429, %v1700
        %1702 = vmatmul.bf16.gmra.mxu0 %v1392
        %v1703 = vpop.f32.mrf.mxu0
        %v1704 = vadd.f32 %v1429, %v1703
        %v1705 = vpop.f32.mrf.mxu0
        %v1706 = vadd.f32 %v1429, %v1705
        %1707 = vdwg.mxu0
        %v1708 = vld [vmem:[%s761] sm:$0x1]
        %v1710 = vperm.slane %v1708, 0
        %v1712 = vpack.c.bf16 %v1573, %v1571
        %v1713 = vpack.c.bf16 %v1578, %v1576
        %v1714 = vpack.c.bf16 %v1583, %v1581
        %v1715 = vpack.c.bf16 %v1588, %v1586
        %v1716 = vpack.c.bf16 %v1593, %v1591
        %v1717 = vpack.c.bf16 %v1598, %v1596
        %v1718 = vpack.c.bf16 %v1603, %v1601
        %v1719 = vpack.c.bf16 %v1608, %v1606
        %v1720 = vpack.c.bf16 %v1622, %v1620
        %v1721 = vpack.c.bf16 %v1627, %v1625
        %v1722 = vpack.c.bf16 %v1632, %v1630
        %v1723 = vpack.c.bf16 %v1637, %v1635
        %v1724 = vpack.c.bf16 %v1642, %v1640
        %v1725 = vpack.c.bf16 %v1647, %v1645
        %v1726 = vpack.c.bf16 %v1652, %v1650
        %v1727 = vpack.c.bf16 %v1657, %v1655
        %v1728 = vpack.c.bf16 %v1671, %v1669
        %v1729 = vpack.c.bf16 %v1676, %v1674
        %v1730 = vpack.c.bf16 %v1681, %v1679
        %v1731 = vpack.c.bf16 %v1686, %v1684
        %v1732 = vpack.c.bf16 %v1691, %v1689
        %v1733 = vpack.c.bf16 %v1696, %v1694
        %v1734 = vpack.c.bf16 %v1701, %v1699
        %v1735 = vpack.c.bf16 %v1706, %v1704
        %vm1736 = vcmask 523264
        %v1738 = vsel %vm1736, %v1712, 0
        %v1741 = vsel %vm1736, %v1713, 0
        %v1744 = vsel %vm1736, %v1714, 0
        %v1747 = vsel %vm1736, %v1715, 0
        %v1750 = vsel %vm1736, %v1716, 0
        %v1753 = vsel %vm1736, %v1717, 0
        %v1756 = vsel %vm1736, %v1718, 0
        %v1759 = vsel %vm1736, %v1719, 0
        %v1762 = vsel %vm1736, %v1720, 0
        %v1765 = vsel %vm1736, %v1721, 0
        %v1768 = vsel %vm1736, %v1722, 0
        %v1771 = vsel %vm1736, %v1723, 0
        %v1774 = vsel %vm1736, %v1724, 0
        %v1777 = vsel %vm1736, %v1725, 0
        %v1780 = vsel %vm1736, %v1726, 0
        %v1783 = vsel %vm1736, %v1727, 0
        %1785 = vmatpush.bf16.xpose.msra.mxu0 %v1783
        %1786 = vmatpush.bf16.xpose.msra.mxu0 %v1780
        %1787 = vmatpush.bf16.xpose.msra.mxu0 %v1777
        %1788 = vmatpush.bf16.xpose.msra.mxu0 %v1774
        %1789 = vmatpush.bf16.xpose.msra.mxu0 %v1771
        %1790 = vmatpush.bf16.xpose.msra.mxu0 %v1768
        %1791 = vmatpush.bf16.xpose.msra.mxu0 %v1765
        %1792 = vmatpush.bf16.xpose.msra.mxu0 %v1762
        %1793 = vmatmul.bf16.gmra.mxu0 %v1738
        %v1794 = vpop.f32.mrf.mxu0
        %v1795 = vadd.f32 %v1710, %v1794
        %v1796 = vpop.f32.mrf.mxu0
        %v1797 = vadd.f32 %v1710, %v1796
        %1798 = vmatmul.bf16.gmra.mxu0 %v1741
        %v1799 = vpop.f32.mrf.mxu0
        %v1800 = vadd.f32 %v1710, %v1799
        %v1801 = vpop.f32.mrf.mxu0
        %v1802 = vadd.f32 %v1710, %v1801
        %1803 = vmatmul.bf16.gmra.mxu0 %v1744
        %v1804 = vpop.f32.mrf.mxu0
        %v1805 = vadd.f32 %v1710, %v1804
        %v1806 = vpop.f32.mrf.mxu0
        %v1807 = vadd.f32 %v1710, %v1806
        %1808 = vmatmul.bf16.gmra.mxu0 %v1747
        %v1809 = vpop.f32.mrf.mxu0
        %v1810 = vadd.f32 %v1710, %v1809
        %v1811 = vpop.f32.mrf.mxu0
        %v1812 = vadd.f32 %v1710, %v1811
        %1813 = vmatmul.bf16.gmra.mxu0 %v1750
        %v1814 = vpop.f32.mrf.mxu0
        %v1815 = vadd.f32 %v1710, %v1814
        %v1816 = vpop.f32.mrf.mxu0
        %v1817 = vadd.f32 %v1710, %v1816
        %1818 = vmatmul.bf16.gmra.mxu0 %v1753
        %v1819 = vpop.f32.mrf.mxu0
        %v1820 = vadd.f32 %v1710, %v1819
        %v1821 = vpop.f32.mrf.mxu0
        %v1822 = vadd.f32 %v1710, %v1821
        %1823 = vmatmul.bf16.gmra.mxu0 %v1756
        %v1824 = vpop.f32.mrf.mxu0
        %v1825 = vadd.f32 %v1710, %v1824
        %v1826 = vpop.f32.mrf.mxu0
        %v1827 = vadd.f32 %v1710, %v1826
        %1828 = vmatmul.bf16.gmra.mxu0 %v1759
        %v1829 = vpop.f32.mrf.mxu0
        %v1830 = vadd.f32 %v1710, %v1829
        %v1831 = vpop.f32.mrf.mxu0
        %v1832 = vadd.f32 %v1710, %v1831
        %1833 = vdwg.mxu0
        %1834 = vmax.xlane.f32.xlu0 %v1795
        %v1835 = vpop.xlane.xlu0 %1834
        %1836 = vmax.xlane.f32.xlu0 %v1797
        %v1837 = vpop.xlane.xlu0 %1836
        %1838 = vmax.xlane.f32.xlu0 %v1800
        %v1839 = vpop.xlane.xlu0 %1838
        %1840 = vmax.xlane.f32.xlu0 %v1802
        %v1841 = vpop.xlane.xlu0 %1840
        %1842 = vmax.xlane.f32.xlu0 %v1805
        %v1843 = vpop.xlane.xlu0 %1842
        %1844 = vmax.xlane.f32.xlu0 %v1807
        %v1845 = vpop.xlane.xlu0 %1844
        %1846 = vmax.xlane.f32.xlu0 %v1810
        %v1847 = vpop.xlane.xlu0 %1846
        %1848 = vmax.xlane.f32.xlu0 %v1812
        %v1849 = vpop.xlane.xlu0 %1848
        %1850 = vmax.xlane.f32.xlu0 %v1815
        %v1851 = vpop.xlane.xlu0 %1850
        %1852 = vmax.xlane.f32.xlu0 %v1817
        %v1853 = vpop.xlane.xlu0 %1852
        %1854 = vmax.xlane.f32.xlu0 %v1820
        %v1855 = vpop.xlane.xlu0 %1854
        %1856 = vmax.xlane.f32.xlu0 %v1822
        %v1857 = vpop.xlane.xlu0 %1856
        %1858 = vmax.xlane.f32.xlu0 %v1825
        %v1859 = vpop.xlane.xlu0 %1858
        %1860 = vmax.xlane.f32.xlu0 %v1827
        %v1861 = vpop.xlane.xlu0 %1860
        %1862 = vmax.xlane.f32.xlu0 %v1830
        %v1863 = vpop.xlane.xlu0 %1862
        %1864 = vmax.xlane.f32.xlu0 %v1832
        %v1865 = vpop.xlane.xlu0 %1864
        %v1866 = vsub.f32 %v1795, %v1835
        %v1867 = vsub.f32 %v1797, %v1837
        %v1868 = vsub.f32 %v1800, %v1839
        %v1869 = vsub.f32 %v1802, %v1841
        %v1870 = vsub.f32 %v1805, %v1843
        %v1871 = vsub.f32 %v1807, %v1845
        %v1872 = vsub.f32 %v1810, %v1847
        %v1873 = vsub.f32 %v1812, %v1849
        %v1874 = vsub.f32 %v1815, %v1851
        %v1875 = vsub.f32 %v1817, %v1853
        %v1876 = vsub.f32 %v1820, %v1855
        %v1877 = vsub.f32 %v1822, %v1857
        %v1878 = vsub.f32 %v1825, %v1859
        %v1879 = vsub.f32 %v1827, %v1861
        %v1880 = vsub.f32 %v1830, %v1863
        %v1881 = vsub.f32 %v1832, %v1865
        %v1882 = vmul.f32 %v1866, 1.442695
        %v1883 = vpow.pop %v1882
        %v1884 = vmul.f32 %v1867, 1.442695
        %v1885 = vpow.pop %v1884
        %v1886 = vmul.f32 %v1868, 1.442695
        %v1887 = vpow.pop %v1886
        %v1888 = vmul.f32 %v1869, 1.442695
        %v1889 = vpow.pop %v1888
        %v1890 = vmul.f32 %v1870, 1.442695
        %v1891 = vpow.pop %v1890
        %v1892 = vmul.f32 %v1871, 1.442695
        %v1893 = vpow.pop %v1892
        %v1894 = vmul.f32 %v1872, 1.442695
        %v1895 = vpow.pop %v1894
        %v1896 = vmul.f32 %v1873, 1.442695
        %v1897 = vpow.pop %v1896
        %v1898 = vmul.f32 %v1874, 1.442695
        %v1899 = vpow.pop %v1898
        %v1900 = vmul.f32 %v1875, 1.442695
        %v1901 = vpow.pop %v1900
        %v1902 = vmul.f32 %v1876, 1.442695
        %v1903 = vpow.pop %v1902
        %v1904 = vmul.f32 %v1877, 1.442695
        %v1905 = vpow.pop %v1904
        %v1906 = vmul.f32 %v1878, 1.442695
        %v1907 = vpow.pop %v1906
        %v1908 = vmul.f32 %v1879, 1.442695
        %v1909 = vpow.pop %v1908
        %v1910 = vmul.f32 %v1880, 1.442695
        %v1911 = vpow.pop %v1910
        %v1912 = vmul.f32 %v1881, 1.442695
        %v1913 = vpow.pop %v1912
        %1914 = vadd.xlane.f32.xlu0 %v1883
        %v1915 = vpop.xlane.xlu0 %1914
        %1916 = vadd.xlane.f32.xlu0 %v1885
        %v1917 = vpop.xlane.xlu0 %1916
        %1918 = vadd.xlane.f32.xlu0 %v1887
        %v1919 = vpop.xlane.xlu0 %1918
        %1920 = vadd.xlane.f32.xlu0 %v1889
        %v1921 = vpop.xlane.xlu0 %1920
        %1922 = vadd.xlane.f32.xlu0 %v1891
        %v1923 = vpop.xlane.xlu0 %1922
        %1924 = vadd.xlane.f32.xlu0 %v1893
        %v1925 = vpop.xlane.xlu0 %1924
        %1926 = vadd.xlane.f32.xlu0 %v1895
        %v1927 = vpop.xlane.xlu0 %1926
        %1928 = vadd.xlane.f32.xlu0 %v1897
        %v1929 = vpop.xlane.xlu0 %1928
        %1930 = vadd.xlane.f32.xlu0 %v1899
        %v1931 = vpop.xlane.xlu0 %1930
        %1932 = vadd.xlane.f32.xlu0 %v1901
        %v1933 = vpop.xlane.xlu0 %1932
        %1934 = vadd.xlane.f32.xlu0 %v1903
        %v1935 = vpop.xlane.xlu0 %1934
        %1936 = vadd.xlane.f32.xlu0 %v1905
        %v1937 = vpop.xlane.xlu0 %1936
        %1938 = vadd.xlane.f32.xlu0 %v1907
        %v1939 = vpop.xlane.xlu0 %1938
        %1940 = vadd.xlane.f32.xlu0 %v1909
        %v1941 = vpop.xlane.xlu0 %1940
        %1942 = vadd.xlane.f32.xlu0 %v1911
        %v1943 = vpop.xlane.xlu0 %1942
        %1944 = vadd.xlane.f32.xlu0 %v1913
        %v1945 = vpop.xlane.xlu0 %1944
        %v1946 = vrcp.pop %v1915
        %v1947 = vrcp.pop %v1917
        %v1948 = vrcp.pop %v1919
        %v1949 = vrcp.pop %v1921
        %v1950 = vrcp.pop %v1923
        %v1951 = vrcp.pop %v1925
        %v1952 = vrcp.pop %v1927
        %v1953 = vrcp.pop %v1929
        %v1954 = vrcp.pop %v1931
        %v1955 = vrcp.pop %v1933
        %v1956 = vrcp.pop %v1935
        %v1957 = vrcp.pop %v1937
        %v1958 = vrcp.pop %v1939
        %v1959 = vrcp.pop %v1941
        %v1960 = vrcp.pop %v1943
        %v1961 = vrcp.pop %v1945
        %v1962 = vpack.c.bf16 %v1885, %v1883
        %v1963 = vpack.c.bf16 %v1889, %v1887
        %v1964 = vpack.c.bf16 %v1893, %v1891
        %v1965 = vpack.c.bf16 %v1897, %v1895
        %v1966 = vpack.c.bf16 %v1901, %v1899
        %v1967 = vpack.c.bf16 %v1905, %v1903
        %v1968 = vpack.c.bf16 %v1909, %v1907
        %v1969 = vpack.c.bf16 %v1913, %v1911
        %1970 = vmatpush.bf16.msra.mxu0 %v1735
        %1971 = vmatpush.bf16.msra.mxu0 %v1734
        %1972 = vmatpush.bf16.msra.mxu0 %v1733
        %1973 = vmatpush.bf16.msra.mxu0 %v1732
        %1974 = vmatpush.bf16.msra.mxu0 %v1731
        %1975 = vmatpush.bf16.msra.mxu0 %v1730
        %1976 = vmatpush.bf16.msra.mxu0 %v1729
        %1977 = vmatpush.bf16.msra.mxu0 %v1728
        %1978 = vmatmul.bf16.gmra.mxu0 %v1962
        %v1979 = vpop.f32.mrf.mxu0
        %v1980 = vadd.f32 0.0, %v1979
        %v1981 = vpop.f32.mrf.mxu0
        %v1982 = vadd.f32 0.0, %v1981
        %1983 = vmatmul.bf16.gmra.mxu0 %v1963
        %v1984 = vpop.f32.mrf.mxu0
        %v1985 = vadd.f32 0.0, %v1984
        %v1986 = vpop.f32.mrf.mxu0
        %v1987 = vadd.f32 0.0, %v1986
        %1988 = vmatmul.bf16.gmra.mxu0 %v1964
        %v1989 = vpop.f32.mrf.mxu0
        %v1990 = vadd.f32 0.0, %v1989
        %v1991 = vpop.f32.mrf.mxu0
        %v1992 = vadd.f32 0.0, %v1991
        %1993 = vmatmul.bf16.gmra.mxu0 %v1965
        %v1994 = vpop.f32.mrf.mxu0
        %v1995 = vadd.f32 0.0, %v1994
        %v1996 = vpop.f32.mrf.mxu0
        %v1997 = vadd.f32 0.0, %v1996
        %1998 = vmatmul.bf16.gmra.mxu0 %v1966
        %v1999 = vpop.f32.mrf.mxu0
        %v2000 = vadd.f32 0.0, %v1999
        %v2001 = vpop.f32.mrf.mxu0
        %v2002 = vadd.f32 0.0, %v2001
        %2003 = vmatmul.bf16.gmra.mxu0 %v1967
        %v2004 = vpop.f32.mrf.mxu0
        %v2005 = vadd.f32 0.0, %v2004
        %v2006 = vpop.f32.mrf.mxu0
        %v2007 = vadd.f32 0.0, %v2006
        %2008 = vmatmul.bf16.gmra.mxu0 %v1968
        %v2009 = vpop.f32.mrf.mxu0
        %v2010 = vadd.f32 0.0, %v2009
        %v2011 = vpop.f32.mrf.mxu0
        %v2012 = vadd.f32 0.0, %v2011
        %2013 = vmatmul.bf16.gmra.mxu0 %v1969
        %v2014 = vpop.f32.mrf.mxu0
        %v2015 = vadd.f32 0.0, %v2014
        %v2016 = vpop.f32.mrf.mxu0
        %v2017 = vadd.f32 0.0, %v2016
        %2018 = vdwg.mxu0
        %v2019 = vmul.f32 %v1980, %v1946
        %v2020 = vmul.f32 %v1982, %v1947
        %v2021 = vmul.f32 %v1985, %v1948
        %v2022 = vmul.f32 %v1987, %v1949
        %v2023 = vmul.f32 %v1990, %v1950
        %v2024 = vmul.f32 %v1992, %v1951
        %v2025 = vmul.f32 %v1995, %v1952
        %v2026 = vmul.f32 %v1997, %v1953
        %v2027 = vmul.f32 %v2000, %v1954
        %v2028 = vmul.f32 %v2002, %v1955
        %v2029 = vmul.f32 %v2005, %v1956
        %v2030 = vmul.f32 %v2007, %v1957
        %v2031 = vmul.f32 %v2010, %v1958
        %v2032 = vmul.f32 %v2012, %v1959
        %v2033 = vmul.f32 %v2015, %v1960
        %v2034 = vmul.f32 %v2017, %v1961
        %v2035 = vpack.c.bf16 %v2020, %v2019
        %v2036 = vpack.c.bf16 %v2022, %v2021
        %v2037 = vpack.c.bf16 %v2024, %v2023
        %v2038 = vpack.c.bf16 %v2026, %v2025
        %v2039 = vpack.c.bf16 %v2028, %v2027
        %v2040 = vpack.c.bf16 %v2030, %v2029
        %v2041 = vpack.c.bf16 %v2032, %v2031
        %v2042 = vpack.c.bf16 %v2034, %v2033
        %v2043 = vld [vmem:[%s801] sm:$0xf]
        %v2044 = vld [vmem:[%s801 + $0x4] sm:$0xf]
        %v2045 = vld [vmem:[%s801 + $0x8] sm:$0xf]
        %v2046 = vld [vmem:[%s801 + $0xc] sm:$0xf]
        %v2047 = vld [vmem:[%s801 + $0x10] sm:$0xf]
        %v2048 = vld [vmem:[%s801 + $0x14] sm:$0xf]
        %v2049 = vld [vmem:[%s801 + $0x18] sm:$0xf]
        %v2050 = vld [vmem:[%s801 + $0x1c] sm:$0xf]
        %2059 = vrot.lane.b32.xlu0 %v1712, 64
        %v2060 = vpop.permute.xlu0 %2059
        %2061 = vrot.lane.b32.xlu0 %v1713, 64
        %v2062 = vpop.permute.xlu0 %2061
        %2063 = vrot.lane.b32.xlu0 %v1714, 64
        %v2064 = vpop.permute.xlu0 %2063
        %2065 = vrot.lane.b32.xlu0 %v1715, 64
        %v2066 = vpop.permute.xlu0 %2065
        %2067 = vrot.lane.b32.xlu0 %v1716, 64
        %v2068 = vpop.permute.xlu0 %2067
        %2069 = vrot.lane.b32.xlu0 %v1717, 64
        %v2070 = vpop.permute.xlu0 %2069
        %2071 = vrot.lane.b32.xlu0 %v1718, 64
        %v2072 = vpop.permute.xlu0 %2071
        %2073 = vrot.lane.b32.xlu0 %v1719, 64
        %v2074 = vpop.permute.xlu0 %2073
        %2083 = vrot.lane.b32.xlu0 %v1720, 64
        %v2084 = vpop.permute.xlu0 %2083
        %2085 = vrot.lane.b32.xlu0 %v1721, 64
        %v2086 = vpop.permute.xlu0 %2085
        %2087 = vrot.lane.b32.xlu0 %v1722, 64
        %v2088 = vpop.permute.xlu0 %2087
        %2089 = vrot.lane.b32.xlu0 %v1723, 64
        %v2090 = vpop.permute.xlu0 %2089
        %2091 = vrot.lane.b32.xlu0 %v1724, 64
        %v2092 = vpop.permute.xlu0 %2091
        %2093 = vrot.lane.b32.xlu0 %v1725, 64
        %v2094 = vpop.permute.xlu0 %2093
        %2095 = vrot.lane.b32.xlu0 %v1726, 64
        %v2096 = vpop.permute.xlu0 %2095
        %2097 = vrot.lane.b32.xlu0 %v1727, 64
        %v2098 = vpop.permute.xlu0 %2097
        %v2100 = vsel %vm1736, %v2060, 0
        %v2103 = vsel %vm1736, %v2062, 0
        %v2106 = vsel %vm1736, %v2064, 0
        %v2109 = vsel %vm1736, %v2066, 0
        %v2112 = vsel %vm1736, %v2068, 0
        %v2115 = vsel %vm1736, %v2070, 0
        %v2118 = vsel %vm1736, %v2072, 0
        %v2121 = vsel %vm1736, %v2074, 0
        %v2124 = vsel %vm1736, %v2084, 0
        %v2127 = vsel %vm1736, %v2086, 0
        %v2130 = vsel %vm1736, %v2088, 0
        %v2133 = vsel %vm1736, %v2090, 0
        %v2136 = vsel %vm1736, %v2092, 0
        %v2139 = vsel %vm1736, %v2094, 0
        %v2142 = vsel %vm1736, %v2096, 0
        %v2145 = vsel %vm1736, %v2098, 0
        %2147 = vmatpush.bf16.xpose.msra.mxu0 %v2145
        %2148 = vmatpush.bf16.xpose.msra.mxu0 %v2142
        %2149 = vmatpush.bf16.xpose.msra.mxu0 %v2139
        %2150 = vmatpush.bf16.xpose.msra.mxu0 %v2136
        %2151 = vmatpush.bf16.xpose.msra.mxu0 %v2133
        %2152 = vmatpush.bf16.xpose.msra.mxu0 %v2130
        %2153 = vmatpush.bf16.xpose.msra.mxu0 %v2127
        %2154 = vmatpush.bf16.xpose.msra.mxu0 %v2124
        %2155 = vmatmul.bf16.gmra.mxu0 %v2100
        %v2156 = vpop.f32.mrf.mxu0
        %v2157 = vadd.f32 %v1710, %v2156
        %v2158 = vpop.f32.mrf.mxu0
        %v2159 = vadd.f32 %v1710, %v2158
        %2160 = vmatmul.bf16.gmra.mxu0 %v2103
        %v2161 = vpop.f32.mrf.mxu0
        %v2162 = vadd.f32 %v1710, %v2161
        %v2163 = vpop.f32.mrf.mxu0
        %v2164 = vadd.f32 %v1710, %v2163
        %2165 = vmatmul.bf16.gmra.mxu0 %v2106
        %v2166 = vpop.f32.mrf.mxu0
        %v2167 = vadd.f32 %v1710, %v2166
        %v2168 = vpop.f32.mrf.mxu0
        %v2169 = vadd.f32 %v1710, %v2168
        %2170 = vmatmul.bf16.gmra.mxu0 %v2109
        %v2171 = vpop.f32.mrf.mxu0
        %v2172 = vadd.f32 %v1710, %v2171
        %v2173 = vpop.f32.mrf.mxu0
        %v2174 = vadd.f32 %v1710, %v2173
        %2175 = vmatmul.bf16.gmra.mxu0 %v2112
        %v2176 = vpop.f32.mrf.mxu0
        %v2177 = vadd.f32 %v1710, %v2176
        %v2178 = vpop.f32.mrf.mxu0
        %v2179 = vadd.f32 %v1710, %v2178
        %2180 = vmatmul.bf16.gmra.mxu0 %v2115
        %v2181 = vpop.f32.mrf.mxu0
        %v2182 = vadd.f32 %v1710, %v2181
        %v2183 = vpop.f32.mrf.mxu0
        %v2184 = vadd.f32 %v1710, %v2183
        %2185 = vmatmul.bf16.gmra.mxu0 %v2118
        %v2186 = vpop.f32.mrf.mxu0
        %v2187 = vadd.f32 %v1710, %v2186
        %v2188 = vpop.f32.mrf.mxu0
        %v2189 = vadd.f32 %v1710, %v2188
        %2190 = vmatmul.bf16.gmra.mxu0 %v2121
        %v2191 = vpop.f32.mrf.mxu0
        %v2192 = vadd.f32 %v1710, %v2191
        %v2193 = vpop.f32.mrf.mxu0
        %v2194 = vadd.f32 %v1710, %v2193
        %2195 = vdwg.mxu0
        %2196 = vmax.xlane.f32.xlu0 %v2157
        %v2197 = vpop.xlane.xlu0 %2196
        %2198 = vmax.xlane.f32.xlu0 %v2159
        %v2199 = vpop.xlane.xlu0 %2198
        %2200 = vmax.xlane.f32.xlu0 %v2162
        %v2201 = vpop.xlane.xlu0 %2200
        %2202 = vmax.xlane.f32.xlu0 %v2164
        %v2203 = vpop.xlane.xlu0 %2202
        %2204 = vmax.xlane.f32.xlu0 %v2167
        %v2205 = vpop.xlane.xlu0 %2204
        %2206 = vmax.xlane.f32.xlu0 %v2169
        %v2207 = vpop.xlane.xlu0 %2206
        %2208 = vmax.xlane.f32.xlu0 %v2172
        %v2209 = vpop.xlane.xlu0 %2208
        %2210 = vmax.xlane.f32.xlu0 %v2174
        %v2211 = vpop.xlane.xlu0 %2210
        %2212 = vmax.xlane.f32.xlu0 %v2177
        %v2213 = vpop.xlane.xlu0 %2212
        %2214 = vmax.xlane.f32.xlu0 %v2179
        %v2215 = vpop.xlane.xlu0 %2214
        %2216 = vmax.xlane.f32.xlu0 %v2182
        %v2217 = vpop.xlane.xlu0 %2216
        %2218 = vmax.xlane.f32.xlu0 %v2184
        %v2219 = vpop.xlane.xlu0 %2218
        %2220 = vmax.xlane.f32.xlu0 %v2187
        %v2221 = vpop.xlane.xlu0 %2220
        %2222 = vmax.xlane.f32.xlu0 %v2189
        %v2223 = vpop.xlane.xlu0 %2222
        %2224 = vmax.xlane.f32.xlu0 %v2192
        %v2225 = vpop.xlane.xlu0 %2224
        %2226 = vmax.xlane.f32.xlu0 %v2194
        %v2227 = vpop.xlane.xlu0 %2226
        %v2228 = vsub.f32 %v2157, %v2197
        %v2229 = vsub.f32 %v2159, %v2199
        %v2230 = vsub.f32 %v2162, %v2201
        %v2231 = vsub.f32 %v2164, %v2203
        %v2232 = vsub.f32 %v2167, %v2205
        %v2233 = vsub.f32 %v2169, %v2207
        %v2234 = vsub.f32 %v2172, %v2209
        %v2235 = vsub.f32 %v2174, %v2211
        %v2236 = vsub.f32 %v2177, %v2213
        %v2237 = vsub.f32 %v2179, %v2215
        %v2238 = vsub.f32 %v2182, %v2217
        %v2239 = vsub.f32 %v2184, %v2219
        %v2240 = vsub.f32 %v2187, %v2221
        %v2241 = vsub.f32 %v2189, %v2223
        %v2242 = vsub.f32 %v2192, %v2225
        %v2243 = vsub.f32 %v2194, %v2227
        %v2244 = vmul.f32 %v2228, 1.442695
        %v2245 = vpow.pop %v2244
        %v2246 = vmul.f32 %v2229, 1.442695
        %v2247 = vpow.pop %v2246
        %v2248 = vmul.f32 %v2230, 1.442695
        %v2249 = vpow.pop %v2248
        %v2250 = vmul.f32 %v2231, 1.442695
        %v2251 = vpow.pop %v2250
        %v2252 = vmul.f32 %v2232, 1.442695
        %v2253 = vpow.pop %v2252
        %v2254 = vmul.f32 %v2233, 1.442695
        %v2255 = vpow.pop %v2254
        %v2256 = vmul.f32 %v2234, 1.442695
        %v2257 = vpow.pop %v2256
        %v2258 = vmul.f32 %v2235, 1.442695
        %v2259 = vpow.pop %v2258
        %v2260 = vmul.f32 %v2236, 1.442695
        %v2261 = vpow.pop %v2260
        %v2262 = vmul.f32 %v2237, 1.442695
        %v2263 = vpow.pop %v2262
        %v2264 = vmul.f32 %v2238, 1.442695
        %v2265 = vpow.pop %v2264
        %v2266 = vmul.f32 %v2239, 1.442695
        %v2267 = vpow.pop %v2266
        %v2268 = vmul.f32 %v2240, 1.442695
        %v2269 = vpow.pop %v2268
        %v2270 = vmul.f32 %v2241, 1.442695
        %v2271 = vpow.pop %v2270
        %v2272 = vmul.f32 %v2242, 1.442695
        %v2273 = vpow.pop %v2272
        %v2274 = vmul.f32 %v2243, 1.442695
        %v2275 = vpow.pop %v2274
        %2276 = vadd.xlane.f32.xlu0 %v2245
        %v2277 = vpop.xlane.xlu0 %2276
        %2278 = vadd.xlane.f32.xlu0 %v2247
        %v2279 = vpop.xlane.xlu0 %2278
        %2280 = vadd.xlane.f32.xlu0 %v2249
        %v2281 = vpop.xlane.xlu0 %2280
        %2282 = vadd.xlane.f32.xlu0 %v2251
        %v2283 = vpop.xlane.xlu0 %2282
        %2284 = vadd.xlane.f32.xlu0 %v2253
        %v2285 = vpop.xlane.xlu0 %2284
        %2286 = vadd.xlane.f32.xlu0 %v2255
        %v2287 = vpop.xlane.xlu0 %2286
        %2288 = vadd.xlane.f32.xlu0 %v2257
        %v2289 = vpop.xlane.xlu0 %2288
        %2290 = vadd.xlane.f32.xlu0 %v2259
        %v2291 = vpop.xlane.xlu0 %2290
        %2292 = vadd.xlane.f32.xlu0 %v2261
        %v2293 = vpop.xlane.xlu0 %2292
        %2294 = vadd.xlane.f32.xlu0 %v2263
        %v2295 = vpop.xlane.xlu0 %2294
        %2296 = vadd.xlane.f32.xlu0 %v2265
        %v2297 = vpop.xlane.xlu0 %2296
        %2298 = vadd.xlane.f32.xlu0 %v2267
        %v2299 = vpop.xlane.xlu0 %2298
        %2300 = vadd.xlane.f32.xlu0 %v2269
        %v2301 = vpop.xlane.xlu0 %2300
        %2302 = vadd.xlane.f32.xlu0 %v2271
        %v2303 = vpop.xlane.xlu0 %2302
        %2304 = vadd.xlane.f32.xlu0 %v2273
        %v2305 = vpop.xlane.xlu0 %2304
        %2306 = vadd.xlane.f32.xlu0 %v2275
        %v2307 = vpop.xlane.xlu0 %2306
        %v2308 = vrcp.pop %v2277
        %v2309 = vrcp.pop %v2279
        %v2310 = vrcp.pop %v2281
        %v2311 = vrcp.pop %v2283
        %v2312 = vrcp.pop %v2285
        %v2313 = vrcp.pop %v2287
        %v2314 = vrcp.pop %v2289
        %v2315 = vrcp.pop %v2291
        %v2316 = vrcp.pop %v2293
        %v2317 = vrcp.pop %v2295
        %v2318 = vrcp.pop %v2297
        %v2319 = vrcp.pop %v2299
        %v2320 = vrcp.pop %v2301
        %v2321 = vrcp.pop %v2303
        %v2322 = vrcp.pop %v2305
        %v2323 = vrcp.pop %v2307
        %v2324 = vpack.c.bf16 %v2247, %v2245
        %v2325 = vpack.c.bf16 %v2251, %v2249
        %v2326 = vpack.c.bf16 %v2255, %v2253
        %v2327 = vpack.c.bf16 %v2259, %v2257
        %v2328 = vpack.c.bf16 %v2263, %v2261
        %v2329 = vpack.c.bf16 %v2267, %v2265
        %v2330 = vpack.c.bf16 %v2271, %v2269
        %v2331 = vpack.c.bf16 %v2275, %v2273
        %2340 = vrot.lane.b32.xlu0 %v1728, 64
        %v2341 = vpop.permute.xlu0 %2340
        %2342 = vrot.lane.b32.xlu0 %v1729, 64
        %v2343 = vpop.permute.xlu0 %2342
        %2344 = vrot.lane.b32.xlu0 %v1730, 64
        %v2345 = vpop.permute.xlu0 %2344
        %2346 = vrot.lane.b32.xlu0 %v1731, 64
        %v2347 = vpop.permute.xlu0 %2346
        %2348 = vrot.lane.b32.xlu0 %v1732, 64
        %v2349 = vpop.permute.xlu0 %2348
        %2350 = vrot.lane.b32.xlu0 %v1733, 64
        %v2351 = vpop.permute.xlu0 %2350
        %2352 = vrot.lane.b32.xlu0 %v1734, 64
        %v2353 = vpop.permute.xlu0 %2352
        %2354 = vrot.lane.b32.xlu0 %v1735, 64
        %v2355 = vpop.permute.xlu0 %2354
        %2364 = vmatpush.bf16.msra.mxu0 %v2355
        %2365 = vmatpush.bf16.msra.mxu0 %v2353
        %2366 = vmatpush.bf16.msra.mxu0 %v2351
        %2367 = vmatpush.bf16.msra.mxu0 %v2349
        %2368 = vmatpush.bf16.msra.mxu0 %v2347
        %2369 = vmatpush.bf16.msra.mxu0 %v2345
        %2370 = vmatpush.bf16.msra.mxu0 %v2343
        %2371 = vmatpush.bf16.msra.mxu0 %v2341
        %2372 = vmatmul.bf16.gmra.mxu0 %v2324
        %v2373 = vpop.f32.mrf.mxu0
        %v2374 = vadd.f32 0.0, %v2373
        %v2375 = vpop.f32.mrf.mxu0
        %v2376 = vadd.f32 0.0, %v2375
        %2377 = vmatmul.bf16.gmra.mxu0 %v2325
        %v2378 = vpop.f32.mrf.mxu0
        %v2379 = vadd.f32 0.0, %v2378
        %v2380 = vpop.f32.mrf.mxu0
        %v2381 = vadd.f32 0.0, %v2380
        %2382 = vmatmul.bf16.gmra.mxu0 %v2326
        %v2383 = vpop.f32.mrf.mxu0
        %v2384 = vadd.f32 0.0, %v2383
        %v2385 = vpop.f32.mrf.mxu0
        %v2386 = vadd.f32 0.0, %v2385
        %2387 = vmatmul.bf16.gmra.mxu0 %v2327
        %v2388 = vpop.f32.mrf.mxu0
        %v2389 = vadd.f32 0.0, %v2388
        %v2390 = vpop.f32.mrf.mxu0
        %v2391 = vadd.f32 0.0, %v2390
        %2392 = vmatmul.bf16.gmra.mxu0 %v2328
        %v2393 = vpop.f32.mrf.mxu0
        %v2394 = vadd.f32 0.0, %v2393
        %v2395 = vpop.f32.mrf.mxu0
        %v2396 = vadd.f32 0.0, %v2395
        %2397 = vmatmul.bf16.gmra.mxu0 %v2329
        %v2398 = vpop.f32.mrf.mxu0
        %v2399 = vadd.f32 0.0, %v2398
        %v2400 = vpop.f32.mrf.mxu0
        %v2401 = vadd.f32 0.0, %v2400
        %2402 = vmatmul.bf16.gmra.mxu0 %v2330
        %v2403 = vpop.f32.mrf.mxu0
        %v2404 = vadd.f32 0.0, %v2403
        %v2405 = vpop.f32.mrf.mxu0
        %v2406 = vadd.f32 0.0, %v2405
        %2407 = vmatmul.bf16.gmra.mxu0 %v2331
        %v2408 = vpop.f32.mrf.mxu0
        %v2409 = vadd.f32 0.0, %v2408
        %v2410 = vpop.f32.mrf.mxu0
        %v2411 = vadd.f32 0.0, %v2410
        %2412 = vdwg.mxu0
        %v2413 = vmul.f32 %v2374, %v2308
        %v2414 = vmul.f32 %v2376, %v2309
        %v2415 = vmul.f32 %v2379, %v2310
        %v2416 = vmul.f32 %v2381, %v2311
        %v2417 = vmul.f32 %v2384, %v2312
        %v2418 = vmul.f32 %v2386, %v2313
        %v2419 = vmul.f32 %v2389, %v2314
        %v2420 = vmul.f32 %v2391, %v2315
        %v2421 = vmul.f32 %v2394, %v2316
        %v2422 = vmul.f32 %v2396, %v2317
        %v2423 = vmul.f32 %v2399, %v2318
        %v2424 = vmul.f32 %v2401, %v2319
        %v2425 = vmul.f32 %v2404, %v2320
        %v2426 = vmul.f32 %v2406, %v2321
        %v2427 = vmul.f32 %v2409, %v2322
        %v2428 = vmul.f32 %v2411, %v2323
        %v2429 = vpack.c.bf16 %v2414, %v2413
        %v2430 = vpack.c.bf16 %v2416, %v2415
        %v2431 = vpack.c.bf16 %v2418, %v2417
        %v2432 = vpack.c.bf16 %v2420, %v2419
        %v2433 = vpack.c.bf16 %v2422, %v2421
        %v2434 = vpack.c.bf16 %v2424, %v2423
        %v2435 = vpack.c.bf16 %v2426, %v2425
        %v2436 = vpack.c.bf16 %v2428, %v2427
        %v2437 = vld [vmem:[%s801 + $0x20] sm:$0xf]
        %v2438 = vld [vmem:[%s801 + $0x24] sm:$0xf]
        %v2439 = vld [vmem:[%s801 + $0x28] sm:$0xf]
        %v2440 = vld [vmem:[%s801 + $0x2c] sm:$0xf]
        %v2441 = vld [vmem:[%s801 + $0x30] sm:$0xf]
        %v2442 = vld [vmem:[%s801 + $0x34] sm:$0xf]
        %v2443 = vld [vmem:[%s801 + $0x38] sm:$0xf]
        %v2444 = vld [vmem:[%s801 + $0x3c] sm:$0xf]
        %v2453 = vunpack.c.l.b16 %v2437
        %v2454 = vunpack.c.l.b16 %v2438
        %v2455 = vunpack.c.l.b16 %v2439
        %v2456 = vunpack.c.l.b16 %v2440
        %v2457 = vunpack.c.l.b16 %v2441
        %v2458 = vunpack.c.l.b16 %v2442
        %v2459 = vunpack.c.l.b16 %v2443
        %v2460 = vunpack.c.l.b16 %v2444
        %v2461 = vpack.c.b16 %v2454, %v2453
        %v2462 = vpack.c.b16 %v2456, %v2455
        %v2463 = vpack.c.b16 %v2458, %v2457
        %v2464 = vpack.c.b16 %v2460, %v2459
        %v2470 = vsel %vm1736, %v2429, 0
        %v2473 = vsel %vm1736, %v2430, 0
        %v2476 = vsel %vm1736, %v2431, 0
        %v2479 = vsel %vm1736, %v2432, 0
        %v2482 = vsel %vm1736, %v2433, 0
        %v2485 = vsel %vm1736, %v2434, 0
        %v2488 = vsel %vm1736, %v2435, 0
        %v2491 = vsel %vm1736, %v2436, 0
        %2493 = vmatpush.bf16.msra.mxu0 0
        %2494 = vmatpush.bf16.msra.mxu0 0
        %2495 = vmatpush.bf16.msra.mxu0 0
        %2496 = vmatpush.bf16.msra.mxu0 0
        %2497 = vmatpush.bf16.msra.mxu0 %v2464
        %2498 = vmatpush.bf16.msra.mxu0 %v2463
        %2499 = vmatpush.bf16.msra.mxu0 %v2462
        %2500 = vmatpush.bf16.msra.mxu0 %v2461
        %2501 = vmatmul.bf16.gmra.mxu0 %v2470
        %v2502 = vpop.f32.mrf.mxu0
        %v2503 = vadd.f32 0.0, %v2502
        %v2504 = vpop.f32.mrf.mxu0
        %v2505 = vadd.f32 0.0, %v2504
        %2506 = vmatmul.bf16.gmra.mxu0 %v2473
        %v2507 = vpop.f32.mrf.mxu0
        %v2508 = vadd.f32 0.0, %v2507
        %v2509 = vpop.f32.mrf.mxu0
        %v2510 = vadd.f32 0.0, %v2509
        %2511 = vmatmul.bf16.gmra.mxu0 %v2476
        %v2512 = vpop.f32.mrf.mxu0
        %v2513 = vadd.f32 0.0, %v2512
        %v2514 = vpop.f32.mrf.mxu0
        %v2515 = vadd.f32 0.0, %v2514
        %2516 = vmatmul.bf16.gmra.mxu0 %v2479
        %v2517 = vpop.f32.mrf.mxu0
        %v2518 = vadd.f32 0.0, %v2517
        %v2519 = vpop.f32.mrf.mxu0
        %v2520 = vadd.f32 0.0, %v2519
        %2521 = vmatmul.bf16.gmra.mxu0 %v2482
        %v2522 = vpop.f32.mrf.mxu0
        %v2523 = vadd.f32 0.0, %v2522
        %v2524 = vpop.f32.mrf.mxu0
        %v2525 = vadd.f32 0.0, %v2524
        %2526 = vmatmul.bf16.gmra.mxu0 %v2485
        %v2527 = vpop.f32.mrf.mxu0
        %v2528 = vadd.f32 0.0, %v2527
        %v2529 = vpop.f32.mrf.mxu0
        %v2530 = vadd.f32 0.0, %v2529
        %2531 = vmatmul.bf16.gmra.mxu0 %v2488
        %v2532 = vpop.f32.mrf.mxu0
        %v2533 = vadd.f32 0.0, %v2532
        %v2534 = vpop.f32.mrf.mxu0
        %v2535 = vadd.f32 0.0, %v2534
        %2536 = vmatmul.bf16.gmra.mxu0 %v2491
        %v2537 = vpop.f32.mrf.mxu0
        %v2538 = vadd.f32 0.0, %v2537
        %v2539 = vpop.f32.mrf.mxu0
        %v2540 = vadd.f32 0.0, %v2539
        %2541 = vdwg.mxu0
        %v2550 = vunpack.c.l.b16 %v2043
        %v2551 = vunpack.c.l.b16 %v2044
        %v2552 = vunpack.c.l.b16 %v2045
        %v2553 = vunpack.c.l.b16 %v2046
        %v2554 = vunpack.c.l.b16 %v2047
        %v2555 = vunpack.c.l.b16 %v2048
        %v2556 = vunpack.c.l.b16 %v2049
        %v2557 = vunpack.c.l.b16 %v2050
        %v2558 = vpack.c.b16 %v2551, %v2550
        %v2559 = vpack.c.b16 %v2553, %v2552
        %v2560 = vpack.c.b16 %v2555, %v2554
        %v2561 = vpack.c.b16 %v2557, %v2556
        %v2567 = vsel %vm1736, %v2035, 0
        %v2570 = vsel %vm1736, %v2036, 0
        %v2573 = vsel %vm1736, %v2037, 0
        %v2576 = vsel %vm1736, %v2038, 0
        %v2579 = vsel %vm1736, %v2039, 0
        %v2582 = vsel %vm1736, %v2040, 0
        %v2585 = vsel %vm1736, %v2041, 0
        %v2588 = vsel %vm1736, %v2042, 0
        %2590 = vmatpush.bf16.msra.mxu0 0
        %2591 = vmatpush.bf16.msra.mxu0 0
        %2592 = vmatpush.bf16.msra.mxu0 0
        %2593 = vmatpush.bf16.msra.mxu0 0
        %2594 = vmatpush.bf16.msra.mxu0 %v2561
        %2595 = vmatpush.bf16.msra.mxu0 %v2560
        %2596 = vmatpush.bf16.msra.mxu0 %v2559
        %2597 = vmatpush.bf16.msra.mxu0 %v2558
        %2598 = vmatmul.bf16.gmra.mxu0 %v2567
        %v2599 = vpop.f32.mrf.mxu0
        %v2600 = vadd.f32 %v2503, %v2599
        %v2601 = vpop.f32.mrf.mxu0
        %v2602 = vadd.f32 %v2505, %v2601
        %2603 = vmatmul.bf16.gmra.mxu0 %v2570
        %v2604 = vpop.f32.mrf.mxu0
        %v2605 = vadd.f32 %v2508, %v2604
        %v2606 = vpop.f32.mrf.mxu0
        %v2607 = vadd.f32 %v2510, %v2606
        %2608 = vmatmul.bf16.gmra.mxu0 %v2573
        %v2609 = vpop.f32.mrf.mxu0
        %v2610 = vadd.f32 %v2513, %v2609
        %v2611 = vpop.f32.mrf.mxu0
        %v2612 = vadd.f32 %v2515, %v2611
        %2613 = vmatmul.bf16.gmra.mxu0 %v2576
        %v2614 = vpop.f32.mrf.mxu0
        %v2615 = vadd.f32 %v2518, %v2614
        %v2616 = vpop.f32.mrf.mxu0
        %v2617 = vadd.f32 %v2520, %v2616
        %2618 = vmatmul.bf16.gmra.mxu0 %v2579
        %v2619 = vpop.f32.mrf.mxu0
        %v2620 = vadd.f32 %v2523, %v2619
        %v2621 = vpop.f32.mrf.mxu0
        %v2622 = vadd.f32 %v2525, %v2621
        %2623 = vmatmul.bf16.gmra.mxu0 %v2582
        %v2624 = vpop.f32.mrf.mxu0
        %v2625 = vadd.f32 %v2528, %v2624
        %v2626 = vpop.f32.mrf.mxu0
        %v2627 = vadd.f32 %v2530, %v2626
        %2628 = vmatmul.bf16.gmra.mxu0 %v2585
        %v2629 = vpop.f32.mrf.mxu0
        %v2630 = vadd.f32 %v2533, %v2629
        %v2631 = vpop.f32.mrf.mxu0
        %v2632 = vadd.f32 %v2535, %v2631
        %2633 = vmatmul.bf16.gmra.mxu0 %v2588
        %v2634 = vpop.f32.mrf.mxu0
        %v2635 = vadd.f32 %v2538, %v2634
        %v2636 = vpop.f32.mrf.mxu0
        %v2637 = vadd.f32 %v2540, %v2636
        %2638 = vdwg.mxu0
        %v2639 = vld [vmem:[%s954] sm:$0x1]
        %v2641 = vperm.slane %v2639, 0
        %v2643 = vadd.f32 %v2600, %v2641
        %v2644 = vadd.f32 %v2602, %v2641
        %v2645 = vadd.f32 %v2605, %v2641
        %v2646 = vadd.f32 %v2607, %v2641
        %v2647 = vadd.f32 %v2610, %v2641
        %v2648 = vadd.f32 %v2612, %v2641
        %v2649 = vadd.f32 %v2615, %v2641
        %v2650 = vadd.f32 %v2617, %v2641
        %v2651 = vadd.f32 %v2620, %v2641
        %v2652 = vadd.f32 %v2622, %v2641
        %v2653 = vadd.f32 %v2625, %v2641
        %v2654 = vadd.f32 %v2627, %v2641
        %v2655 = vadd.f32 %v2630, %v2641
        %v2656 = vadd.f32 %v2632, %v2641
        %v2657 = vadd.f32 %v2635, %v2641
        %v2658 = vadd.f32 %v2637, %v2641
        %v2659 = vadd.f32 %v1369, %v2643
        %v2660 = vadd.f32 %v1370, %v2644
        %v2661 = vadd.f32 %v1371, %v2645
        %v2662 = vadd.f32 %v1372, %v2646
        %v2663 = vadd.f32 %v1373, %v2647
        %v2664 = vadd.f32 %v1374, %v2648
        %v2665 = vadd.f32 %v1375, %v2649
        %v2666 = vadd.f32 %v1376, %v2650
        %v2667 = vadd.f32 %v1377, %v2651
        %v2668 = vadd.f32 %v1378, %v2652
        %v2669 = vadd.f32 %v1379, %v2653
        %v2670 = vadd.f32 %v1380, %v2654
        %v2671 = vadd.f32 %v1381, %v2655
        %v2672 = vadd.f32 %v1382, %v2656
        %v2673 = vadd.f32 %v1383, %v2657
        %v2674 = vadd.f32 %v1384, %v2658
        %v2675 = vld [vmem:[%s810] sm:$0x1]
        %v2676 = vld [vmem:[%s819] sm:$0x1]
        %2677 = vadd.xlane.f32.xlu0 %v2659
        %v2678 = vpop.xlane.xlu0 %2677
        %2679 = vadd.xlane.f32.xlu0 %v2660
        %v2680 = vpop.xlane.xlu0 %2679
        %2681 = vadd.xlane.f32.xlu0 %v2661
        %v2682 = vpop.xlane.xlu0 %2681
        %2683 = vadd.xlane.f32.xlu0 %v2662
        %v2684 = vpop.xlane.xlu0 %2683
        %2685 = vadd.xlane.f32.xlu0 %v2663
        %v2686 = vpop.xlane.xlu0 %2685
        %2687 = vadd.xlane.f32.xlu0 %v2664
        %v2688 = vpop.xlane.xlu0 %2687
        %2689 = vadd.xlane.f32.xlu0 %v2665
        %v2690 = vpop.xlane.xlu0 %2689
        %2691 = vadd.xlane.f32.xlu0 %v2666
        %v2692 = vpop.xlane.xlu0 %2691
        %2693 = vadd.xlane.f32.xlu0 %v2667
        %v2694 = vpop.xlane.xlu0 %2693
        %2695 = vadd.xlane.f32.xlu0 %v2668
        %v2696 = vpop.xlane.xlu0 %2695
        %2697 = vadd.xlane.f32.xlu0 %v2669
        %v2698 = vpop.xlane.xlu0 %2697
        %2699 = vadd.xlane.f32.xlu0 %v2670
        %v2700 = vpop.xlane.xlu0 %2699
        %2701 = vadd.xlane.f32.xlu0 %v2671
        %v2702 = vpop.xlane.xlu0 %2701
        %2703 = vadd.xlane.f32.xlu0 %v2672
        %v2704 = vpop.xlane.xlu0 %2703
        %2705 = vadd.xlane.f32.xlu0 %v2673
        %v2706 = vpop.xlane.xlu0 %2705
        %2707 = vadd.xlane.f32.xlu0 %v2674
        %v2708 = vpop.xlane.xlu0 %2707
        %v2709 = vrcp.pop 128.0
        %v2710 = vmul.f32 128.0, %v2709
        %v2711 = vsub.f32 1.0, %v2710
        %v2712 = vmul.f32 %v2709, %v2711
        %v2713 = vadd.f32 %v2709, %v2712
        %vm2714 = vweird.f32 %v2709
        %v2715 = vsel %vm2714, %v2709, %v2713
        %v2716 = vmul.f32 %v2678, %v2715
        %v2717 = vmul.f32 %v2680, %v2715
        %v2718 = vmul.f32 %v2682, %v2715
        %v2719 = vmul.f32 %v2684, %v2715
        %v2720 = vmul.f32 %v2686, %v2715
        %v2721 = vmul.f32 %v2688, %v2715
        %v2722 = vmul.f32 %v2690, %v2715
        %v2723 = vmul.f32 %v2692, %v2715
        %v2724 = vmul.f32 %v2694, %v2715
        %v2725 = vmul.f32 %v2696, %v2715
        %v2726 = vmul.f32 %v2698, %v2715
        %v2727 = vmul.f32 %v2700, %v2715
        %v2728 = vmul.f32 %v2702, %v2715
        %v2729 = vmul.f32 %v2704, %v2715
        %v2730 = vmul.f32 %v2706, %v2715
        %v2731 = vmul.f32 %v2708, %v2715
        %v2732 = vsub.f32 %v2659, %v2716
        %v2733 = vsub.f32 %v2660, %v2717
        %v2734 = vsub.f32 %v2661, %v2718
        %v2735 = vsub.f32 %v2662, %v2719
        %v2736 = vsub.f32 %v2663, %v2720
        %v2737 = vsub.f32 %v2664, %v2721
        %v2738 = vsub.f32 %v2665, %v2722
        %v2739 = vsub.f32 %v2666, %v2723
        %v2740 = vsub.f32 %v2667, %v2724
        %v2741 = vsub.f32 %v2668, %v2725
        %v2742 = vsub.f32 %v2669, %v2726
        %v2743 = vsub.f32 %v2670, %v2727
        %v2744 = vsub.f32 %v2671, %v2728
        %v2745 = vsub.f32 %v2672, %v2729
        %v2746 = vsub.f32 %v2673, %v2730
        %v2747 = vsub.f32 %v2674, %v2731
        %v2748 = vmul.f32 %v2732, %v2732
        %v2749 = vmul.f32 %v2733, %v2733
        %v2750 = vmul.f32 %v2734, %v2734
        %v2751 = vmul.f32 %v2735, %v2735
        %v2752 = vmul.f32 %v2736, %v2736
        %v2753 = vmul.f32 %v2737, %v2737
        %v2754 = vmul.f32 %v2738, %v2738
        %v2755 = vmul.f32 %v2739, %v2739
        %v2756 = vmul.f32 %v2740, %v2740
        %v2757 = vmul.f32 %v2741, %v2741
        %v2758 = vmul.f32 %v2742, %v2742
        %v2759 = vmul.f32 %v2743, %v2743
        %v2760 = vmul.f32 %v2744, %v2744
        %v2761 = vmul.f32 %v2745, %v2745
        %v2762 = vmul.f32 %v2746, %v2746
        %v2763 = vmul.f32 %v2747, %v2747
        %2764 = vadd.xlane.f32.xlu0 %v2748
        %v2765 = vpop.xlane.xlu0 %2764
        %2766 = vadd.xlane.f32.xlu0 %v2749
        %v2767 = vpop.xlane.xlu0 %2766
        %2768 = vadd.xlane.f32.xlu0 %v2750
        %v2769 = vpop.xlane.xlu0 %2768
        %2770 = vadd.xlane.f32.xlu0 %v2751
        %v2771 = vpop.xlane.xlu0 %2770
        %2772 = vadd.xlane.f32.xlu0 %v2752
        %v2773 = vpop.xlane.xlu0 %2772
        %2774 = vadd.xlane.f32.xlu0 %v2753
        %v2775 = vpop.xlane.xlu0 %2774
        %2776 = vadd.xlane.f32.xlu0 %v2754
        %v2777 = vpop.xlane.xlu0 %2776
        %2778 = vadd.xlane.f32.xlu0 %v2755
        %v2779 = vpop.xlane.xlu0 %2778
        %2780 = vadd.xlane.f32.xlu0 %v2756
        %v2781 = vpop.xlane.xlu0 %2780
        %2782 = vadd.xlane.f32.xlu0 %v2757
        %v2783 = vpop.xlane.xlu0 %2782
        %2784 = vadd.xlane.f32.xlu0 %v2758
        %v2785 = vpop.xlane.xlu0 %2784
        %2786 = vadd.xlane.f32.xlu0 %v2759
        %v2787 = vpop.xlane.xlu0 %2786
        %2788 = vadd.xlane.f32.xlu0 %v2760
        %v2789 = vpop.xlane.xlu0 %2788
        %2790 = vadd.xlane.f32.xlu0 %v2761
        %v2791 = vpop.xlane.xlu0 %2790
        %2792 = vadd.xlane.f32.xlu0 %v2762
        %v2793 = vpop.xlane.xlu0 %2792
        %2794 = vadd.xlane.f32.xlu0 %v2763
        %v2795 = vpop.xlane.xlu0 %2794
        %v2796 = vmul.f32 %v2765, %v2715
        %v2797 = vmul.f32 %v2767, %v2715
        %v2798 = vmul.f32 %v2769, %v2715
        %v2799 = vmul.f32 %v2771, %v2715
        %v2800 = vmul.f32 %v2773, %v2715
        %v2801 = vmul.f32 %v2775, %v2715
        %v2802 = vmul.f32 %v2777, %v2715
        %v2803 = vmul.f32 %v2779, %v2715
        %v2804 = vmul.f32 %v2781, %v2715
        %v2805 = vmul.f32 %v2783, %v2715
        %v2806 = vmul.f32 %v2785, %v2715
        %v2807 = vmul.f32 %v2787, %v2715
        %v2808 = vmul.f32 %v2789, %v2715
        %v2809 = vmul.f32 %v2791, %v2715
        %v2810 = vmul.f32 %v2793, %v2715
        %v2811 = vmul.f32 %v2795, %v2715
        %v2812 = vadd.f32 %v2796, 1e-05
        %v2813 = vadd.f32 %v2797, 1e-05
        %v2814 = vadd.f32 %v2798, 1e-05
        %v2815 = vadd.f32 %v2799, 1e-05
        %v2816 = vadd.f32 %v2800, 1e-05
        %v2817 = vadd.f32 %v2801, 1e-05
        %v2818 = vadd.f32 %v2802, 1e-05
        %v2819 = vadd.f32 %v2803, 1e-05
        %v2820 = vadd.f32 %v2804, 1e-05
        %v2821 = vadd.f32 %v2805, 1e-05
        %v2822 = vadd.f32 %v2806, 1e-05
        %v2823 = vadd.f32 %v2807, 1e-05
        %v2824 = vadd.f32 %v2808, 1e-05
        %v2825 = vadd.f32 %v2809, 1e-05
        %v2826 = vadd.f32 %v2810, 1e-05
        %v2827 = vadd.f32 %v2811, 1e-05
        %v2828 = vrsqrt.pop %v2812
        %v2829 = vmul.f32 %v2828, %v2812
        %v2830 = vmul.f32 %v2829, %v2828
        %v2831 = vmul.f32 0.5, %v2830
        %v2832 = vsub.f32 1.5, %v2831
        %v2833 = vmul.f32 %v2828, %v2832
        %vm2834 = vweird.f32 %v2812
        %vm2835 = vweird.f32 %v2828
        %vm2836 = vmor %vm2834, %vm2835
        %v2837 = vsel %vm2836, %v2828, %v2833
        %v2838 = vrsqrt.pop %v2813
        %v2839 = vmul.f32 %v2838, %v2813
        %v2840 = vmul.f32 %v2839, %v2838
        %v2841 = vmul.f32 0.5, %v2840
        %v2842 = vsub.f32 1.5, %v2841
        %v2843 = vmul.f32 %v2838, %v2842
        %vm2844 = vweird.f32 %v2813
        %vm2845 = vweird.f32 %v2838
        %vm2846 = vmor %vm2844, %vm2845
        %v2847 = vsel %vm2846, %v2838, %v2843
        %v2848 = vrsqrt.pop %v2814
        %v2849 = vmul.f32 %v2848, %v2814
        %v2850 = vmul.f32 %v2849, %v2848
        %v2851 = vmul.f32 0.5, %v2850
        %v2852 = vsub.f32 1.5, %v2851
        %v2853 = vmul.f32 %v2848, %v2852
        %vm2854 = vweird.f32 %v2814
        %vm2855 = vweird.f32 %v2848
        %vm2856 = vmor %vm2854, %vm2855
        %v2857 = vsel %vm2856, %v2848, %v2853
        %v2858 = vrsqrt.pop %v2815
        %v2859 = vmul.f32 %v2858, %v2815
        %v2860 = vmul.f32 %v2859, %v2858
        %v2861 = vmul.f32 0.5, %v2860
        %v2862 = vsub.f32 1.5, %v2861
        %v2863 = vmul.f32 %v2858, %v2862
        %vm2864 = vweird.f32 %v2815
        %vm2865 = vweird.f32 %v2858
        %vm2866 = vmor %vm2864, %vm2865
        %v2867 = vsel %vm2866, %v2858, %v2863
        %v2868 = vrsqrt.pop %v2816
        %v2869 = vmul.f32 %v2868, %v2816
        %v2870 = vmul.f32 %v2869, %v2868
        %v2871 = vmul.f32 0.5, %v2870
        %v2872 = vsub.f32 1.5, %v2871
        %v2873 = vmul.f32 %v2868, %v2872
        %vm2874 = vweird.f32 %v2816
        %vm2875 = vweird.f32 %v2868
        %vm2876 = vmor %vm2874, %vm2875
        %v2877 = vsel %vm2876, %v2868, %v2873
        %v2878 = vrsqrt.pop %v2817
        %v2879 = vmul.f32 %v2878, %v2817
        %v2880 = vmul.f32 %v2879, %v2878
        %v2881 = vmul.f32 0.5, %v2880
        %v2882 = vsub.f32 1.5, %v2881
        %v2883 = vmul.f32 %v2878, %v2882
        %vm2884 = vweird.f32 %v2817
        %vm2885 = vweird.f32 %v2878
        %vm2886 = vmor %vm2884, %vm2885
        %v2887 = vsel %vm2886, %v2878, %v2883
        %v2888 = vrsqrt.pop %v2818
        %v2889 = vmul.f32 %v2888, %v2818
        %v2890 = vmul.f32 %v2889, %v2888
        %v2891 = vmul.f32 0.5, %v2890
        %v2892 = vsub.f32 1.5, %v2891
        %v2893 = vmul.f32 %v2888, %v2892
        %vm2894 = vweird.f32 %v2818
        %vm2895 = vweird.f32 %v2888
        %vm2896 = vmor %vm2894, %vm2895
        %v2897 = vsel %vm2896, %v2888, %v2893
        %v2898 = vrsqrt.pop %v2819
        %v2899 = vmul.f32 %v2898, %v2819
        %v2900 = vmul.f32 %v2899, %v2898
        %v2901 = vmul.f32 0.5, %v2900
        %v2902 = vsub.f32 1.5, %v2901
        %v2903 = vmul.f32 %v2898, %v2902
        %vm2904 = vweird.f32 %v2819
        %vm2905 = vweird.f32 %v2898
        %vm2906 = vmor %vm2904, %vm2905
        %v2907 = vsel %vm2906, %v2898, %v2903
        %v2908 = vrsqrt.pop %v2820
        %v2909 = vmul.f32 %v2908, %v2820
        %v2910 = vmul.f32 %v2909, %v2908
        %v2911 = vmul.f32 0.5, %v2910
        %v2912 = vsub.f32 1.5, %v2911
        %v2913 = vmul.f32 %v2908, %v2912
        %vm2914 = vweird.f32 %v2820
        %vm2915 = vweird.f32 %v2908
        %vm2916 = vmor %vm2914, %vm2915
        %v2917 = vsel %vm2916, %v2908, %v2913
        %v2918 = vrsqrt.pop %v2821
        %v2919 = vmul.f32 %v2918, %v2821
        %v2920 = vmul.f32 %v2919, %v2918
        %v2921 = vmul.f32 0.5, %v2920
        %v2922 = vsub.f32 1.5, %v2921
        %v2923 = vmul.f32 %v2918, %v2922
        %vm2924 = vweird.f32 %v2821
        %vm2925 = vweird.f32 %v2918
        %vm2926 = vmor %vm2924, %vm2925
        %v2927 = vsel %vm2926, %v2918, %v2923
        %v2928 = vrsqrt.pop %v2822
        %v2929 = vmul.f32 %v2928, %v2822
        %v2930 = vmul.f32 %v2929, %v2928
        %v2931 = vmul.f32 0.5, %v2930
        %v2932 = vsub.f32 1.5, %v2931
        %v2933 = vmul.f32 %v2928, %v2932
        %vm2934 = vweird.f32 %v2822
        %vm2935 = vweird.f32 %v2928
        %vm2936 = vmor %vm2934, %vm2935
        %v2937 = vsel %vm2936, %v2928, %v2933
        %v2938 = vrsqrt.pop %v2823
        %v2939 = vmul.f32 %v2938, %v2823
        %v2940 = vmul.f32 %v2939, %v2938
        %v2941 = vmul.f32 0.5, %v2940
        %v2942 = vsub.f32 1.5, %v2941
        %v2943 = vmul.f32 %v2938, %v2942
        %vm2944 = vweird.f32 %v2823
        %vm2945 = vweird.f32 %v2938
        %vm2946 = vmor %vm2944, %vm2945
        %v2947 = vsel %vm2946, %v2938, %v2943
        %v2948 = vrsqrt.pop %v2824
        %v2949 = vmul.f32 %v2948, %v2824
        %v2950 = vmul.f32 %v2949, %v2948
        %v2951 = vmul.f32 0.5, %v2950
        %v2952 = vsub.f32 1.5, %v2951
        %v2953 = vmul.f32 %v2948, %v2952
        %vm2954 = vweird.f32 %v2824
        %vm2955 = vweird.f32 %v2948
        %vm2956 = vmor %vm2954, %vm2955
        %v2957 = vsel %vm2956, %v2948, %v2953
        %v2958 = vrsqrt.pop %v2825
        %v2959 = vmul.f32 %v2958, %v2825
        %v2960 = vmul.f32 %v2959, %v2958
        %v2961 = vmul.f32 0.5, %v2960
        %v2962 = vsub.f32 1.5, %v2961
        %v2963 = vmul.f32 %v2958, %v2962
        %vm2964 = vweird.f32 %v2825
        %vm2965 = vweird.f32 %v2958
        %vm2966 = vmor %vm2964, %vm2965
        %v2967 = vsel %vm2966, %v2958, %v2963
        %v2968 = vrsqrt.pop %v2826
        %v2969 = vmul.f32 %v2968, %v2826
        %v2970 = vmul.f32 %v2969, %v2968
        %v2971 = vmul.f32 0.5, %v2970
        %v2972 = vsub.f32 1.5, %v2971
        %v2973 = vmul.f32 %v2968, %v2972
        %vm2974 = vweird.f32 %v2826
        %vm2975 = vweird.f32 %v2968
        %vm2976 = vmor %vm2974, %vm2975
        %v2977 = vsel %vm2976, %v2968, %v2973
        %v2978 = vrsqrt.pop %v2827
        %v2979 = vmul.f32 %v2978, %v2827
        %v2980 = vmul.f32 %v2979, %v2978
        %v2981 = vmul.f32 0.5, %v2980
        %v2982 = vsub.f32 1.5, %v2981
        %v2983 = vmul.f32 %v2978, %v2982
        %vm2984 = vweird.f32 %v2827
        %vm2985 = vweird.f32 %v2978
        %vm2986 = vmor %vm2984, %vm2985
        %v2987 = vsel %vm2986, %v2978, %v2983
        %v2988 = vmul.f32 %v2732, %v2837
        %v2989 = vmul.f32 %v2733, %v2847
        %v2990 = vmul.f32 %v2734, %v2857
        %v2991 = vmul.f32 %v2735, %v2867
        %v2992 = vmul.f32 %v2736, %v2877
        %v2993 = vmul.f32 %v2737, %v2887
        %v2994 = vmul.f32 %v2738, %v2897
        %v2995 = vmul.f32 %v2739, %v2907
        %v2996 = vmul.f32 %v2740, %v2917
        %v2997 = vmul.f32 %v2741, %v2927
        %v2998 = vmul.f32 %v2742, %v2937
        %v2999 = vmul.f32 %v2743, %v2947
        %v3000 = vmul.f32 %v2744, %v2957
        %v3001 = vmul.f32 %v2745, %v2967
        %v3002 = vmul.f32 %v2746, %v2977
        %v3003 = vmul.f32 %v2747, %v2987
        %v3005 = vperm.slane %v2675, 0
        %v3007 = vmul.f32 %v2988, %v3005
        %v3008 = vmul.f32 %v2989, %v3005
        %v3009 = vmul.f32 %v2990, %v3005
        %v3010 = vmul.f32 %v2991, %v3005
        %v3011 = vmul.f32 %v2992, %v3005
        %v3012 = vmul.f32 %v2993, %v3005
        %v3013 = vmul.f32 %v2994, %v3005
        %v3014 = vmul.f32 %v2995, %v3005
        %v3015 = vmul.f32 %v2996, %v3005
        %v3016 = vmul.f32 %v2997, %v3005
        %v3017 = vmul.f32 %v2998, %v3005
        %v3018 = vmul.f32 %v2999, %v3005
        %v3019 = vmul.f32 %v3000, %v3005
        %v3020 = vmul.f32 %v3001, %v3005
        %v3021 = vmul.f32 %v3002, %v3005
        %v3022 = vmul.f32 %v3003, %v3005
        %v3024 = vperm.slane %v2676, 0
        %v3026 = vadd.f32 %v3007, %v3024
        %v3027 = vadd.f32 %v3008, %v3024
        %v3028 = vadd.f32 %v3009, %v3024
        %v3029 = vadd.f32 %v3010, %v3024
        %v3030 = vadd.f32 %v3011, %v3024
        %v3031 = vadd.f32 %v3012, %v3024
        %v3032 = vadd.f32 %v3013, %v3024
        %v3033 = vadd.f32 %v3014, %v3024
        %v3034 = vadd.f32 %v3015, %v3024
        %v3035 = vadd.f32 %v3016, %v3024
        %v3036 = vadd.f32 %v3017, %v3024
        %v3037 = vadd.f32 %v3018, %v3024
        %v3038 = vadd.f32 %v3019, %v3024
        %v3039 = vadd.f32 %v3020, %v3024
        %v3040 = vadd.f32 %v3021, %v3024
        %v3041 = vadd.f32 %v3022, %v3024
        %v3042 = vpack.c.bf16 %v3027, %v3026
        %v3043 = vpack.c.bf16 %v3029, %v3028
        %v3044 = vpack.c.bf16 %v3031, %v3030
        %v3045 = vpack.c.bf16 %v3033, %v3032
        %v3046 = vpack.c.bf16 %v3035, %v3034
        %v3047 = vpack.c.bf16 %v3037, %v3036
        %v3048 = vpack.c.bf16 %v3039, %v3038
        %v3049 = vpack.c.bf16 %v3041, %v3040
        %v3050 = vld [vmem:[%s829] sm:$0xff]
        %v3051 = vld [vmem:[%s829 + $0x8] sm:$0xff]
        %v3052 = vld [vmem:[%s829 + $0x10] sm:$0xff]
        %v3053 = vld [vmem:[%s829 + $0x18] sm:$0xff]
        %v3054 = vld [vmem:[%s829 + $0x20] sm:$0xff]
        %v3055 = vld [vmem:[%s829 + $0x28] sm:$0xff]
        %v3056 = vld [vmem:[%s829 + $0x30] sm:$0xff]
        %v3057 = vld [vmem:[%s829 + $0x38] sm:$0xff]
        %v3058 = vld [vmem:[%s829 + $0x40] sm:$0xff]
        %v3059 = vld [vmem:[%s829 + $0x48] sm:$0xff]
        %v3060 = vld [vmem:[%s829 + $0x50] sm:$0xff]
        %v3061 = vld [vmem:[%s829 + $0x58] sm:$0xff]
        %v3062 = vld [vmem:[%s829 + $0x60] sm:$0xff]
        %v3063 = vld [vmem:[%s829 + $0x68] sm:$0xff]
        %v3064 = vld [vmem:[%s829 + $0x70] sm:$0xff]
        %v3065 = vld [vmem:[%s829 + $0x78] sm:$0xff]
        %v3066 = vld [vmem:[%s829 + $0x80] sm:$0xff]
        %v3067 = vld [vmem:[%s829 + $0x88] sm:$0xff]
        %v3068 = vld [vmem:[%s829 + $0x90] sm:$0xff]
        %v3069 = vld [vmem:[%s829 + $0x98] sm:$0xff]
        %v3070 = vld [vmem:[%s829 + $0xa0] sm:$0xff]
        %v3071 = vld [vmem:[%s829 + $0xa8] sm:$0xff]
        %v3072 = vld [vmem:[%s829 + $0xb0] sm:$0xff]
        %v3073 = vld [vmem:[%s829 + $0xb8] sm:$0xff]
        %v3074 = vld [vmem:[%s829 + $0xc0] sm:$0xff]
        %v3075 = vld [vmem:[%s829 + $0xc8] sm:$0xff]
        %v3076 = vld [vmem:[%s829 + $0xd0] sm:$0xff]
        %v3077 = vld [vmem:[%s829 + $0xd8] sm:$0xff]
        %v3078 = vld [vmem:[%s829 + $0xe0] sm:$0xff]
        %v3079 = vld [vmem:[%s829 + $0xe8] sm:$0xff]
        %v3080 = vld [vmem:[%s829 + $0xf0] sm:$0xff]
        %v3081 = vld [vmem:[%s829 + $0xf8] sm:$0xff]
        %v3082 = vld [vmem:[%s958] sm:$0xf]
        %v3084 = vperm.slane %v3082, 0
        %v3085 = vperm.slane %v3082, 1
        %v3086 = vperm.slane %v3082, 2
        %v3087 = vperm.slane %v3082, 3
        %v3124 = vunpack.c.l.b16 %v3050
        %v3125 = vunpack.c.h.b16 %v3050
        %v3126 = vunpack.c.l.b16 %v3051
        %v3127 = vunpack.c.h.b16 %v3051
        %v3128 = vunpack.c.l.b16 %v3052
        %v3129 = vunpack.c.h.b16 %v3052
        %v3130 = vunpack.c.l.b16 %v3053
        %v3131 = vunpack.c.h.b16 %v3053
        %v3132 = vunpack.c.l.b16 %v3054
        %v3133 = vunpack.c.h.b16 %v3054
        %v3134 = vunpack.c.l.b16 %v3055
        %v3135 = vunpack.c.h.b16 %v3055
        %v3136 = vunpack.c.l.b16 %v3056
        %v3137 = vunpack.c.h.b16 %v3056
        %v3138 = vunpack.c.l.b16 %v3057
        %v3139 = vunpack.c.h.b16 %v3057
        %v3140 = vunpack.c.l.b16 %v3058
        %v3141 = vunpack.c.h.b16 %v3058
        %v3142 = vunpack.c.l.b16 %v3059
        %v3143 = vunpack.c.h.b16 %v3059
        %v3144 = vunpack.c.l.b16 %v3060
        %v3145 = vunpack.c.h.b16 %v3060
        %v3146 = vunpack.c.l.b16 %v3061
        %v3147 = vunpack.c.h.b16 %v3061
        %v3148 = vunpack.c.l.b16 %v3062
        %v3149 = vunpack.c.h.b16 %v3062
        %v3150 = vunpack.c.l.b16 %v3063
        %v3151 = vunpack.c.h.b16 %v3063
        %v3152 = vunpack.c.l.b16 %v3064
        %v3153 = vunpack.c.h.b16 %v3064
        %v3154 = vunpack.c.l.b16 %v3065
        %v3155 = vunpack.c.h.b16 %v3065
        %v3156 = vunpack.c.l.b16 %v3066
        %v3157 = vunpack.c.h.b16 %v3066
        %v3158 = vunpack.c.l.b16 %v3067
        %v3159 = vunpack.c.h.b16 %v3067
        %v3160 = vunpack.c.l.b16 %v3068
        %v3161 = vunpack.c.h.b16 %v3068
        %v3162 = vunpack.c.l.b16 %v3069
        %v3163 = vunpack.c.h.b16 %v3069
        %v3164 = vunpack.c.l.b16 %v3070
        %v3165 = vunpack.c.h.b16 %v3070
        %v3166 = vunpack.c.l.b16 %v3071
        %v3167 = vunpack.c.h.b16 %v3071
        %v3168 = vunpack.c.l.b16 %v3072
        %v3169 = vunpack.c.h.b16 %v3072
        %v3170 = vunpack.c.l.b16 %v3073
        %v3171 = vunpack.c.h.b16 %v3073
        %v3172 = vunpack.c.l.b16 %v3074
        %v3173 = vunpack.c.h.b16 %v3074
        %v3174 = vunpack.c.l.b16 %v3075
        %v3175 = vunpack.c.h.b16 %v3075
        %v3176 = vunpack.c.l.b16 %v3076
        %v3177 = vunpack.c.h.b16 %v3076
        %v3178 = vunpack.c.l.b16 %v3077
        %v3179 = vunpack.c.h.b16 %v3077
        %v3180 = vunpack.c.l.b16 %v3078
        %v3181 = vunpack.c.h.b16 %v3078
        %v3182 = vunpack.c.l.b16 %v3079
        %v3183 = vunpack.c.h.b16 %v3079
        %v3184 = vunpack.c.l.b16 %v3080
        %v3185 = vunpack.c.h.b16 %v3080
        %v3186 = vunpack.c.l.b16 %v3081
        %v3187 = vunpack.c.h.b16 %v3081
        %v3188 = vpack.c.b16 %v3128, %v3124
        %v3189 = vpack.c.b16 %v3129, %v3125
        %v3190 = vpack.c.b16 %v3130, %v3126
        %v3191 = vpack.c.b16 %v3131, %v3127
        %v3192 = vpack.c.b16 %v3136, %v3132
        %v3193 = vpack.c.b16 %v3137, %v3133
        %v3194 = vpack.c.b16 %v3138, %v3134
        %v3195 = vpack.c.b16 %v3139, %v3135
        %v3196 = vpack.c.b16 %v3144, %v3140
        %v3197 = vpack.c.b16 %v3145, %v3141
        %v3198 = vpack.c.b16 %v3146, %v3142
        %v3199 = vpack.c.b16 %v3147, %v3143
        %v3200 = vpack.c.b16 %v3152, %v3148
        %v3201 = vpack.c.b16 %v3153, %v3149
        %v3202 = vpack.c.b16 %v3154, %v3150
        %v3203 = vpack.c.b16 %v3155, %v3151
        %v3204 = vpack.c.b16 %v3160, %v3156
        %v3205 = vpack.c.b16 %v3161, %v3157
        %v3206 = vpack.c.b16 %v3162, %v3158
        %v3207 = vpack.c.b16 %v3163, %v3159
        %v3208 = vpack.c.b16 %v3168, %v3164
        %v3209 = vpack.c.b16 %v3169, %v3165
        %v3210 = vpack.c.b16 %v3170, %v3166
        %v3211 = vpack.c.b16 %v3171, %v3167
        %v3212 = vpack.c.b16 %v3176, %v3172
        %v3213 = vpack.c.b16 %v3177, %v3173
        %v3214 = vpack.c.b16 %v3178, %v3174
        %v3215 = vpack.c.b16 %v3179, %v3175
        %v3216 = vpack.c.b16 %v3184, %v3180
        %v3217 = vpack.c.b16 %v3185, %v3181
        %v3218 = vpack.c.b16 %v3186, %v3182
        %v3219 = vpack.c.b16 %v3187, %v3183
        %3252 = vmatpush.bf16.msra.mxu0 %v3216
        %3253 = vmatpush.bf16.msra.mxu0 %v3212
        %3254 = vmatpush.bf16.msra.mxu0 %v3208
        %3255 = vmatpush.bf16.msra.mxu0 %v3204
        %3256 = vmatpush.bf16.msra.mxu0 %v3200
        %3257 = vmatpush.bf16.msra.mxu0 %v3196
        %3258 = vmatpush.bf16.msra.mxu0 %v3192
        %3259 = vmatpush.bf16.msra.mxu0 %v3188
        %3260 = vmatmul.bf16.gmra.mxu0 %v3042
        %v3261 = vpop.f32.mrf.mxu0
        %v3262 = vadd.f32 %v3084, %v3261
        %v3263 = vpop.f32.mrf.mxu0
        %v3264 = vadd.f32 %v3084, %v3263
        %3265 = vmatmul.bf16.gmra.mxu0 %v3043
        %v3266 = vpop.f32.mrf.mxu0
        %v3267 = vadd.f32 %v3084, %v3266
        %v3268 = vpop.f32.mrf.mxu0
        %v3269 = vadd.f32 %v3084, %v3268
        %3270 = vmatmul.bf16.gmra.mxu0 %v3044
        %v3271 = vpop.f32.mrf.mxu0
        %v3272 = vadd.f32 %v3084, %v3271
        %v3273 = vpop.f32.mrf.mxu0
        %v3274 = vadd.f32 %v3084, %v3273
        %3275 = vmatmul.bf16.gmra.mxu0 %v3045
        %v3276 = vpop.f32.mrf.mxu0
        %v3277 = vadd.f32 %v3084, %v3276
        %v3278 = vpop.f32.mrf.mxu0
        %v3279 = vadd.f32 %v3084, %v3278
        %3280 = vmatmul.bf16.gmra.mxu0 %v3046
        %v3281 = vpop.f32.mrf.mxu0
        %v3282 = vadd.f32 %v3084, %v3281
        %v3283 = vpop.f32.mrf.mxu0
        %v3284 = vadd.f32 %v3084, %v3283
        %3285 = vmatmul.bf16.gmra.mxu0 %v3047
        %v3286 = vpop.f32.mrf.mxu0
        %v3287 = vadd.f32 %v3084, %v3286
        %v3288 = vpop.f32.mrf.mxu0
        %v3289 = vadd.f32 %v3084, %v3288
        %3290 = vmatmul.bf16.gmra.mxu0 %v3048
        %v3291 = vpop.f32.mrf.mxu0
        %v3292 = vadd.f32 %v3084, %v3291
        %v3293 = vpop.f32.mrf.mxu0
        %v3294 = vadd.f32 %v3084, %v3293
        %3295 = vmatmul.bf16.gmra.mxu0 %v3049
        %v3296 = vpop.f32.mrf.mxu0
        %v3297 = vadd.f32 %v3084, %v3296
        %v3298 = vpop.f32.mrf.mxu0
        %v3299 = vadd.f32 %v3084, %v3298
        %3300 = vdwg.mxu0
        %3301 = vmatpush.bf16.msra.mxu0 %v3217
        %3302 = vmatpush.bf16.msra.mxu0 %v3213
        %3303 = vmatpush.bf16.msra.mxu0 %v3209
        %3304 = vmatpush.bf16.msra.mxu0 %v3205
        %3305 = vmatpush.bf16.msra.mxu0 %v3201
        %3306 = vmatpush.bf16.msra.mxu0 %v3197
        %3307 = vmatpush.bf16.msra.mxu0 %v3193
        %3308 = vmatpush.bf16.msra.mxu0 %v3189
        %3309 = vmatmul.bf16.gmra.mxu0 %v3042
        %v3310 = vpop.f32.mrf.mxu0
        %v3311 = vadd.f32 %v3085, %v3310
        %v3312 = vpop.f32.mrf.mxu0
        %v3313 = vadd.f32 %v3085, %v3312
        %3314 = vmatmul.bf16.gmra.mxu0 %v3043
        %v3315 = vpop.f32.mrf.mxu0
        %v3316 = vadd.f32 %v3085, %v3315
        %v3317 = vpop.f32.mrf.mxu0
        %v3318 = vadd.f32 %v3085, %v3317
        %3319 = vmatmul.bf16.gmra.mxu0 %v3044
        %v3320 = vpop.f32.mrf.mxu0
        %v3321 = vadd.f32 %v3085, %v3320
        %v3322 = vpop.f32.mrf.mxu0
        %v3323 = vadd.f32 %v3085, %v3322
        %3324 = vmatmul.bf16.gmra.mxu0 %v3045
        %v3325 = vpop.f32.mrf.mxu0
        %v3326 = vadd.f32 %v3085, %v3325
        %v3327 = vpop.f32.mrf.mxu0
        %v3328 = vadd.f32 %v3085, %v3327
        %3329 = vmatmul.bf16.gmra.mxu0 %v3046
        %v3330 = vpop.f32.mrf.mxu0
        %v3331 = vadd.f32 %v3085, %v3330
        %v3332 = vpop.f32.mrf.mxu0
        %v3333 = vadd.f32 %v3085, %v3332
        %3334 = vmatmul.bf16.gmra.mxu0 %v3047
        %v3335 = vpop.f32.mrf.mxu0
        %v3336 = vadd.f32 %v3085, %v3335
        %v3337 = vpop.f32.mrf.mxu0
        %v3338 = vadd.f32 %v3085, %v3337
        %3339 = vmatmul.bf16.gmra.mxu0 %v3048
        %v3340 = vpop.f32.mrf.mxu0
        %v3341 = vadd.f32 %v3085, %v3340
        %v3342 = vpop.f32.mrf.mxu0
        %v3343 = vadd.f32 %v3085, %v3342
        %3344 = vmatmul.bf16.gmra.mxu0 %v3049
        %v3345 = vpop.f32.mrf.mxu0
        %v3346 = vadd.f32 %v3085, %v3345
        %v3347 = vpop.f32.mrf.mxu0
        %v3348 = vadd.f32 %v3085, %v3347
        %3349 = vdwg.mxu0
        %3350 = vmatpush.bf16.msra.mxu0 %v3218
        %3351 = vmatpush.bf16.msra.mxu0 %v3214
        %3352 = vmatpush.bf16.msra.mxu0 %v3210
        %3353 = vmatpush.bf16.msra.mxu0 %v3206
        %3354 = vmatpush.bf16.msra.mxu0 %v3202
        %3355 = vmatpush.bf16.msra.mxu0 %v3198
        %3356 = vmatpush.bf16.msra.mxu0 %v3194
        %3357 = vmatpush.bf16.msra.mxu0 %v3190
        %3358 = vmatmul.bf16.gmra.mxu0 %v3042
        %v3359 = vpop.f32.mrf.mxu0
        %v3360 = vadd.f32 %v3086, %v3359
        %v3361 = vpop.f32.mrf.mxu0
        %v3362 = vadd.f32 %v3086, %v3361
        %3363 = vmatmul.bf16.gmra.mxu0 %v3043
        %v3364 = vpop.f32.mrf.mxu0
        %v3365 = vadd.f32 %v3086, %v3364
        %v3366 = vpop.f32.mrf.mxu0
        %v3367 = vadd.f32 %v3086, %v3366
        %3368 = vmatmul.bf16.gmra.mxu0 %v3044
        %v3369 = vpop.f32.mrf.mxu0
        %v3370 = vadd.f32 %v3086, %v3369
        %v3371 = vpop.f32.mrf.mxu0
        %v3372 = vadd.f32 %v3086, %v3371
        %3373 = vmatmul.bf16.gmra.mxu0 %v3045
        %v3374 = vpop.f32.mrf.mxu0
        %v3375 = vadd.f32 %v3086, %v3374
        %v3376 = vpop.f32.mrf.mxu0
        %v3377 = vadd.f32 %v3086, %v3376
        %3378 = vmatmul.bf16.gmra.mxu0 %v3046
        %v3379 = vpop.f32.mrf.mxu0
        %v3380 = vadd.f32 %v3086, %v3379
        %v3381 = vpop.f32.mrf.mxu0
        %v3382 = vadd.f32 %v3086, %v3381
        %3383 = vmatmul.bf16.gmra.mxu0 %v3047
        %v3384 = vpop.f32.mrf.mxu0
        %v3385 = vadd.f32 %v3086, %v3384
        %v3386 = vpop.f32.mrf.mxu0
        %v3387 = vadd.f32 %v3086, %v3386
        %3388 = vmatmul.bf16.gmra.mxu0 %v3048
        %v3389 = vpop.f32.mrf.mxu0
        %v3390 = vadd.f32 %v3086, %v3389
        %v3391 = vpop.f32.mrf.mxu0
        %v3392 = vadd.f32 %v3086, %v3391
        %3393 = vmatmul.bf16.gmra.mxu0 %v3049
        %v3394 = vpop.f32.mrf.mxu0
        %v3395 = vadd.f32 %v3086, %v3394
        %v3396 = vpop.f32.mrf.mxu0
        %v3397 = vadd.f32 %v3086, %v3396
        %3398 = vdwg.mxu0
        %3399 = vmatpush.bf16.msra.mxu0 %v3219
        %3400 = vmatpush.bf16.msra.mxu0 %v3215
        %3401 = vmatpush.bf16.msra.mxu0 %v3211
        %3402 = vmatpush.bf16.msra.mxu0 %v3207
        %3403 = vmatpush.bf16.msra.mxu0 %v3203
        %3404 = vmatpush.bf16.msra.mxu0 %v3199
        %3405 = vmatpush.bf16.msra.mxu0 %v3195
        %3406 = vmatpush.bf16.msra.mxu0 %v3191
        %3407 = vmatmul.bf16.gmra.mxu0 %v3042
        %v3408 = vpop.f32.mrf.mxu0
        %v3409 = vadd.f32 %v3087, %v3408
        %v3410 = vpop.f32.mrf.mxu0
        %v3411 = vadd.f32 %v3087, %v3410
        %3412 = vmatmul.bf16.gmra.mxu0 %v3043
        %v3413 = vpop.f32.mrf.mxu0
        %v3414 = vadd.f32 %v3087, %v3413
        %v3415 = vpop.f32.mrf.mxu0
        %v3416 = vadd.f32 %v3087, %v3415
        %3417 = vmatmul.bf16.gmra.mxu0 %v3044
        %v3418 = vpop.f32.mrf.mxu0
        %v3419 = vadd.f32 %v3087, %v3418
        %v3420 = vpop.f32.mrf.mxu0
        %v3421 = vadd.f32 %v3087, %v3420
        %3422 = vmatmul.bf16.gmra.mxu0 %v3045
        %v3423 = vpop.f32.mrf.mxu0
        %v3424 = vadd.f32 %v3087, %v3423
        %v3425 = vpop.f32.mrf.mxu0
        %v3426 = vadd.f32 %v3087, %v3425
        %3427 = vmatmul.bf16.gmra.mxu0 %v3046
        %v3428 = vpop.f32.mrf.mxu0
        %v3429 = vadd.f32 %v3087, %v3428
        %v3430 = vpop.f32.mrf.mxu0
        %v3431 = vadd.f32 %v3087, %v3430
        %3432 = vmatmul.bf16.gmra.mxu0 %v3047
        %v3433 = vpop.f32.mrf.mxu0
        %v3434 = vadd.f32 %v3087, %v3433
        %v3435 = vpop.f32.mrf.mxu0
        %v3436 = vadd.f32 %v3087, %v3435
        %3437 = vmatmul.bf16.gmra.mxu0 %v3048
        %v3438 = vpop.f32.mrf.mxu0
        %v3439 = vadd.f32 %v3087, %v3438
        %v3440 = vpop.f32.mrf.mxu0
        %v3441 = vadd.f32 %v3087, %v3440
        %3442 = vmatmul.bf16.gmra.mxu0 %v3049
        %v3443 = vpop.f32.mrf.mxu0
        %v3444 = vadd.f32 %v3087, %v3443
        %v3445 = vpop.f32.mrf.mxu0
        %v3446 = vadd.f32 %v3087, %v3445
        %3447 = vdwg.mxu0
        %v3448 = vmul.f32 %v3262, %v3262
        %v3449 = vmul.f32 %v3311, %v3311
        %v3450 = vmul.f32 %v3360, %v3360
        %v3451 = vmul.f32 %v3409, %v3409
        %v3452 = vmul.f32 %v3264, %v3264
        %v3453 = vmul.f32 %v3313, %v3313
        %v3454 = vmul.f32 %v3362, %v3362
        %v3455 = vmul.f32 %v3411, %v3411
        %v3456 = vmul.f32 %v3267, %v3267
        %v3457 = vmul.f32 %v3316, %v3316
        %v3458 = vmul.f32 %v3365, %v3365
        %v3459 = vmul.f32 %v3414, %v3414
        %v3460 = vmul.f32 %v3269, %v3269
        %v3461 = vmul.f32 %v3318, %v3318
        %v3462 = vmul.f32 %v3367, %v3367
        %v3463 = vmul.f32 %v3416, %v3416
        %v3464 = vmul.f32 %v3272, %v3272
        %v3465 = vmul.f32 %v3321, %v3321
        %v3466 = vmul.f32 %v3370, %v3370
        %v3467 = vmul.f32 %v3419, %v3419
        %v3468 = vmul.f32 %v3274, %v3274
        %v3469 = vmul.f32 %v3323, %v3323
        %v3470 = vmul.f32 %v3372, %v3372
        %v3471 = vmul.f32 %v3421, %v3421
        %v3472 = vmul.f32 %v3277, %v3277
        %v3473 = vmul.f32 %v3326, %v3326
        %v3474 = vmul.f32 %v3375, %v3375
        %v3475 = vmul.f32 %v3424, %v3424
        %v3476 = vmul.f32 %v3279, %v3279
        %v3477 = vmul.f32 %v3328, %v3328
        %v3478 = vmul.f32 %v3377, %v3377
        %v3479 = vmul.f32 %v3426, %v3426
        %v3480 = vmul.f32 %v3282, %v3282
        %v3481 = vmul.f32 %v3331, %v3331
        %v3482 = vmul.f32 %v3380, %v3380
        %v3483 = vmul.f32 %v3429, %v3429
        %v3484 = vmul.f32 %v3284, %v3284
        %v3485 = vmul.f32 %v3333, %v3333
        %v3486 = vmul.f32 %v3382, %v3382
        %v3487 = vmul.f32 %v3431, %v3431
        %v3488 = vmul.f32 %v3287, %v3287
        %v3489 = vmul.f32 %v3336, %v3336
        %v3490 = vmul.f32 %v3385, %v3385
        %v3491 = vmul.f32 %v3434, %v3434
        %v3492 = vmul.f32 %v3289, %v3289
        %v3493 = vmul.f32 %v3338, %v3338
        %v3494 = vmul.f32 %v3387, %v3387
        %v3495 = vmul.f32 %v3436, %v3436
        %v3496 = vmul.f32 %v3292, %v3292
        %v3497 = vmul.f32 %v3341, %v3341
        %v3498 = vmul.f32 %v3390, %v3390
        %v3499 = vmul.f32 %v3439, %v3439
        %v3500 = vmul.f32 %v3294, %v3294
        %v3501 = vmul.f32 %v3343, %v3343
        %v3502 = vmul.f32 %v3392, %v3392
        %v3503 = vmul.f32 %v3441, %v3441
        %v3504 = vmul.f32 %v3297, %v3297
        %v3505 = vmul.f32 %v3346, %v3346
        %v3506 = vmul.f32 %v3395, %v3395
        %v3507 = vmul.f32 %v3444, %v3444
        %v3508 = vmul.f32 %v3299, %v3299
        %v3509 = vmul.f32 %v3348, %v3348
        %v3510 = vmul.f32 %v3397, %v3397
        %v3511 = vmul.f32 %v3446, %v3446
        %v3512 = vmul.f32 %v3262, %v3448
        %v3513 = vmul.f32 %v3311, %v3449
        %v3514 = vmul.f32 %v3360, %v3450
        %v3515 = vmul.f32 %v3409, %v3451
        %v3516 = vmul.f32 %v3264, %v3452
        %v3517 = vmul.f32 %v3313, %v3453
        %v3518 = vmul.f32 %v3362, %v3454
        %v3519 = vmul.f32 %v3411, %v3455
        %v3520 = vmul.f32 %v3267, %v3456
        %v3521 = vmul.f32 %v3316, %v3457
        %v3522 = vmul.f32 %v3365, %v3458
        %v3523 = vmul.f32 %v3414, %v3459
        %v3524 = vmul.f32 %v3269, %v3460
        %v3525 = vmul.f32 %v3318, %v3461
        %v3526 = vmul.f32 %v3367, %v3462
        %v3527 = vmul.f32 %v3416, %v3463
        %v3528 = vmul.f32 %v3272, %v3464
        %v3529 = vmul.f32 %v3321, %v3465
        %v3530 = vmul.f32 %v3370, %v3466
        %v3531 = vmul.f32 %v3419, %v3467
        %v3532 = vmul.f32 %v3274, %v3468
        %v3533 = vmul.f32 %v3323, %v3469
        %v3534 = vmul.f32 %v3372, %v3470
        %v3535 = vmul.f32 %v3421, %v3471
        %v3536 = vmul.f32 %v3277, %v3472
        %v3537 = vmul.f32 %v3326, %v3473
        %v3538 = vmul.f32 %v3375, %v3474
        %v3539 = vmul.f32 %v3424, %v3475
        %v3540 = vmul.f32 %v3279, %v3476
        %v3541 = vmul.f32 %v3328, %v3477
        %v3542 = vmul.f32 %v3377, %v3478
        %v3543 = vmul.f32 %v3426, %v3479
        %v3544 = vmul.f32 %v3282, %v3480
        %v3545 = vmul.f32 %v3331, %v3481
        %v3546 = vmul.f32 %v3380, %v3482
        %v3547 = vmul.f32 %v3429, %v3483
        %v3548 = vmul.f32 %v3284, %v3484
        %v3549 = vmul.f32 %v3333, %v3485
        %v3550 = vmul.f32 %v3382, %v3486
        %v3551 = vmul.f32 %v3431, %v3487
        %v3552 = vmul.f32 %v3287, %v3488
        %v3553 = vmul.f32 %v3336, %v3489
        %v3554 = vmul.f32 %v3385, %v3490
        %v3555 = vmul.f32 %v3434, %v3491
        %v3556 = vmul.f32 %v3289, %v3492
        %v3557 = vmul.f32 %v3338, %v3493
        %v3558 = vmul.f32 %v3387, %v3494
        %v3559 = vmul.f32 %v3436, %v3495
        %v3560 = vmul.f32 %v3292, %v3496
        %v3561 = vmul.f32 %v3341, %v3497
        %v3562 = vmul.f32 %v3390, %v3498
        %v3563 = vmul.f32 %v3439, %v3499
        %v3564 = vmul.f32 %v3294, %v3500
        %v3565 = vmul.f32 %v3343, %v3501
        %v3566 = vmul.f32 %v3392, %v3502
        %v3567 = vmul.f32 %v3441, %v3503
        %v3568 = vmul.f32 %v3297, %v3504
        %v3569 = vmul.f32 %v3346, %v3505
        %v3570 = vmul.f32 %v3395, %v3506
        %v3571 = vmul.f32 %v3444, %v3507
        %v3572 = vmul.f32 %v3299, %v3508
        %v3573 = vmul.f32 %v3348, %v3509
        %v3574 = vmul.f32 %v3397, %v3510
        %v3575 = vmul.f32 %v3446, %v3511
        %v3576 = vmul.f32 %v3512, 0.044715
        %v3577 = vmul.f32 %v3513, 0.044715
        %v3578 = vmul.f32 %v3514, 0.044715
        %v3579 = vmul.f32 %v3515, 0.044715
        %v3580 = vmul.f32 %v3516, 0.044715
        %v3581 = vmul.f32 %v3517, 0.044715
        %v3582 = vmul.f32 %v3518, 0.044715
        %v3583 = vmul.f32 %v3519, 0.044715
        %v3584 = vmul.f32 %v3520, 0.044715
        %v3585 = vmul.f32 %v3521, 0.044715
        %v3586 = vmul.f32 %v3522, 0.044715
        %v3587 = vmul.f32 %v3523, 0.044715
        %v3588 = vmul.f32 %v3524, 0.044715
        %v3589 = vmul.f32 %v3525, 0.044715
        %v3590 = vmul.f32 %v3526, 0.044715
        %v3591 = vmul.f32 %v3527, 0.044715
        %v3592 = vmul.f32 %v3528, 0.044715
        %v3593 = vmul.f32 %v3529, 0.044715
        %v3594 = vmul.f32 %v3530, 0.044715
        %v3595 = vmul.f32 %v3531, 0.044715
        %v3596 = vmul.f32 %v3532, 0.044715
        %v3597 = vmul.f32 %v3533, 0.044715
        %v3598 = vmul.f32 %v3534, 0.044715
        %v3599 = vmul.f32 %v3535, 0.044715
        %v3600 = vmul.f32 %v3536, 0.044715
        %v3601 = vmul.f32 %v3537, 0.044715
        %v3602 = vmul.f32 %v3538, 0.044715
        %v3603 = vmul.f32 %v3539, 0.044715
        %v3604 = vmul.f32 %v3540, 0.044715
        %v3605 = vmul.f32 %v3541, 0.044715
        %v3606 = vmul.f32 %v3542, 0.044715
        %v3607 = vmul.f32 %v3543, 0.044715
        %v3608 = vmul.f32 %v3544, 0.044715
        %v3609 = vmul.f32 %v3545, 0.044715
        %v3610 = vmul.f32 %v3546, 0.044715
        %v3611 = vmul.f32 %v3547, 0.044715
        %v3612 = vmul.f32 %v3548, 0.044715
        %v3613 = vmul.f32 %v3549, 0.044715
        %v3614 = vmul.f32 %v3550, 0.044715
        %v3615 = vmul.f32 %v3551, 0.044715
        %v3616 = vmul.f32 %v3552, 0.044715
        %v3617 = vmul.f32 %v3553, 0.044715
        %v3618 = vmul.f32 %v3554, 0.044715
        %v3619 = vmul.f32 %v3555, 0.044715
        %v3620 = vmul.f32 %v3556, 0.044715
        %v3621 = vmul.f32 %v3557, 0.044715
        %v3622 = vmul.f32 %v3558, 0.044715
        %v3623 = vmul.f32 %v3559, 0.044715
        %v3624 = vmul.f32 %v3560, 0.044715
        %v3625 = vmul.f32 %v3561, 0.044715
        %v3626 = vmul.f32 %v3562, 0.044715
        %v3627 = vmul.f32 %v3563, 0.044715
        %v3628 = vmul.f32 %v3564, 0.044715
        %v3629 = vmul.f32 %v3565, 0.044715
        %v3630 = vmul.f32 %v3566, 0.044715
        %v3631 = vmul.f32 %v3567, 0.044715
        %v3632 = vmul.f32 %v3568, 0.044715
        %v3633 = vmul.f32 %v3569, 0.044715
        %v3634 = vmul.f32 %v3570, 0.044715
        %v3635 = vmul.f32 %v3571, 0.044715
        %v3636 = vmul.f32 %v3572, 0.044715
        %v3637 = vmul.f32 %v3573, 0.044715
        %v3638 = vmul.f32 %v3574, 0.044715
        %v3639 = vmul.f32 %v3575, 0.044715
        %v3640 = vadd.f32 %v3262, %v3576
        %v3641 = vadd.f32 %v3311, %v3577
        %v3642 = vadd.f32 %v3360, %v3578
        %v3643 = vadd.f32 %v3409, %v3579
        %v3644 = vadd.f32 %v3264, %v3580
        %v3645 = vadd.f32 %v3313, %v3581
        %v3646 = vadd.f32 %v3362, %v3582
        %v3647 = vadd.f32 %v3411, %v3583
        %v3648 = vadd.f32 %v3267, %v3584
        %v3649 = vadd.f32 %v3316, %v3585
        %v3650 = vadd.f32 %v3365, %v3586
        %v3651 = vadd.f32 %v3414, %v3587
        %v3652 = vadd.f32 %v3269, %v3588
        %v3653 = vadd.f32 %v3318, %v3589
        %v3654 = vadd.f32 %v3367, %v3590
        %v3655 = vadd.f32 %v3416, %v3591
        %v3656 = vadd.f32 %v3272, %v3592
        %v3657 = vadd.f32 %v3321, %v3593
        %v3658 = vadd.f32 %v3370, %v3594
        %v3659 = vadd.f32 %v3419, %v3595
        %v3660 = vadd.f32 %v3274, %v3596
        %v3661 = vadd.f32 %v3323, %v3597
        %v3662 = vadd.f32 %v3372, %v3598
        %v3663 = vadd.f32 %v3421, %v3599
        %v3664 = vadd.f32 %v3277, %v3600
        %v3665 = vadd.f32 %v3326, %v3601
        %v3666 = vadd.f32 %v3375, %v3602
        %v3667 = vadd.f32 %v3424, %v3603
        %v3668 = vadd.f32 %v3279, %v3604
        %v3669 = vadd.f32 %v3328, %v3605
        %v3670 = vadd.f32 %v3377, %v3606
        %v3671 = vadd.f32 %v3426, %v3607
        %v3672 = vadd.f32 %v3282, %v3608
        %v3673 = vadd.f32 %v3331, %v3609
        %v3674 = vadd.f32 %v3380, %v3610
        %v3675 = vadd.f32 %v3429, %v3611
        %v3676 = vadd.f32 %v3284, %v3612
        %v3677 = vadd.f32 %v3333, %v3613
        %v3678 = vadd.f32 %v3382, %v3614
        %v3679 = vadd.f32 %v3431, %v3615
        %v3680 = vadd.f32 %v3287, %v3616
        %v3681 = vadd.f32 %v3336, %v3617
        %v3682 = vadd.f32 %v3385, %v3618
        %v3683 = vadd.f32 %v3434, %v3619
        %v3684 = vadd.f32 %v3289, %v3620
        %v3685 = vadd.f32 %v3338, %v3621
        %v3686 = vadd.f32 %v3387, %v3622
        %v3687 = vadd.f32 %v3436, %v3623
        %v3688 = vadd.f32 %v3292, %v3624
        %v3689 = vadd.f32 %v3341, %v3625
        %v3690 = vadd.f32 %v3390, %v3626
        %v3691 = vadd.f32 %v3439, %v3627
        %v3692 = vadd.f32 %v3294, %v3628
        %v3693 = vadd.f32 %v3343, %v3629
        %v3694 = vadd.f32 %v3392, %v3630
        %v3695 = vadd.f32 %v3441, %v3631
        %v3696 = vadd.f32 %v3297, %v3632
        %v3697 = vadd.f32 %v3346, %v3633
        %v3698 = vadd.f32 %v3395, %v3634
        %v3699 = vadd.f32 %v3444, %v3635
        %v3700 = vadd.f32 %v3299, %v3636
        %v3701 = vadd.f32 %v3348, %v3637
        %v3702 = vadd.f32 %v3397, %v3638
        %v3703 = vadd.f32 %v3446, %v3639
        %v3704 = vmul.f32 %v3640, 0.7978846
        %v3705 = vmul.f32 %v3641, 0.7978846
        %v3706 = vmul.f32 %v3642, 0.7978846
        %v3707 = vmul.f32 %v3643, 0.7978846
        %v3708 = vmul.f32 %v3644, 0.7978846
        %v3709 = vmul.f32 %v3645, 0.7978846
        %v3710 = vmul.f32 %v3646, 0.7978846
        %v3711 = vmul.f32 %v3647, 0.7978846
        %v3712 = vmul.f32 %v3648, 0.7978846
        %v3713 = vmul.f32 %v3649, 0.7978846
        %v3714 = vmul.f32 %v3650, 0.7978846
        %v3715 = vmul.f32 %v3651, 0.7978846
        %v3716 = vmul.f32 %v3652, 0.7978846
        %v3717 = vmul.f32 %v3653, 0.7978846
        %v3718 = vmul.f32 %v3654, 0.7978846
        %v3719 = vmul.f32 %v3655, 0.7978846
        %v3720 = vmul.f32 %v3656, 0.7978846
        %v3721 = vmul.f32 %v3657, 0.7978846
        %v3722 = vmul.f32 %v3658, 0.7978846
        %v3723 = vmul.f32 %v3659, 0.7978846
        %v3724 = vmul.f32 %v3660, 0.7978846
        %v3725 = vmul.f32 %v3661, 0.7978846
        %v3726 = vmul.f32 %v3662, 0.7978846
        %v3727 = vmul.f32 %v3663, 0.7978846
        %v3728 = vmul.f32 %v3664, 0.7978846
        %v3729 = vmul.f32 %v3665, 0.7978846
        %v3730 = vmul.f32 %v3666, 0.7978846
        %v3731 = vmul.f32 %v3667, 0.7978846
        %v3732 = vmul.f32 %v3668, 0.7978846
        %v3733 = vmul.f32 %v3669, 0.7978846
        %v3734 = vmul.f32 %v3670, 0.7978846
        %v3735 = vmul.f32 %v3671, 0.7978846
        %v3736 = vmul.f32 %v3672, 0.7978846
        %v3737 = vmul.f32 %v3673, 0.7978846
        %v3738 = vmul.f32 %v3674, 0.7978846
        %v3739 = vmul.f32 %v3675, 0.7978846
        %v3740 = vmul.f32 %v3676, 0.7978846
        %v3741 = vmul.f32 %v3677, 0.7978846
        %v3742 = vmul.f32 %v3678, 0.7978846
        %v3743 = vmul.f32 %v3679, 0.7978846
        %v3744 = vmul.f32 %v3680, 0.7978846
        %v3745 = vmul.f32 %v3681, 0.7978846
        %v3746 = vmul.f32 %v3682, 0.7978846
        %v3747 = vmul.f32 %v3683, 0.7978846
        %v3748 = vmul.f32 %v3684, 0.7978846
        %v3749 = vmul.f32 %v3685, 0.7978846
        %v3750 = vmul.f32 %v3686, 0.7978846
        %v3751 = vmul.f32 %v3687, 0.7978846
        %v3752 = vmul.f32 %v3688, 0.7978846
        %v3753 = vmul.f32 %v3689, 0.7978846
        %v3754 = vmul.f32 %v3690, 0.7978846
        %v3755 = vmul.f32 %v3691, 0.7978846
        %v3756 = vmul.f32 %v3692, 0.7978846
        %v3757 = vmul.f32 %v3693, 0.7978846
        %v3758 = vmul.f32 %v3694, 0.7978846
        %v3759 = vmul.f32 %v3695, 0.7978846
        %v3760 = vmul.f32 %v3696, 0.7978846
        %v3761 = vmul.f32 %v3697, 0.7978846
        %v3762 = vmul.f32 %v3698, 0.7978846
        %v3763 = vmul.f32 %v3699, 0.7978846
        %v3764 = vmul.f32 %v3700, 0.7978846
        %v3765 = vmul.f32 %v3701, 0.7978846
        %v3766 = vmul.f32 %v3702, 0.7978846
        %v3767 = vmul.f32 %v3703, 0.7978846
        %v3768 = vtanh.pop %v3704
        %v3769 = vtanh.pop %v3705
        %v3770 = vtanh.pop %v3706
        %v3771 = vtanh.pop %v3707
        %v3772 = vtanh.pop %v3708
        %v3773 = vtanh.pop %v3709
        %v3774 = vtanh.pop %v3710
        %v3775 = vtanh.pop %v3711
        %v3776 = vtanh.pop %v3712
        %v3777 = vtanh.pop %v3713
        %v3778 = vtanh.pop %v3714
        %v3779 = vtanh.pop %v3715
        %v3780 = vtanh.pop %v3716
        %v3781 = vtanh.pop %v3717
        %v3782 = vtanh.pop %v3718
        %v3783 = vtanh.pop %v3719
        %v3784 = vtanh.pop %v3720
        %v3785 = vtanh.pop %v3721
        %v3786 = vtanh.pop %v3722
        %v3787 = vtanh.pop %v3723
        %v3788 = vtanh.pop %v3724
        %v3789 = vtanh.pop %v3725
        %v3790 = vtanh.pop %v3726
        %v3791 = vtanh.pop %v3727
        %v3792 = vtanh.pop %v3728
        %v3793 = vtanh.pop %v3729
        %v3794 = vtanh.pop %v3730
        %v3795 = vtanh.pop %v3731
        %v3796 = vtanh.pop %v3732
        %v3797 = vtanh.pop %v3733
        %v3798 = vtanh.pop %v3734
        %v3799 = vtanh.pop %v3735
        %v3800 = vtanh.pop %v3736
        %v3801 = vtanh.pop %v3737
        %v3802 = vtanh.pop %v3738
        %v3803 = vtanh.pop %v3739
        %v3804 = vtanh.pop %v3740
        %v3805 = vtanh.pop %v3741
        %v3806 = vtanh.pop %v3742
        %v3807 = vtanh.pop %v3743
        %v3808 = vtanh.pop %v3744
        %v3809 = vtanh.pop %v3745
        %v3810 = vtanh.pop %v3746
        %v3811 = vtanh.pop %v3747
        %v3812 = vtanh.pop %v3748
        %v3813 = vtanh.pop %v3749
        %v3814 = vtanh.pop %v3750
        %v3815 = vtanh.pop %v3751
        %v3816 = vtanh.pop %v3752
        %v3817 = vtanh.pop %v3753
        %v3818 = vtanh.pop %v3754
        %v3819 = vtanh.pop %v3755
        %v3820 = vtanh.pop %v3756
        %v3821 = vtanh.pop %v3757
        %v3822 = vtanh.pop %v3758
        %v3823 = vtanh.pop %v3759
        %v3824 = vtanh.pop %v3760
        %v3825 = vtanh.pop %v3761
        %v3826 = vtanh.pop %v3762
        %v3827 = vtanh.pop %v3763
        %v3828 = vtanh.pop %v3764
        %v3829 = vtanh.pop %v3765
        %v3830 = vtanh.pop %v3766
        %v3831 = vtanh.pop %v3767
        %v3832 = vadd.f32 %v3768, 1.0
        %v3833 = vadd.f32 %v3769, 1.0
        %v3834 = vadd.f32 %v3770, 1.0
        %v3835 = vadd.f32 %v3771, 1.0
        %v3836 = vadd.f32 %v3772, 1.0
        %v3837 = vadd.f32 %v3773, 1.0
        %v3838 = vadd.f32 %v3774, 1.0
        %v3839 = vadd.f32 %v3775, 1.0
        %v3840 = vadd.f32 %v3776, 1.0
        %v3841 = vadd.f32 %v3777, 1.0
        %v3842 = vadd.f32 %v3778, 1.0
        %v3843 = vadd.f32 %v3779, 1.0
        %v3844 = vadd.f32 %v3780, 1.0
        %v3845 = vadd.f32 %v3781, 1.0
        %v3846 = vadd.f32 %v3782, 1.0
        %v3847 = vadd.f32 %v3783, 1.0
        %v3848 = vadd.f32 %v3784, 1.0
        %v3849 = vadd.f32 %v3785, 1.0
        %v3850 = vadd.f32 %v3786, 1.0
        %v3851 = vadd.f32 %v3787, 1.0
        %v3852 = vadd.f32 %v3788, 1.0
        %v3853 = vadd.f32 %v3789, 1.0
        %v3854 = vadd.f32 %v3790, 1.0
        %v3855 = vadd.f32 %v3791, 1.0
        %v3856 = vadd.f32 %v3792, 1.0
        %v3857 = vadd.f32 %v3793, 1.0
        %v3858 = vadd.f32 %v3794, 1.0
        %v3859 = vadd.f32 %v3795, 1.0
        %v3860 = vadd.f32 %v3796, 1.0
        %v3861 = vadd.f32 %v3797, 1.0
        %v3862 = vadd.f32 %v3798, 1.0
        %v3863 = vadd.f32 %v3799, 1.0
        %v3864 = vadd.f32 %v3800, 1.0
        %v3865 = vadd.f32 %v3801, 1.0
        %v3866 = vadd.f32 %v3802, 1.0
        %v3867 = vadd.f32 %v3803, 1.0
        %v3868 = vadd.f32 %v3804, 1.0
        %v3869 = vadd.f32 %v3805, 1.0
        %v3870 = vadd.f32 %v3806, 1.0
        %v3871 = vadd.f32 %v3807, 1.0
        %v3872 = vadd.f32 %v3808, 1.0
        %v3873 = vadd.f32 %v3809, 1.0
        %v3874 = vadd.f32 %v3810, 1.0
        %v3875 = vadd.f32 %v3811, 1.0
        %v3876 = vadd.f32 %v3812, 1.0
        %v3877 = vadd.f32 %v3813, 1.0
        %v3878 = vadd.f32 %v3814, 1.0
        %v3879 = vadd.f32 %v3815, 1.0
        %v3880 = vadd.f32 %v3816, 1.0
        %v3881 = vadd.f32 %v3817, 1.0
        %v3882 = vadd.f32 %v3818, 1.0
        %v3883 = vadd.f32 %v3819, 1.0
        %v3884 = vadd.f32 %v3820, 1.0
        %v3885 = vadd.f32 %v3821, 1.0
        %v3886 = vadd.f32 %v3822, 1.0
        %v3887 = vadd.f32 %v3823, 1.0
        %v3888 = vadd.f32 %v3824, 1.0
        %v3889 = vadd.f32 %v3825, 1.0
        %v3890 = vadd.f32 %v3826, 1.0
        %v3891 = vadd.f32 %v3827, 1.0
        %v3892 = vadd.f32 %v3828, 1.0
        %v3893 = vadd.f32 %v3829, 1.0
        %v3894 = vadd.f32 %v3830, 1.0
        %v3895 = vadd.f32 %v3831, 1.0
        %v3896 = vmul.f32 %v3832, 0.5
        %v3897 = vmul.f32 %v3833, 0.5
        %v3898 = vmul.f32 %v3834, 0.5
        %v3899 = vmul.f32 %v3835, 0.5
        %v3900 = vmul.f32 %v3836, 0.5
        %v3901 = vmul.f32 %v3837, 0.5
        %v3902 = vmul.f32 %v3838, 0.5
        %v3903 = vmul.f32 %v3839, 0.5
        %v3904 = vmul.f32 %v3840, 0.5
        %v3905 = vmul.f32 %v3841, 0.5
        %v3906 = vmul.f32 %v3842, 0.5
        %v3907 = vmul.f32 %v3843, 0.5
        %v3908 = vmul.f32 %v3844, 0.5
        %v3909 = vmul.f32 %v3845, 0.5
        %v3910 = vmul.f32 %v3846, 0.5
        %v3911 = vmul.f32 %v3847, 0.5
        %v3912 = vmul.f32 %v3848, 0.5
        %v3913 = vmul.f32 %v3849, 0.5
        %v3914 = vmul.f32 %v3850, 0.5
        %v3915 = vmul.f32 %v3851, 0.5
        %v3916 = vmul.f32 %v3852, 0.5
        %v3917 = vmul.f32 %v3853, 0.5
        %v3918 = vmul.f32 %v3854, 0.5
        %v3919 = vmul.f32 %v3855, 0.5
        %v3920 = vmul.f32 %v3856, 0.5
        %v3921 = vmul.f32 %v3857, 0.5
        %v3922 = vmul.f32 %v3858, 0.5
        %v3923 = vmul.f32 %v3859, 0.5
        %v3924 = vmul.f32 %v3860, 0.5
        %v3925 = vmul.f32 %v3861, 0.5
        %v3926 = vmul.f32 %v3862, 0.5
        %v3927 = vmul.f32 %v3863, 0.5
        %v3928 = vmul.f32 %v3864, 0.5
        %v3929 = vmul.f32 %v3865, 0.5
        %v3930 = vmul.f32 %v3866, 0.5
        %v3931 = vmul.f32 %v3867, 0.5
        %v3932 = vmul.f32 %v3868, 0.5
        %v3933 = vmul.f32 %v3869, 0.5
        %v3934 = vmul.f32 %v3870, 0.5
        %v3935 = vmul.f32 %v3871, 0.5
        %v3936 = vmul.f32 %v3872, 0.5
        %v3937 = vmul.f32 %v3873, 0.5
        %v3938 = vmul.f32 %v3874, 0.5
        %v3939 = vmul.f32 %v3875, 0.5
        %v3940 = vmul.f32 %v3876, 0.5
        %v3941 = vmul.f32 %v3877, 0.5
        %v3942 = vmul.f32 %v3878, 0.5
        %v3943 = vmul.f32 %v3879, 0.5
        %v3944 = vmul.f32 %v3880, 0.5
        %v3945 = vmul.f32 %v3881, 0.5
        %v3946 = vmul.f32 %v3882, 0.5
        %v3947 = vmul.f32 %v3883, 0.5
        %v3948 = vmul.f32 %v3884, 0.5
        %v3949 = vmul.f32 %v3885, 0.5
        %v3950 = vmul.f32 %v3886, 0.5
        %v3951 = vmul.f32 %v3887, 0.5
        %v3952 = vmul.f32 %v3888, 0.5
        %v3953 = vmul.f32 %v3889, 0.5
        %v3954 = vmul.f32 %v3890, 0.5
        %v3955 = vmul.f32 %v3891, 0.5
        %v3956 = vmul.f32 %v3892, 0.5
        %v3957 = vmul.f32 %v3893, 0.5
        %v3958 = vmul.f32 %v3894, 0.5
        %v3959 = vmul.f32 %v3895, 0.5
        %v3960 = vmul.f32 %v3262, %v3896
        %v3961 = vmul.f32 %v3311, %v3897
        %v3962 = vmul.f32 %v3360, %v3898
        %v3963 = vmul.f32 %v3409, %v3899
        %v3964 = vmul.f32 %v3264, %v3900
        %v3965 = vmul.f32 %v3313, %v3901
        %v3966 = vmul.f32 %v3362, %v3902
        %v3967 = vmul.f32 %v3411, %v3903
        %v3968 = vmul.f32 %v3267, %v3904
        %v3969 = vmul.f32 %v3316, %v3905
        %v3970 = vmul.f32 %v3365, %v3906
        %v3971 = vmul.f32 %v3414, %v3907
        %v3972 = vmul.f32 %v3269, %v3908
        %v3973 = vmul.f32 %v3318, %v3909
        %v3974 = vmul.f32 %v3367, %v3910
        %v3975 = vmul.f32 %v3416, %v3911
        %v3976 = vmul.f32 %v3272, %v3912
        %v3977 = vmul.f32 %v3321, %v3913
        %v3978 = vmul.f32 %v3370, %v3914
        %v3979 = vmul.f32 %v3419, %v3915
        %v3980 = vmul.f32 %v3274, %v3916
        %v3981 = vmul.f32 %v3323, %v3917
        %v3982 = vmul.f32 %v3372, %v3918
        %v3983 = vmul.f32 %v3421, %v3919
        %v3984 = vmul.f32 %v3277, %v3920
        %v3985 = vmul.f32 %v3326, %v3921
        %v3986 = vmul.f32 %v3375, %v3922
        %v3987 = vmul.f32 %v3424, %v3923
        %v3988 = vmul.f32 %v3279, %v3924
        %v3989 = vmul.f32 %v3328, %v3925
        %v3990 = vmul.f32 %v3377, %v3926
        %v3991 = vmul.f32 %v3426, %v3927
        %v3992 = vmul.f32 %v3282, %v3928
        %v3993 = vmul.f32 %v3331, %v3929
        %v3994 = vmul.f32 %v3380, %v3930
        %v3995 = vmul.f32 %v3429, %v3931
        %v3996 = vmul.f32 %v3284, %v3932
        %v3997 = vmul.f32 %v3333, %v3933
        %v3998 = vmul.f32 %v3382, %v3934
        %v3999 = vmul.f32 %v3431, %v3935
        %v4000 = vmul.f32 %v3287, %v3936
        %v4001 = vmul.f32 %v3336, %v3937
        %v4002 = vmul.f32 %v3385, %v3938
        %v4003 = vmul.f32 %v3434, %v3939
        %v4004 = vmul.f32 %v3289, %v3940
        %v4005 = vmul.f32 %v3338, %v3941
        %v4006 = vmul.f32 %v3387, %v3942
        %v4007 = vmul.f32 %v3436, %v3943
        %v4008 = vmul.f32 %v3292, %v3944
        %v4009 = vmul.f32 %v3341, %v3945
        %v4010 = vmul.f32 %v3390, %v3946
        %v4011 = vmul.f32 %v3439, %v3947
        %v4012 = vmul.f32 %v3294, %v3948
        %v4013 = vmul.f32 %v3343, %v3949
        %v4014 = vmul.f32 %v3392, %v3950
        %v4015 = vmul.f32 %v3441, %v3951
        %v4016 = vmul.f32 %v3297, %v3952
        %v4017 = vmul.f32 %v3346, %v3953
        %v4018 = vmul.f32 %v3395, %v3954
        %v4019 = vmul.f32 %v3444, %v3955
        %v4020 = vmul.f32 %v3299, %v3956
        %v4021 = vmul.f32 %v3348, %v3957
        %v4022 = vmul.f32 %v3397, %v3958
        %v4023 = vmul.f32 %v3446, %v3959
        %v4024 = vpack.c.bf16 %v3964, %v3960
        %v4025 = vpack.c.bf16 %v3965, %v3961
        %v4026 = vpack.c.bf16 %v3966, %v3962
        %v4027 = vpack.c.bf16 %v3967, %v3963
        %v4028 = vpack.c.bf16 %v3972, %v3968
        %v4029 = vpack.c.bf16 %v3973, %v3969
        %v4030 = vpack.c.bf16 %v3974, %v3970
        %v4031 = vpack.c.bf16 %v3975, %v3971
        %v4032 = vpack.c.bf16 %v3980, %v3976
        %v4033 = vpack.c.bf16 %v3981, %v3977
        %v4034 = vpack.c.bf16 %v3982, %v3978
        %v4035 = vpack.c.bf16 %v3983, %v3979
        %v4036 = vpack.c.bf16 %v3988, %v3984
        %v4037 = vpack.c.bf16 %v3989, %v3985
        %v4038 = vpack.c.bf16 %v3990, %v3986
        %v4039 = vpack.c.bf16 %v3991, %v3987
        %v4040 = vpack.c.bf16 %v3996, %v3992
        %v4041 = vpack.c.bf16 %v3997, %v3993
        %v4042 = vpack.c.bf16 %v3998, %v3994
        %v4043 = vpack.c.bf16 %v3999, %v3995
        %v4044 = vpack.c.bf16 %v4004, %v4000
        %v4045 = vpack.c.bf16 %v4005, %v4001
        %v4046 = vpack.c.bf16 %v4006, %v4002
        %v4047 = vpack.c.bf16 %v4007, %v4003
        %v4048 = vpack.c.bf16 %v4012, %v4008
        %v4049 = vpack.c.bf16 %v4013, %v4009
        %v4050 = vpack.c.bf16 %v4014, %v4010
        %v4051 = vpack.c.bf16 %v4015, %v4011
        %v4052 = vpack.c.bf16 %v4020, %v4016
        %v4053 = vpack.c.bf16 %v4021, %v4017
        %v4054 = vpack.c.bf16 %v4022, %v4018
        %v4055 = vpack.c.bf16 %v4023, %v4019
        %v4056 = vld [vmem:[%s839] sm:$0xf]
        %v4057 = vld [vmem:[%s839 + $0x4] sm:$0xf]
        %v4058 = vld [vmem:[%s839 + $0x8] sm:$0xf]
        %v4059 = vld [vmem:[%s839 + $0xc] sm:$0xf]
        %v4060 = vld [vmem:[%s839 + $0x10] sm:$0xf]
        %v4061 = vld [vmem:[%s839 + $0x14] sm:$0xf]
        %v4062 = vld [vmem:[%s839 + $0x18] sm:$0xf]
        %v4063 = vld [vmem:[%s839 + $0x1c] sm:$0xf]
        %v4064 = vld [vmem:[%s839 + $0x20] sm:$0xf]
        %v4065 = vld [vmem:[%s839 + $0x24] sm:$0xf]
        %v4066 = vld [vmem:[%s839 + $0x28] sm:$0xf]
        %v4067 = vld [vmem:[%s839 + $0x2c] sm:$0xf]
        %v4068 = vld [vmem:[%s839 + $0x30] sm:$0xf]
        %v4069 = vld [vmem:[%s839 + $0x34] sm:$0xf]
        %v4070 = vld [vmem:[%s839 + $0x38] sm:$0xf]
        %v4071 = vld [vmem:[%s839 + $0x3c] sm:$0xf]
        %v4072 = vld [vmem:[%s839 + $0x40] sm:$0xf]
        %v4073 = vld [vmem:[%s839 + $0x44] sm:$0xf]
        %v4074 = vld [vmem:[%s839 + $0x48] sm:$0xf]
        %v4075 = vld [vmem:[%s839 + $0x4c] sm:$0xf]
        %v4076 = vld [vmem:[%s839 + $0x50] sm:$0xf]
        %v4077 = vld [vmem:[%s839 + $0x54] sm:$0xf]
        %v4078 = vld [vmem:[%s839 + $0x58] sm:$0xf]
        %v4079 = vld [vmem:[%s839 + $0x5c] sm:$0xf]
        %v4080 = vld [vmem:[%s839 + $0x60] sm:$0xf]
        %v4081 = vld [vmem:[%s839 + $0x64] sm:$0xf]
        %v4082 = vld [vmem:[%s839 + $0x68] sm:$0xf]
        %v4083 = vld [vmem:[%s839 + $0x6c] sm:$0xf]
        %v4084 = vld [vmem:[%s839 + $0x70] sm:$0xf]
        %v4085 = vld [vmem:[%s839 + $0x74] sm:$0xf]
        %v4086 = vld [vmem:[%s839 + $0x78] sm:$0xf]
        %v4087 = vld [vmem:[%s839 + $0x7c] sm:$0xf]
        %v4088 = vld [vmem:[%s839 + $0x80] sm:$0xf]
        %v4089 = vld [vmem:[%s839 + $0x84] sm:$0xf]
        %v4090 = vld [vmem:[%s839 + $0x88] sm:$0xf]
        %v4091 = vld [vmem:[%s839 + $0x8c] sm:$0xf]
        %v4092 = vld [vmem:[%s839 + $0x90] sm:$0xf]
        %v4093 = vld [vmem:[%s839 + $0x94] sm:$0xf]
        %v4094 = vld [vmem:[%s839 + $0x98] sm:$0xf]
        %v4095 = vld [vmem:[%s839 + $0x9c] sm:$0xf]
        %v4096 = vld [vmem:[%s839 + $0xa0] sm:$0xf]
        %v4097 = vld [vmem:[%s839 + $0xa4] sm:$0xf]
        %v4098 = vld [vmem:[%s839 + $0xa8] sm:$0xf]
        %v4099 = vld [vmem:[%s839 + $0xac] sm:$0xf]
        %v4100 = vld [vmem:[%s839 + $0xb0] sm:$0xf]
        %v4101 = vld [vmem:[%s839 + $0xb4] sm:$0xf]
        %v4102 = vld [vmem:[%s839 + $0xb8] sm:$0xf]
        %v4103 = vld [vmem:[%s839 + $0xbc] sm:$0xf]
        %v4104 = vld [vmem:[%s839 + $0xc0] sm:$0xf]
        %v4105 = vld [vmem:[%s839 + $0xc4] sm:$0xf]
        %v4106 = vld [vmem:[%s839 + $0xc8] sm:$0xf]
        %v4107 = vld [vmem:[%s839 + $0xcc] sm:$0xf]
        %v4108 = vld [vmem:[%s839 + $0xd0] sm:$0xf]
        %v4109 = vld [vmem:[%s839 + $0xd4] sm:$0xf]
        %v4110 = vld [vmem:[%s839 + $0xd8] sm:$0xf]
        %v4111 = vld [vmem:[%s839 + $0xdc] sm:$0xf]
        %v4112 = vld [vmem:[%s839 + $0xe0] sm:$0xf]
        %v4113 = vld [vmem:[%s839 + $0xe4] sm:$0xf]
        %v4114 = vld [vmem:[%s839 + $0xe8] sm:$0xf]
        %v4115 = vld [vmem:[%s839 + $0xec] sm:$0xf]
        %v4116 = vld [vmem:[%s839 + $0xf0] sm:$0xf]
        %v4117 = vld [vmem:[%s839 + $0xf4] sm:$0xf]
        %v4118 = vld [vmem:[%s839 + $0xf8] sm:$0xf]
        %v4119 = vld [vmem:[%s839 + $0xfc] sm:$0xf]
        %v4120 = vld [vmem:[%s961] sm:$0x1]
        %v4122 = vperm.slane %v4120, 0
        %v4188 = vunpack.c.l.b16 %v4056
        %v4189 = vunpack.c.l.b16 %v4057
        %v4190 = vunpack.c.l.b16 %v4058
        %v4191 = vunpack.c.l.b16 %v4059
        %v4192 = vunpack.c.l.b16 %v4060
        %v4193 = vunpack.c.l.b16 %v4061
        %v4194 = vunpack.c.l.b16 %v4062
        %v4195 = vunpack.c.l.b16 %v4063
        %v4196 = vunpack.c.l.b16 %v4064
        %v4197 = vunpack.c.l.b16 %v4065
        %v4198 = vunpack.c.l.b16 %v4066
        %v4199 = vunpack.c.l.b16 %v4067
        %v4200 = vunpack.c.l.b16 %v4068
        %v4201 = vunpack.c.l.b16 %v4069
        %v4202 = vunpack.c.l.b16 %v4070
        %v4203 = vunpack.c.l.b16 %v4071
        %v4204 = vunpack.c.l.b16 %v4072
        %v4205 = vunpack.c.l.b16 %v4073
        %v4206 = vunpack.c.l.b16 %v4074
        %v4207 = vunpack.c.l.b16 %v4075
        %v4208 = vunpack.c.l.b16 %v4076
        %v4209 = vunpack.c.l.b16 %v4077
        %v4210 = vunpack.c.l.b16 %v4078
        %v4211 = vunpack.c.l.b16 %v4079
        %v4212 = vunpack.c.l.b16 %v4080
        %v4213 = vunpack.c.l.b16 %v4081
        %v4214 = vunpack.c.l.b16 %v4082
        %v4215 = vunpack.c.l.b16 %v4083
        %v4216 = vunpack.c.l.b16 %v4084
        %v4217 = vunpack.c.l.b16 %v4085
        %v4218 = vunpack.c.l.b16 %v4086
        %v4219 = vunpack.c.l.b16 %v4087
        %v4220 = vunpack.c.l.b16 %v4088
        %v4221 = vunpack.c.l.b16 %v4089
        %v4222 = vunpack.c.l.b16 %v4090
        %v4223 = vunpack.c.l.b16 %v4091
        %v4224 = vunpack.c.l.b16 %v4092
        %v4225 = vunpack.c.l.b16 %v4093
        %v4226 = vunpack.c.l.b16 %v4094
        %v4227 = vunpack.c.l.b16 %v4095
        %v4228 = vunpack.c.l.b16 %v4096
        %v4229 = vunpack.c.l.b16 %v4097
        %v4230 = vunpack.c.l.b16 %v4098
        %v4231 = vunpack.c.l.b16 %v4099
        %v4232 = vunpack.c.l.b16 %v4100
        %v4233 = vunpack.c.l.b16 %v4101
        %v4234 = vunpack.c.l.b16 %v4102
        %v4235 = vunpack.c.l.b16 %v4103
        %v4236 = vunpack.c.l.b16 %v4104
        %v4237 = vunpack.c.l.b16 %v4105
        %v4238 = vunpack.c.l.b16 %v4106
        %v4239 = vunpack.c.l.b16 %v4107
        %v4240 = vunpack.c.l.b16 %v4108
        %v4241 = vunpack.c.l.b16 %v4109
        %v4242 = vunpack.c.l.b16 %v4110
        %v4243 = vunpack.c.l.b16 %v4111
        %v4244 = vunpack.c.l.b16 %v4112
        %v4245 = vunpack.c.l.b16 %v4113
        %v4246 = vunpack.c.l.b16 %v4114
        %v4247 = vunpack.c.l.b16 %v4115
        %v4248 = vunpack.c.l.b16 %v4116
        %v4249 = vunpack.c.l.b16 %v4117
        %v4250 = vunpack.c.l.b16 %v4118
        %v4251 = vunpack.c.l.b16 %v4119
        %v4252 = vpack.c.b16 %v4189, %v4188
        %v4253 = vpack.c.b16 %v4191, %v4190
        %v4254 = vpack.c.b16 %v4193, %v4192
        %v4255 = vpack.c.b16 %v4195, %v4194
        %v4256 = vpack.c.b16 %v4197, %v4196
        %v4257 = vpack.c.b16 %v4199, %v4198
        %v4258 = vpack.c.b16 %v4201, %v4200
        %v4259 = vpack.c.b16 %v4203, %v4202
        %v4260 = vpack.c.b16 %v4205, %v4204
        %v4261 = vpack.c.b16 %v4207, %v4206
        %v4262 = vpack.c.b16 %v4209, %v4208
        %v4263 = vpack.c.b16 %v4211, %v4210
        %v4264 = vpack.c.b16 %v4213, %v4212
        %v4265 = vpack.c.b16 %v4215, %v4214
        %v4266 = vpack.c.b16 %v4217, %v4216
        %v4267 = vpack.c.b16 %v4219, %v4218
        %v4268 = vpack.c.b16 %v4221, %v4220
        %v4269 = vpack.c.b16 %v4223, %v4222
        %v4270 = vpack.c.b16 %v4225, %v4224
        %v4271 = vpack.c.b16 %v4227, %v4226
        %v4272 = vpack.c.b16 %v4229, %v4228
        %v4273 = vpack.c.b16 %v4231, %v4230
        %v4274 = vpack.c.b16 %v4233, %v4232
        %v4275 = vpack.c.b16 %v4235, %v4234
        %v4276 = vpack.c.b16 %v4237, %v4236
        %v4277 = vpack.c.b16 %v4239, %v4238
        %v4278 = vpack.c.b16 %v4241, %v4240
        %v4279 = vpack.c.b16 %v4243, %v4242
        %v4280 = vpack.c.b16 %v4245, %v4244
        %v4281 = vpack.c.b16 %v4247, %v4246
        %v4282 = vpack.c.b16 %v4249, %v4248
        %v4283 = vpack.c.b16 %v4251, %v4250
        %4316 = vmatpush.bf16.msra.mxu0 %v4259
        %4317 = vmatpush.bf16.msra.mxu0 %v4258
        %4318 = vmatpush.bf16.msra.mxu0 %v4257
        %4319 = vmatpush.bf16.msra.mxu0 %v4256
        %4320 = vmatpush.bf16.msra.mxu0 %v4255
        %4321 = vmatpush.bf16.msra.mxu0 %v4254
        %4322 = vmatpush.bf16.msra.mxu0 %v4253
        %4323 = vmatpush.bf16.msra.mxu0 %v4252
        %4324 = vmatmul.bf16.gmra.mxu0 %v4024
        %v4325 = vpop.f32.mrf.mxu0
        %v4326 = vadd.f32 %v4122, %v4325
        %v4327 = vpop.f32.mrf.mxu0
        %v4328 = vadd.f32 %v4122, %v4327
        %4329 = vmatmul.bf16.gmra.mxu0 %v4028
        %v4330 = vpop.f32.mrf.mxu0
        %v4331 = vadd.f32 %v4122, %v4330
        %v4332 = vpop.f32.mrf.mxu0
        %v4333 = vadd.f32 %v4122, %v4332
        %4334 = vmatmul.bf16.gmra.mxu0 %v4032
        %v4335 = vpop.f32.mrf.mxu0
        %v4336 = vadd.f32 %v4122, %v4335
        %v4337 = vpop.f32.mrf.mxu0
        %v4338 = vadd.f32 %v4122, %v4337
        %4339 = vmatmul.bf16.gmra.mxu0 %v4036
        %v4340 = vpop.f32.mrf.mxu0
        %v4341 = vadd.f32 %v4122, %v4340
        %v4342 = vpop.f32.mrf.mxu0
        %v4343 = vadd.f32 %v4122, %v4342
        %4344 = vmatmul.bf16.gmra.mxu0 %v4040
        %v4345 = vpop.f32.mrf.mxu0
        %v4346 = vadd.f32 %v4122, %v4345
        %v4347 = vpop.f32.mrf.mxu0
        %v4348 = vadd.f32 %v4122, %v4347
        %4349 = vmatmul.bf16.gmra.mxu0 %v4044
        %v4350 = vpop.f32.mrf.mxu0
        %v4351 = vadd.f32 %v4122, %v4350
        %v4352 = vpop.f32.mrf.mxu0
        %v4353 = vadd.f32 %v4122, %v4352
        %4354 = vmatmul.bf16.gmra.mxu0 %v4048
        %v4355 = vpop.f32.mrf.mxu0
        %v4356 = vadd.f32 %v4122, %v4355
        %v4357 = vpop.f32.mrf.mxu0
        %v4358 = vadd.f32 %v4122, %v4357
        %4359 = vmatmul.bf16.gmra.mxu0 %v4052
        %v4360 = vpop.f32.mrf.mxu0
        %v4361 = vadd.f32 %v4122, %v4360
        %v4362 = vpop.f32.mrf.mxu0
        %v4363 = vadd.f32 %v4122, %v4362
        %4364 = vdwg.mxu0
        %4365 = vmatpush.bf16.msra.mxu0 %v4267
        %4366 = vmatpush.bf16.msra.mxu0 %v4266
        %4367 = vmatpush.bf16.msra.mxu0 %v4265
        %4368 = vmatpush.bf16.msra.mxu0 %v4264
        %4369 = vmatpush.bf16.msra.mxu0 %v4263
        %4370 = vmatpush.bf16.msra.mxu0 %v4262
        %4371 = vmatpush.bf16.msra.mxu0 %v4261
        %4372 = vmatpush.bf16.msra.mxu0 %v4260
        %4373 = vmatmul.bf16.gmra.mxu0 %v4025
        %v4374 = vpop.f32.mrf.mxu0
        %v4375 = vadd.f32 %v4326, %v4374
        %v4376 = vpop.f32.mrf.mxu0
        %v4377 = vadd.f32 %v4328, %v4376
        %4378 = vmatmul.bf16.gmra.mxu0 %v4029
        %v4379 = vpop.f32.mrf.mxu0
        %v4380 = vadd.f32 %v4331, %v4379
        %v4381 = vpop.f32.mrf.mxu0
        %v4382 = vadd.f32 %v4333, %v4381
        %4383 = vmatmul.bf16.gmra.mxu0 %v4033
        %v4384 = vpop.f32.mrf.mxu0
        %v4385 = vadd.f32 %v4336, %v4384
        %v4386 = vpop.f32.mrf.mxu0
        %v4387 = vadd.f32 %v4338, %v4386
        %4388 = vmatmul.bf16.gmra.mxu0 %v4037
        %v4389 = vpop.f32.mrf.mxu0
        %v4390 = vadd.f32 %v4341, %v4389
        %v4391 = vpop.f32.mrf.mxu0
        %v4392 = vadd.f32 %v4343, %v4391
        %4393 = vmatmul.bf16.gmra.mxu0 %v4041
        %v4394 = vpop.f32.mrf.mxu0
        %v4395 = vadd.f32 %v4346, %v4394
        %v4396 = vpop.f32.mrf.mxu0
        %v4397 = vadd.f32 %v4348, %v4396
        %4398 = vmatmul.bf16.gmra.mxu0 %v4045
        %v4399 = vpop.f32.mrf.mxu0
        %v4400 = vadd.f32 %v4351, %v4399
        %v4401 = vpop.f32.mrf.mxu0
        %v4402 = vadd.f32 %v4353, %v4401
        %4403 = vmatmul.bf16.gmra.mxu0 %v4049
        %v4404 = vpop.f32.mrf.mxu0
        %v4405 = vadd.f32 %v4356, %v4404
        %v4406 = vpop.f32.mrf.mxu0
        %v4407 = vadd.f32 %v4358, %v4406
        %4408 = vmatmul.bf16.gmra.mxu0 %v4053
        %v4409 = vpop.f32.mrf.mxu0
        %v4410 = vadd.f32 %v4361, %v4409
        %v4411 = vpop.f32.mrf.mxu0
        %v4412 = vadd.f32 %v4363, %v4411
        %4413 = vdwg.mxu0
        %4414 = vmatpush.bf16.msra.mxu0 %v4275
        %4415 = vmatpush.bf16.msra.mxu0 %v4274
        %4416 = vmatpush.bf16.msra.mxu0 %v4273
        %4417 = vmatpush.bf16.msra.mxu0 %v4272
        %4418 = vmatpush.bf16.msra.mxu0 %v4271
        %4419 = vmatpush.bf16.msra.mxu0 %v4270
        %4420 = vmatpush.bf16.msra.mxu0 %v4269
        %4421 = vmatpush.bf16.msra.mxu0 %v4268
        %4422 = vmatmul.bf16.gmra.mxu0 %v4026
        %v4423 = vpop.f32.mrf.mxu0
        %v4424 = vadd.f32 %v4375, %v4423
        %v4425 = vpop.f32.mrf.mxu0
        %v4426 = vadd.f32 %v4377, %v4425
        %4427 = vmatmul.bf16.gmra.mxu0 %v4030
        %v4428 = vpop.f32.mrf.mxu0
        %v4429 = vadd.f32 %v4380, %v4428
        %v4430 = vpop.f32.mrf.mxu0
        %v4431 = vadd.f32 %v4382, %v4430
        %4432 = vmatmul.bf16.gmra.mxu0 %v4034
        %v4433 = vpop.f32.mrf.mxu0
        %v4434 = vadd.f32 %v4385, %v4433
        %v4435 = vpop.f32.mrf.mxu0
        %v4436 = vadd.f32 %v4387, %v4435
        %4437 = vmatmul.bf16.gmra.mxu0 %v4038
        %v4438 = vpop.f32.mrf.mxu0
        %v4439 = vadd.f32 %v4390, %v4438
        %v4440 = vpop.f32.mrf.mxu0
        %v4441 = vadd.f32 %v4392, %v4440
        %4442 = vmatmul.bf16.gmra.mxu0 %v4042
        %v4443 = vpop.f32.mrf.mxu0
        %v4444 = vadd.f32 %v4395, %v4443
        %v4445 = vpop.f32.mrf.mxu0
        %v4446 = vadd.f32 %v4397, %v4445
        %4447 = vmatmul.bf16.gmra.mxu0 %v4046
        %v4448 = vpop.f32.mrf.mxu0
        %v4449 = vadd.f32 %v4400, %v4448
        %v4450 = vpop.f32.mrf.mxu0
        %v4451 = vadd.f32 %v4402, %v4450
        %4452 = vmatmul.bf16.gmra.mxu0 %v4050
        %v4453 = vpop.f32.mrf.mxu0
        %v4454 = vadd.f32 %v4405, %v4453
        %v4455 = vpop.f32.mrf.mxu0
        %v4456 = vadd.f32 %v4407, %v4455
        %4457 = vmatmul.bf16.gmra.mxu0 %v4054
        %v4458 = vpop.f32.mrf.mxu0
        %v4459 = vadd.f32 %v4410, %v4458
        %v4460 = vpop.f32.mrf.mxu0
        %v4461 = vadd.f32 %v4412, %v4460
        %4462 = vdwg.mxu0
        %4463 = vmatpush.bf16.msra.mxu0 %v4283
        %4464 = vmatpush.bf16.msra.mxu0 %v4282
        %4465 = vmatpush.bf16.msra.mxu0 %v4281
        %4466 = vmatpush.bf16.msra.mxu0 %v4280
        %4467 = vmatpush.bf16.msra.mxu0 %v4279
        %4468 = vmatpush.bf16.msra.mxu0 %v4278
        %4469 = vmatpush.bf16.msra.mxu0 %v4277
        %4470 = vmatpush.bf16.msra.mxu0 %v4276
        %4471 = vmatmul.bf16.gmra.mxu0 %v4027
        %v4472 = vpop.f32.mrf.mxu0
        %v4473 = vadd.f32 %v4424, %v4472
        %v4474 = vpop.f32.mrf.mxu0
        %v4475 = vadd.f32 %v4426, %v4474
        %4476 = vmatmul.bf16.gmra.mxu0 %v4031
        %v4477 = vpop.f32.mrf.mxu0
        %v4478 = vadd.f32 %v4429, %v4477
        %v4479 = vpop.f32.mrf.mxu0
        %v4480 = vadd.f32 %v4431, %v4479
        %4481 = vmatmul.bf16.gmra.mxu0 %v4035
        %v4482 = vpop.f32.mrf.mxu0
        %v4483 = vadd.f32 %v4434, %v4482
        %v4484 = vpop.f32.mrf.mxu0
        %v4485 = vadd.f32 %v4436, %v4484
        %4486 = vmatmul.bf16.gmra.mxu0 %v4039
        %v4487 = vpop.f32.mrf.mxu0
        %v4488 = vadd.f32 %v4439, %v4487
        %v4489 = vpop.f32.mrf.mxu0
        %v4490 = vadd.f32 %v4441, %v4489
        %4491 = vmatmul.bf16.gmra.mxu0 %v4043
        %v4492 = vpop.f32.mrf.mxu0
        %v4493 = vadd.f32 %v4444, %v4492
        %v4494 = vpop.f32.mrf.mxu0
        %v4495 = vadd.f32 %v4446, %v4494
        %4496 = vmatmul.bf16.gmra.mxu0 %v4047
        %v4497 = vpop.f32.mrf.mxu0
        %v4498 = vadd.f32 %v4449, %v4497
        %v4499 = vpop.f32.mrf.mxu0
        %v4500 = vadd.f32 %v4451, %v4499
        %4501 = vmatmul.bf16.gmra.mxu0 %v4051
        %v4502 = vpop.f32.mrf.mxu0
        %v4503 = vadd.f32 %v4454, %v4502
        %v4504 = vpop.f32.mrf.mxu0
        %v4505 = vadd.f32 %v4456, %v4504
        %4506 = vmatmul.bf16.gmra.mxu0 %v4055
        %v4507 = vpop.f32.mrf.mxu0
        %v4508 = vadd.f32 %v4459, %v4507
        %v4509 = vpop.f32.mrf.mxu0
        %v4510 = vadd.f32 %v4461, %v4509
        %4511 = vdwg.mxu0
        %v4512 = vadd.f32 %v3026, %v4473
        %v4513 = vadd.f32 %v3027, %v4475
        %v4514 = vadd.f32 %v3028, %v4478
        %v4515 = vadd.f32 %v3029, %v4480
        %v4516 = vadd.f32 %v3030, %v4483
        %v4517 = vadd.f32 %v3031, %v4485
        %v4518 = vadd.f32 %v3032, %v4488
        %v4519 = vadd.f32 %v3033, %v4490
        %v4520 = vadd.f32 %v3034, %v4493
        %v4521 = vadd.f32 %v3035, %v4495
        %v4522 = vadd.f32 %v3036, %v4498
        %v4523 = vadd.f32 %v3037, %v4500
        %v4524 = vadd.f32 %v3038, %v4503
        %v4525 = vadd.f32 %v3039, %v4505
        %v4526 = vadd.f32 %v3040, %v4508
        %v4527 = vadd.f32 %v3041, %v4510
        %v4528 = vld [vmem:[%s848] sm:$0x1]
        %v4529 = vld [vmem:[%s964] sm:$0x1]
        %4530 = vadd.xlane.f32.xlu0 %v4512
        %v4531 = vpop.xlane.xlu0 %4530
        %4532 = vadd.xlane.f32.xlu0 %v4513
        %v4533 = vpop.xlane.xlu0 %4532
        %4534 = vadd.xlane.f32.xlu0 %v4514
        %v4535 = vpop.xlane.xlu0 %4534
        %4536 = vadd.xlane.f32.xlu0 %v4515
        %v4537 = vpop.xlane.xlu0 %4536
        %4538 = vadd.xlane.f32.xlu0 %v4516
        %v4539 = vpop.xlane.xlu0 %4538
        %4540 = vadd.xlane.f32.xlu0 %v4517
        %v4541 = vpop.xlane.xlu0 %4540
        %4542 = vadd.xlane.f32.xlu0 %v4518
        %v4543 = vpop.xlane.xlu0 %4542
        %4544 = vadd.xlane.f32.xlu0 %v4519
        %v4545 = vpop.xlane.xlu0 %4544
        %4546 = vadd.xlane.f32.xlu0 %v4520
        %v4547 = vpop.xlane.xlu0 %4546
        %4548 = vadd.xlane.f32.xlu0 %v4521
        %v4549 = vpop.xlane.xlu0 %4548
        %4550 = vadd.xlane.f32.xlu0 %v4522
        %v4551 = vpop.xlane.xlu0 %4550
        %4552 = vadd.xlane.f32.xlu0 %v4523
        %v4553 = vpop.xlane.xlu0 %4552
        %4554 = vadd.xlane.f32.xlu0 %v4524
        %v4555 = vpop.xlane.xlu0 %4554
        %4556 = vadd.xlane.f32.xlu0 %v4525
        %v4557 = vpop.xlane.xlu0 %4556
        %4558 = vadd.xlane.f32.xlu0 %v4526
        %v4559 = vpop.xlane.xlu0 %4558
        %4560 = vadd.xlane.f32.xlu0 %v4527
        %v4561 = vpop.xlane.xlu0 %4560
        %v4562 = vmul.f32 %v4531, %v2715
        %v4563 = vmul.f32 %v4533, %v2715
        %v4564 = vmul.f32 %v4535, %v2715
        %v4565 = vmul.f32 %v4537, %v2715
        %v4566 = vmul.f32 %v4539, %v2715
        %v4567 = vmul.f32 %v4541, %v2715
        %v4568 = vmul.f32 %v4543, %v2715
        %v4569 = vmul.f32 %v4545, %v2715
        %v4570 = vmul.f32 %v4547, %v2715
        %v4571 = vmul.f32 %v4549, %v2715
        %v4572 = vmul.f32 %v4551, %v2715
        %v4573 = vmul.f32 %v4553, %v2715
        %v4574 = vmul.f32 %v4555, %v2715
        %v4575 = vmul.f32 %v4557, %v2715
        %v4576 = vmul.f32 %v4559, %v2715
        %v4577 = vmul.f32 %v4561, %v2715
        %v4578 = vsub.f32 %v4512, %v4562
        %v4579 = vsub.f32 %v4513, %v4563
        %v4580 = vsub.f32 %v4514, %v4564
        %v4581 = vsub.f32 %v4515, %v4565
        %v4582 = vsub.f32 %v4516, %v4566
        %v4583 = vsub.f32 %v4517, %v4567
        %v4584 = vsub.f32 %v4518, %v4568
        %v4585 = vsub.f32 %v4519, %v4569
        %v4586 = vsub.f32 %v4520, %v4570
        %v4587 = vsub.f32 %v4521, %v4571
        %v4588 = vsub.f32 %v4522, %v4572
        %v4589 = vsub.f32 %v4523, %v4573
        %v4590 = vsub.f32 %v4524, %v4574
        %v4591 = vsub.f32 %v4525, %v4575
        %v4592 = vsub.f32 %v4526, %v4576
        %v4593 = vsub.f32 %v4527, %v4577
        %v4594 = vmul.f32 %v4578, %v4578
        %v4595 = vmul.f32 %v4579, %v4579
        %v4596 = vmul.f32 %v4580, %v4580
        %v4597 = vmul.f32 %v4581, %v4581
        %v4598 = vmul.f32 %v4582, %v4582
        %v4599 = vmul.f32 %v4583, %v4583
        %v4600 = vmul.f32 %v4584, %v4584
        %v4601 = vmul.f32 %v4585, %v4585
        %v4602 = vmul.f32 %v4586, %v4586
        %v4603 = vmul.f32 %v4587, %v4587
        %v4604 = vmul.f32 %v4588, %v4588
        %v4605 = vmul.f32 %v4589, %v4589
        %v4606 = vmul.f32 %v4590, %v4590
        %v4607 = vmul.f32 %v4591, %v4591
        %v4608 = vmul.f32 %v4592, %v4592
        %v4609 = vmul.f32 %v4593, %v4593
        %4610 = vadd.xlane.f32.xlu0 %v4594
        %v4611 = vpop.xlane.xlu0 %4610
        %4612 = vadd.xlane.f32.xlu0 %v4595
        %v4613 = vpop.xlane.xlu0 %4612
        %4614 = vadd.xlane.f32.xlu0 %v4596
        %v4615 = vpop.xlane.xlu0 %4614
        %4616 = vadd.xlane.f32.xlu0 %v4597
        %v4617 = vpop.xlane.xlu0 %4616
        %4618 = vadd.xlane.f32.xlu0 %v4598
        %v4619 = vpop.xlane.xlu0 %4618
        %4620 = vadd.xlane.f32.xlu0 %v4599
        %v4621 = vpop.xlane.xlu0 %4620
        %4622 = vadd.xlane.f32.xlu0 %v4600
        %v4623 = vpop.xlane.xlu0 %4622
        %4624 = vadd.xlane.f32.xlu0 %v4601
        %v4625 = vpop.xlane.xlu0 %4624
        %4626 = vadd.xlane.f32.xlu0 %v4602
        %v4627 = vpop.xlane.xlu0 %4626
        %4628 = vadd.xlane.f32.xlu0 %v4603
        %v4629 = vpop.xlane.xlu0 %4628
        %4630 = vadd.xlane.f32.xlu0 %v4604
        %v4631 = vpop.xlane.xlu0 %4630
        %4632 = vadd.xlane.f32.xlu0 %v4605
        %v4633 = vpop.xlane.xlu0 %4632
        %4634 = vadd.xlane.f32.xlu0 %v4606
        %v4635 = vpop.xlane.xlu0 %4634
        %4636 = vadd.xlane.f32.xlu0 %v4607
        %v4637 = vpop.xlane.xlu0 %4636
        %4638 = vadd.xlane.f32.xlu0 %v4608
        %v4639 = vpop.xlane.xlu0 %4638
        %4640 = vadd.xlane.f32.xlu0 %v4609
        %v4641 = vpop.xlane.xlu0 %4640
        %v4642 = vmul.f32 %v4611, %v2715
        %v4643 = vmul.f32 %v4613, %v2715
        %v4644 = vmul.f32 %v4615, %v2715
        %v4645 = vmul.f32 %v4617, %v2715
        %v4646 = vmul.f32 %v4619, %v2715
        %v4647 = vmul.f32 %v4621, %v2715
        %v4648 = vmul.f32 %v4623, %v2715
        %v4649 = vmul.f32 %v4625, %v2715
        %v4650 = vmul.f32 %v4627, %v2715
        %v4651 = vmul.f32 %v4629, %v2715
        %v4652 = vmul.f32 %v4631, %v2715
        %v4653 = vmul.f32 %v4633, %v2715
        %v4654 = vmul.f32 %v4635, %v2715
        %v4655 = vmul.f32 %v4637, %v2715
        %v4656 = vmul.f32 %v4639, %v2715
        %v4657 = vmul.f32 %v4641, %v2715
        %v4658 = vadd.f32 %v4642, 1e-05
        %v4659 = vadd.f32 %v4643, 1e-05
        %v4660 = vadd.f32 %v4644, 1e-05
        %v4661 = vadd.f32 %v4645, 1e-05
        %v4662 = vadd.f32 %v4646, 1e-05
        %v4663 = vadd.f32 %v4647, 1e-05
        %v4664 = vadd.f32 %v4648, 1e-05
        %v4665 = vadd.f32 %v4649, 1e-05
        %v4666 = vadd.f32 %v4650, 1e-05
        %v4667 = vadd.f32 %v4651, 1e-05
        %v4668 = vadd.f32 %v4652, 1e-05
        %v4669 = vadd.f32 %v4653, 1e-05
        %v4670 = vadd.f32 %v4654, 1e-05
        %v4671 = vadd.f32 %v4655, 1e-05
        %v4672 = vadd.f32 %v4656, 1e-05
        %v4673 = vadd.f32 %v4657, 1e-05
        %v4674 = vrsqrt.pop %v4658
        %v4675 = vmul.f32 %v4674, %v4658
        %v4676 = vmul.f32 %v4675, %v4674
        %v4677 = vmul.f32 0.5, %v4676
        %v4678 = vsub.f32 1.5, %v4677
        %v4679 = vmul.f32 %v4674, %v4678
        %vm4680 = vweird.f32 %v4658
        %vm4681 = vweird.f32 %v4674
        %vm4682 = vmor %vm4680, %vm4681
        %v4683 = vsel %vm4682, %v4674, %v4679
        %v4684 = vrsqrt.pop %v4659
        %v4685 = vmul.f32 %v4684, %v4659
        %v4686 = vmul.f32 %v4685, %v4684
        %v4687 = vmul.f32 0.5, %v4686
        %v4688 = vsub.f32 1.5, %v4687
        %v4689 = vmul.f32 %v4684, %v4688
        %vm4690 = vweird.f32 %v4659
        %vm4691 = vweird.f32 %v4684
        %vm4692 = vmor %vm4690, %vm4691
        %v4693 = vsel %vm4692, %v4684, %v4689
        %v4694 = vrsqrt.pop %v4660
        %v4695 = vmul.f32 %v4694, %v4660
        %v4696 = vmul.f32 %v4695, %v4694
        %v4697 = vmul.f32 0.5, %v4696
        %v4698 = vsub.f32 1.5, %v4697
        %v4699 = vmul.f32 %v4694, %v4698
        %vm4700 = vweird.f32 %v4660
        %vm4701 = vweird.f32 %v4694
        %vm4702 = vmor %vm4700, %vm4701
        %v4703 = vsel %vm4702, %v4694, %v4699
        %v4704 = vrsqrt.pop %v4661
        %v4705 = vmul.f32 %v4704, %v4661
        %v4706 = vmul.f32 %v4705, %v4704
        %v4707 = vmul.f32 0.5, %v4706
        %v4708 = vsub.f32 1.5, %v4707
        %v4709 = vmul.f32 %v4704, %v4708
        %vm4710 = vweird.f32 %v4661
        %vm4711 = vweird.f32 %v4704
        %vm4712 = vmor %vm4710, %vm4711
        %v4713 = vsel %vm4712, %v4704, %v4709
        %v4714 = vrsqrt.pop %v4662
        %v4715 = vmul.f32 %v4714, %v4662
        %v4716 = vmul.f32 %v4715, %v4714
        %v4717 = vmul.f32 0.5, %v4716
        %v4718 = vsub.f32 1.5, %v4717
        %v4719 = vmul.f32 %v4714, %v4718
        %vm4720 = vweird.f32 %v4662
        %vm4721 = vweird.f32 %v4714
        %vm4722 = vmor %vm4720, %vm4721
        %v4723 = vsel %vm4722, %v4714, %v4719
        %v4724 = vrsqrt.pop %v4663
        %v4725 = vmul.f32 %v4724, %v4663
        %v4726 = vmul.f32 %v4725, %v4724
        %v4727 = vmul.f32 0.5, %v4726
        %v4728 = vsub.f32 1.5, %v4727
        %v4729 = vmul.f32 %v4724, %v4728
        %vm4730 = vweird.f32 %v4663
        %vm4731 = vweird.f32 %v4724
        %vm4732 = vmor %vm4730, %vm4731
        %v4733 = vsel %vm4732, %v4724, %v4729
        %v4734 = vrsqrt.pop %v4664
        %v4735 = vmul.f32 %v4734, %v4664
        %v4736 = vmul.f32 %v4735, %v4734
        %v4737 = vmul.f32 0.5, %v4736
        %v4738 = vsub.f32 1.5, %v4737
        %v4739 = vmul.f32 %v4734, %v4738
        %vm4740 = vweird.f32 %v4664
        %vm4741 = vweird.f32 %v4734
        %vm4742 = vmor %vm4740, %vm4741
        %v4743 = vsel %vm4742, %v4734, %v4739
        %v4744 = vrsqrt.pop %v4665
        %v4745 = vmul.f32 %v4744, %v4665
        %v4746 = vmul.f32 %v4745, %v4744
        %v4747 = vmul.f32 0.5, %v4746
        %v4748 = vsub.f32 1.5, %v4747
        %v4749 = vmul.f32 %v4744, %v4748
        %vm4750 = vweird.f32 %v4665
        %vm4751 = vweird.f32 %v4744
        %vm4752 = vmor %vm4750, %vm4751
        %v4753 = vsel %vm4752, %v4744, %v4749
        %v4754 = vrsqrt.pop %v4666
        %v4755 = vmul.f32 %v4754, %v4666
        %v4756 = vmul.f32 %v4755, %v4754
        %v4757 = vmul.f32 0.5, %v4756
        %v4758 = vsub.f32 1.5, %v4757
        %v4759 = vmul.f32 %v4754, %v4758
        %vm4760 = vweird.f32 %v4666
        %vm4761 = vweird.f32 %v4754
        %vm4762 = vmor %vm4760, %vm4761
        %v4763 = vsel %vm4762, %v4754, %v4759
        %v4764 = vrsqrt.pop %v4667
        %v4765 = vmul.f32 %v4764, %v4667
        %v4766 = vmul.f32 %v4765, %v4764
        %v4767 = vmul.f32 0.5, %v4766
        %v4768 = vsub.f32 1.5, %v4767
        %v4769 = vmul.f32 %v4764, %v4768
        %vm4770 = vweird.f32 %v4667
        %vm4771 = vweird.f32 %v4764
        %vm4772 = vmor %vm4770, %vm4771
        %v4773 = vsel %vm4772, %v4764, %v4769
        %v4774 = vrsqrt.pop %v4668
        %v4775 = vmul.f32 %v4774, %v4668
        %v4776 = vmul.f32 %v4775, %v4774
        %v4777 = vmul.f32 0.5, %v4776
        %v4778 = vsub.f32 1.5, %v4777
        %v4779 = vmul.f32 %v4774, %v4778
        %vm4780 = vweird.f32 %v4668
        %vm4781 = vweird.f32 %v4774
        %vm4782 = vmor %vm4780, %vm4781
        %v4783 = vsel %vm4782, %v4774, %v4779
        %v4784 = vrsqrt.pop %v4669
        %v4785 = vmul.f32 %v4784, %v4669
        %v4786 = vmul.f32 %v4785, %v4784
        %v4787 = vmul.f32 0.5, %v4786
        %v4788 = vsub.f32 1.5, %v4787
        %v4789 = vmul.f32 %v4784, %v4788
        %vm4790 = vweird.f32 %v4669
        %vm4791 = vweird.f32 %v4784
        %vm4792 = vmor %vm4790, %vm4791
        %v4793 = vsel %vm4792, %v4784, %v4789
        %v4794 = vrsqrt.pop %v4670
        %v4795 = vmul.f32 %v4794, %v4670
        %v4796 = vmul.f32 %v4795, %v4794
        %v4797 = vmul.f32 0.5, %v4796
        %v4798 = vsub.f32 1.5, %v4797
        %v4799 = vmul.f32 %v4794, %v4798
        %vm4800 = vweird.f32 %v4670
        %vm4801 = vweird.f32 %v4794
        %vm4802 = vmor %vm4800, %vm4801
        %v4803 = vsel %vm4802, %v4794, %v4799
        %v4804 = vrsqrt.pop %v4671
        %v4805 = vmul.f32 %v4804, %v4671
        %v4806 = vmul.f32 %v4805, %v4804
        %v4807 = vmul.f32 0.5, %v4806
        %v4808 = vsub.f32 1.5, %v4807
        %v4809 = vmul.f32 %v4804, %v4808
        %vm4810 = vweird.f32 %v4671
        %vm4811 = vweird.f32 %v4804
        %vm4812 = vmor %vm4810, %vm4811
        %v4813 = vsel %vm4812, %v4804, %v4809
        %v4814 = vrsqrt.pop %v4672
        %v4815 = vmul.f32 %v4814, %v4672
        %v4816 = vmul.f32 %v4815, %v4814
        %v4817 = vmul.f32 0.5, %v4816
        %v4818 = vsub.f32 1.5, %v4817
        %v4819 = vmul.f32 %v4814, %v4818
        %vm4820 = vweird.f32 %v4672
        %vm4821 = vweird.f32 %v4814
        %vm4822 = vmor %vm4820, %vm4821
        %v4823 = vsel %vm4822, %v4814, %v4819
        %v4824 = vrsqrt.pop %v4673
        %v4825 = vmul.f32 %v4824, %v4673
        %v4826 = vmul.f32 %v4825, %v4824
        %v4827 = vmul.f32 0.5, %v4826
        %v4828 = vsub.f32 1.5, %v4827
        %v4829 = vmul.f32 %v4824, %v4828
        %vm4830 = vweird.f32 %v4673
        %vm4831 = vweird.f32 %v4824
        %vm4832 = vmor %vm4830, %vm4831
        %v4833 = vsel %vm4832, %v4824, %v4829
        %v4834 = vmul.f32 %v4578, %v4683
        %v4835 = vmul.f32 %v4579, %v4693
        %v4836 = vmul.f32 %v4580, %v4703
        %v4837 = vmul.f32 %v4581, %v4713
        %v4838 = vmul.f32 %v4582, %v4723
        %v4839 = vmul.f32 %v4583, %v4733
        %v4840 = vmul.f32 %v4584, %v4743
        %v4841 = vmul.f32 %v4585, %v4753
        %v4842 = vmul.f32 %v4586, %v4763
        %v4843 = vmul.f32 %v4587, %v4773
        %v4844 = vmul.f32 %v4588, %v4783
        %v4845 = vmul.f32 %v4589, %v4793
        %v4846 = vmul.f32 %v4590, %v4803
        %v4847 = vmul.f32 %v4591, %v4813
        %v4848 = vmul.f32 %v4592, %v4823
        %v4849 = vmul.f32 %v4593, %v4833
        %v4851 = vperm.slane %v4528, 0
        %v4853 = vmul.f32 %v4834, %v4851
        %v4854 = vmul.f32 %v4835, %v4851
        %v4855 = vmul.f32 %v4836, %v4851
        %v4856 = vmul.f32 %v4837, %v4851
        %v4857 = vmul.f32 %v4838, %v4851
        %v4858 = vmul.f32 %v4839, %v4851
        %v4859 = vmul.f32 %v4840, %v4851
        %v4860 = vmul.f32 %v4841, %v4851
        %v4861 = vmul.f32 %v4842, %v4851
        %v4862 = vmul.f32 %v4843, %v4851
        %v4863 = vmul.f32 %v4844, %v4851
        %v4864 = vmul.f32 %v4845, %v4851
        %v4865 = vmul.f32 %v4846, %v4851
        %v4866 = vmul.f32 %v4847, %v4851
        %v4867 = vmul.f32 %v4848, %v4851
        %v4868 = vmul.f32 %v4849, %v4851
        %v4870 = vperm.slane %v4529, 0
        %v4872 = vadd.f32 %v4853, %v4870
        %v4873 = vadd.f32 %v4854, %v4870
        %v4874 = vadd.f32 %v4855, %v4870
        %v4875 = vadd.f32 %v4856, %v4870
        %v4876 = vadd.f32 %v4857, %v4870
        %v4877 = vadd.f32 %v4858, %v4870
        %v4878 = vadd.f32 %v4859, %v4870
        %v4879 = vadd.f32 %v4860, %v4870
        %v4880 = vadd.f32 %v4861, %v4870
        %v4881 = vadd.f32 %v4862, %v4870
        %v4882 = vadd.f32 %v4863, %v4870
        %v4883 = vadd.f32 %v4864, %v4870
        %v4884 = vadd.f32 %v4865, %v4870
        %v4885 = vadd.f32 %v4866, %v4870
        %v4886 = vadd.f32 %v4867, %v4870
        %v4887 = vadd.f32 %v4868, %v4870
        %4888 = vst [vmem:[%s951] sm:$0xff] %v4872
        %4889 = vst [vmem:[%s951 + $0x8] sm:$0xff] %v4873
        %4890 = vst [vmem:[%s951 + $0x10] sm:$0xff] %v4874
        %4891 = vst [vmem:[%s951 + $0x18] sm:$0xff] %v4875
        %4892 = vst [vmem:[%s951 + $0x20] sm:$0xff] %v4876
        %4893 = vst [vmem:[%s951 + $0x28] sm:$0xff] %v4877
        %4894 = vst [vmem:[%s951 + $0x30] sm:$0xff] %v4878
        %4895 = vst [vmem:[%s951 + $0x38] sm:$0xff] %v4879
        %4896 = vst [vmem:[%s951 + $0x40] sm:$0xff] %v4880
        %4897 = vst [vmem:[%s951 + $0x48] sm:$0xff] %v4881
        %4898 = vst [vmem:[%s951 + $0x50] sm:$0xff] %v4882
        %4899 = vst [vmem:[%s951 + $0x58] sm:$0xff] %v4883
        %4900 = vst [vmem:[%s951 + $0x60] sm:$0xff] %v4884
        %4901 = vst [vmem:[%s951 + $0x68] sm:$0xff] %v4885
        %4902 = vst [vmem:[%s951 + $0x70] sm:$0xff] %v4886
        %4903 = vst [vmem:[%s951 + $0x78] sm:$0xff] %v4887
        %s4904 = sand.u32 %s463, 1
        %s4905 = scalar_lea.sflag [#allocation4], %s4904
        %s4906 = sand.u32 %s463, 1
        %s4907 = smul.addr %s4906, 128
        %s4908 = scalar_lea.vmem [#allocation18], %s4907
        // Predicated region
        $region137: #{tpu_custom_call.1} parent=83 // pred_check
          %p4909 = pneg %p473
        $region138: #{tpu_custom_call.1} parent=83 // pred_check_branch
          %4911 = sbr.rel (%p4909) target = $region140
        $region139: #{tpu_custom_call.1} parent=83 // pred_region
          %4913 = vsyncadd %s4905, 0
          %s4914 = smul.addr %s41, 16
          %s4915 = smul.addr %s4914, 8
          %s4916 = scalar_lea.hbm %s16, %s4915
          %s4917 = sshll.u32 %s4908, 4
          %s4918 = int_to_ptr.vmem [resolvable:$true] %s4917
          %s4919 = sshll.u32 %s4916, 4
          %s4920 = int_to_ptr.hbm [resolvable:$true] %s4919
          %4925 = dma.vmem_to_hbm [thread:$0]  %s4918, 2048, %s4920, %s4905, 128, 128, 8
        $region140: #{tpu_custom_call.1} parent=83 // pred_fallthru
          _
      $region84: #{tpu_custom_call.1} parent=5 // pred_fallthru
        _
      %p4926 = scmp.le.s32.totalorder 2, %s32
      // Predicated region
      $region141: #{tpu_custom_call.1} parent=5 // pred_check
        %p4927 = pneg %p4926
      $region142: #{tpu_custom_call.1} parent=5 // pred_check_branch
        %4929 = sbr.rel (%p4927) target = $region144
      $region143: #{tpu_custom_call.1} parent=5 // pred_region
        %s4930 = ssub.s32 %s32, 2
        // Predicated region
        $region145: #{tpu_custom_call.1} parent=143 // pred_check
          %p4931 = pneg %p479
        $region146: #{tpu_custom_call.1} parent=143 // pred_check_branch
          %4933 = sbr.rel (%p4931) target = $region148
        $region147: #{tpu_custom_call.1} parent=143 // pred_region
          %s4934 = sand.u32 %s464, 1
          %s4935 = scalar_lea.sflag [#allocation4], %s4934
          %s4936 = sand.u32 %s464, 1
          %s4937 = smul.addr %s4936, 128
          %s4938 = scalar_lea.vmem [#allocation18], %s4937
          %4940 = dma.done %s4935, 2048
        $region148: #{tpu_custom_call.1} parent=143 // pred_fallthru
          _
      $region144: #{tpu_custom_call.1} parent=5 // pred_fallthru
        _
    $region6: #{tpu_custom_call.1} parent=1 // loop_footer
      %s36 = sadd.s32 1, %s32
    $region7: #{tpu_custom_call.1} parent=1 // loop_footer_branch
      %31 = sbr.rel target = $region3
    $region8: #{tpu_custom_call.1} parent=1 // loop_exit
      _
    %4941 = vsyncpa [#allocation3], 1
    %s4942 = scalar_lea.sflag [#allocation3], 1
    %4943 = vsyncpa %s4942, 1
    %4944 = vsyncpa [#allocation6], 1
    %s4945 = scalar_lea.sflag [#allocation6], 1
    %4946 = vsyncpa %s4945, 1
    %4947 = vsyncpa [#allocation9], 1
    %4948 = vsyncpa [#allocation4], 1
    %s4949 = scalar_lea.sflag [#allocation4], 1
    %4950 = vsyncpa %s4949, 1

</llo_original>
